<compile_context>
chip_gen: v7x
topology: tpu7x:2x2x1
jax: 0.10.0
libtpu: 0.0.40
codegen_flags: <defaults>
</compile_context>

<pallas_src>
import math

import jax
import jax.numpy as jnp
import numpy as np
from jax.experimental import pallas as pl

# ----------------------------- model configuration ---------------------------
BATCH        = 2
NUM_FEATURES = 22            # num_features
SEQ_LEN      = 32            # seq_len (small; module default 300/1000)
CNN_OUT      = 8             # cnn_out_channels (small; module default 64)
FILTER_SIZES = (3, 5, 7, 11, 15)
KMAX         = max(FILTER_SIZES)
PAD          = (KMAX - 1) // 2
D_MODEL      = CNN_OUT * len(FILTER_SIZES)     # total_cnn_out = 40
NUM_HEADS    = 8             # transformer_num_heads
HEAD_DIM     = D_MODEL // NUM_HEADS            # 5
FF_DIM       = 32            # transformer_hidden_dim (small; default 128)
NUM_LAYERS   = 2             # transformer_num_layers
NUM_CLASSES  = 3
T_OUT        = SEQ_LEN // 2  # sequence length after MaxPool1d(2) = 16
KC           = KMAX * NUM_FEATURES             # im2col contraction depth = 330
R_ACT        = BATCH * T_OUT                   # folded activation rows = 32
R_BLK        = NUM_HEADS * R_ACT               # head-blocked rows = 256
ATTN_SCALE   = 1.0 / math.sqrt(HEAD_DIM)
LN_EPS       = 1e-5
BN_EPS       = 1e-5
NEG_INF      = -1e30


# ---------------- precomputed attention / pooling constants ------------------
def _build_constants():
    # headmask[r, j] = 1 iff head(row r) == head(lane j); rows r = h*R_ACT + b*T_OUT + s
    hmask = np.zeros((R_BLK, D_MODEL), np.float32)
    # amask[q_row, r] = 0 iff same (batch, head) block, else -1e30
    amask = np.full((R_ACT, R_BLK), NEG_INF, np.float32)
    # pool[b, row] = 1/T_OUT iff row belongs to batch b (mean over time as a matmul)
    pool = np.zeros((BATCH, R_ACT), np.float32)
    for h in range(NUM_HEADS):
        hmask[h * R_ACT:(h + 1) * R_ACT, h * HEAD_DIM:(h + 1) * HEAD_DIM] = 1.0
        for b in range(BATCH):
            amask[b * T_OUT:(b + 1) * T_OUT,
                  h * R_ACT + b * T_OUT: h * R_ACT + (b + 1) * T_OUT] = 0.0
    for b in range(BATCH):
        pool[b, b * T_OUT:(b + 1) * T_OUT] = 1.0 / T_OUT
    return hmask, amask, pool


_HEADMASK_NP, _ADDMASK_NP, _POOL_NP = _build_constants()


def _layer_norm(v, gamma, beta):
    mu = jnp.mean(v, axis=-1, keepdims=True)
    c = v - mu
    var = jnp.mean(c * c, axis=-1, keepdims=True)
    return c * jax.lax.rsqrt(var + LN_EPS) * gamma + beta


# ------------------------- fused forward kernel (single step) ----------------
def _fused_kernel(cols_ref, wconv_ref, bconv_ref, bnsc_ref, bnsh_ref, pe_ref,
                  wq_ref, bq_ref, wk_ref, bk_ref, wv_ref, bv_ref,
                  wo_ref, bo_ref, g1_ref, be1_ref,
                  w1_ref, b1_ref, w2_ref, b2_ref, g2_ref, be2_ref,
                  hmask_ref, amask_ref, pool_ref, wfc_ref, bfc_ref,
                  out_ref):
    # ---- CNN front-end: one im2col matmul -> bias+ReLU -> BN(eval) -> MaxPool(2) ----
    # cols rows: [b0 even | b1 even | b0 odd | b1 odd] pooled-time positions.
    y = jnp.dot(cols_ref[...], wconv_ref[...], preferred_element_type=jnp.float32)
    y = jnp.maximum(y + bconv_ref[...], 0.0)               # bias + ReLU
    y = y * bnsc_ref[...] + bnsh_ref[...]                  # BatchNorm1d (eval), pre-pool
    h = jnp.maximum(y[:R_ACT, :], y[R_ACT:, :]) + pe_ref[...]   # MaxPool1d(2) + pos.enc.
    # h rows: [b0 t0..15 | b1 t0..15]                       (R_ACT, D_MODEL)

    hmask = hmask_ref[...]                                  # (R_BLK, D_MODEL)
    amask = amask_ref[...]                                  # (R_ACT, R_BLK)

    # ---- transformer encoder layers (post-norm, ReLU, eval-mode dropout) ------------
    for l in range(NUM_LAYERS):                             # static unroll
        # Q pre-scaled by 1/sqrt(head_dim) in the wrapper.
        q = jnp.dot(h, wq_ref[l], preferred_element_type=jnp.float32) + bq_ref[l]
        k = jnp.dot(h, wk_ref[l], preferred_element_type=jnp.float32) + bk_ref[l]
        v = jnp.dot(h, wv_ref[l], preferred_element_type=jnp.float32) + bv_ref[l]

        # Head-blocked K / V: row r = head*R_ACT + b*T_OUT + s keeps only head's 5 lanes.
        k_blk = jnp.concatenate([k] * NUM_HEADS, axis=0) * hmask     # (R_BLK, D_MODEL)
        v_blk = jnp.concatenate([v] * NUM_HEADS, axis=0) * hmask     # (R_BLK, D_MODEL)

        # Per-head scores land in disjoint 16-lane column blocks of one matmul.
        s = jax.lax.dot_general(q, k_blk, (((1,), (1,)), ((), ())),
                                preferred_element_type=jnp.float32)  # (R_ACT, R_BLK)
        s = s + amask                                       # kill cross-(batch,head) cols
        # Shared per-row max across heads as stabilizer (exactly equivalent to per-head
        # max unless inter-head score spread exceeds ~80 nats).
        e = jnp.exp(s - jnp.max(s, axis=-1, keepdims=True))

        o_un = jnp.dot(e, v_blk, preferred_element_type=jnp.float32)  # unnormalized PV
        den  = jnp.dot(e, hmask, preferred_element_type=jnp.float32)  # per-head softmax denom
        attn = o_un * pl.reciprocal(den, approx=True)                 # (R_ACT, D_MODEL)

        attn = jnp.dot(attn, wo_ref[l], preferred_element_type=jnp.float32) + bo_ref[l]
        h = _layer_norm(h + attn, g1_ref[l], be1_ref[l])    # residual + norm1

        f = jnp.dot(h, w1_ref[l], preferred_element_type=jnp.float32) + b1_ref[l]
        f = jnp.maximum(f, 0.0)                             # ReLU
        f = jnp.dot(f, w2_ref[l], preferred_element_type=jnp.float32) + b2_ref[l]
        h = _layer_norm(h + f, g2_ref[l], be2_ref[l])       # residual + norm2

    # ---- mean-pool over time (as a matmul) + Linear head ----------------------------
    feats = jnp.dot(pool_ref[...], h, preferred_element_type=jnp.float32)   # (B, D_MODEL)
    out_ref[...] = jnp.dot(feats, wfc_ref[...],
                           preferred_element_type=jnp.float32) + bfc_ref[...]


# ----------------------------- full forward ----------------------------------
@jax.jit
def cnn_transformer_forward(x_ncw, params):
    assert x_ncw.shape == (BATCH, NUM_FEATURES, SEQ_LEN)
    x = jnp.transpose(x_ncw, (0, 2, 1))                     # (B, L, C_in)
    xp = jnp.pad(x, ((0, 0), (PAD, PAD), (0, 0)))
    # im2col slab: cols[b, t, k*C + c] = xp[b, t + k, c]
    cols = jnp.concatenate([xp[:, k:k + SEQ_LEN, :] for k in range(KMAX)],
                           axis=-1)                         # (B, SEQ_LEN, KC)
    # parity-major row layout: [b0 even | b1 even | b0 odd | b1 odd] so MaxPool1d(2) is a
    # single sublane-block max in-kernel (no transpose HLO, no strided in-kernel loads).
    cols = jnp.concatenate([cols[:, 0::2, :], cols[:, 1::2, :]],
                           axis=0).reshape(2 * R_ACT, KC)   # (64, KC)

    pe2 = jnp.concatenate([params["pe"]] * BATCH, axis=0)   # (R_ACT, D_MODEL)
    wq_s = params["wq"] * ATTN_SCALE                        # fold 1/sqrt(head_dim) into Q
    bq_s = params["bq"] * ATTN_SCALE

    args = [
        cols,
        params["w_conv"].reshape(KC, D_MODEL), params["b_conv"],
        params["bn_scale"], params["bn_shift"], pe2,
        wq_s, bq_s, params["wk"], params["bk"], params["wv"], params["bv"],
        params["wo"], params["bo"],
        params["g1"], params["be1"],
        params["w1"], params["b1"], params["w2"], params["b2"],
        params["g2"], params["be2"],
        jnp.asarray(_HEADMASK_NP), jnp.asarray(_ADDMASK_NP), jnp.asarray(_POOL_NP),
        params["wfc"], params["bfc"],
    ]

    # Single grid step (no grid): whole-array blocks resident in VMEM (<0.5 MiB total),
    # no per-step pipeline overhead, weight double-buffering moot.
    return pl.pallas_call(
        _fused_kernel,
        out_shape=jax.ShapeDtypeStruct((BATCH, NUM_CLASSES), jnp.float32),
    )(*args)


# ----------------------------- parameter init --------------------------------
def init_params(key):
    keys = iter(jax.random.split(key, 64))

    def normal(shape, scale=0.1):
        return scale * jax.random.normal(next(keys), shape, jnp.float32)

    # Fuse the 5 CNN branches into one zero-padded 15-tap conv (channel-concat).
    w_conv = np.zeros((KMAX, NUM_FEATURES, D_MODEL), np.float32)
    b_conv = np.zeros((D_MODEL,), np.float32)
    bn_scale = np.zeros((D_MODEL,), np.float32)
    bn_shift = np.zeros((D_MODEL,), np.float32)
    for i, ksz in enumerate(FILTER_SIZES):
        cs = slice(i * CNN_OUT, (i + 1) * CNN_OUT)
        off = (KMAX - ksz) // 2
        w_conv[off:off + ksz, :, cs] = np.asarray(normal((ksz, NUM_FEATURES, CNN_OUT)))
        b_conv[cs] = np.asarray(normal((CNN_OUT,)))
        gamma = 1.0 + np.asarray(normal((CNN_OUT,)))
        beta = np.asarray(normal((CNN_OUT,)))
        rmean = np.asarray(normal((CNN_OUT,)))
        rvar = 1.0 + np.abs(np.asarray(normal((CNN_OUT,))))
        sc = gamma / np.sqrt(rvar + BN_EPS)
        bn_scale[cs] = sc
        bn_shift[cs] = beta - rmean * sc

    # Positional encoding buffer (matches PyTorch construction; max_len = seq_len // 2).
    max_len = SEQ_LEN // 2
    position = np.arange(max_len, dtype=np.float32)[:, None]
    div_term = np.exp(np.arange(0, D_MODEL, 2, dtype=np.float32)
                      * (-math.log(10000.0) / D_MODEL))
    pe = np.zeros((max_len, D_MODEL), np.float32)
    pe[:, 0::2] = np.sin(position * div_term)
    pe[:, 1::2] = np.cos(position * div_term)

    L = NUM_LAYERS
    return dict(
        w_conv=jnp.asarray(w_conv),
        b_conv=jnp.asarray(b_conv)[None, :],
        bn_scale=jnp.asarray(bn_scale)[None, :],
        bn_shift=jnp.asarray(bn_shift)[None, :],
        pe=jnp.asarray(pe[:T_OUT]),
        # transformer layer params, stacked along a leading NUM_LAYERS axis;
        # separate Q/K/V weights so in-kernel splits are whole-tensor (no lane slicing)
        wq=normal((L, D_MODEL, D_MODEL)), bq=normal((L, 1, D_MODEL)),
        wk=normal((L, D_MODEL, D_MODEL)), bk=normal((L, 1, D_MODEL)),
        wv=normal((L, D_MODEL, D_MODEL)), bv=normal((L, 1, D_MODEL)),
        wo=normal((L, D_MODEL, D_MODEL)), bo=normal((L, 1, D_MODEL)),
        g1=1.0 + normal((L, 1, D_MODEL)), be1=normal((L, 1, D_MODEL)),
        w1=normal((L, D_MODEL, FF_DIM)), b1=normal((L, 1, FF_DIM)),
        w2=normal((L, FF_DIM, D_MODEL)), b2=normal((L, 1, D_MODEL)),
        g2=1.0 + normal((L, 1, D_MODEL)), be2=normal((L, 1, D_MODEL)),
        wfc=normal((D_MODEL, NUM_CLASSES)),
        bfc=normal((1, NUM_CLASSES)),
    )


# ----------------------------- pure-JAX reference ----------------------------
def reference_forward(x_ncw, params):
    x = jnp.transpose(x_ncw, (0, 2, 1))
    B = x.shape[0]
    xp = jnp.pad(x, ((0, 0), (PAD, PAD), (0, 0)))
    y = jnp.zeros((B, SEQ_LEN, D_MODEL), jnp.float32)
    for k in range(KMAX):
        y = y + jnp.einsum("blc,cd->bld", xp[:, k:k + SEQ_LEN, :],
                           params["w_conv"][k])
    y = jnp.maximum(y + params["b_conv"], 0.0)
    y = y * params["bn_scale"] + params["bn_shift"]
    y = jnp.max(y.reshape(B, T_OUT, 2, D_MODEL), axis=2)
    h = y + params["pe"]

    def ln(v, g, b):
        mu = jnp.mean(v, axis=-1, keepdims=True)
        c = v - mu
        var = jnp.mean(c * c, axis=-1, keepdims=True)
        return c * jax.lax.rsqrt(var + LN_EPS) * g + b

    for l in range(NUM_LAYERS):
        q = jnp.einsum("btd,de->bte", h, params["wq"][l]) + params["bq"][l]
        k_ = jnp.einsum("btd,de->bte", h, params["wk"][l]) + params["bk"][l]
        v = jnp.einsum("btd,de->bte", h, params["wv"][l]) + params["bv"][l]
        heads = []
        for hd in range(NUM_HEADS):
            sl = slice(hd * HEAD_DIM, (hd + 1) * HEAD_DIM)
            qh, kh, vh = q[..., sl], k_[..., sl], v[..., sl]
            s = jnp.einsum("bte,bse->bts", qh, kh) / math.sqrt(HEAD_DIM)
            p = jax.nn.softmax(s, axis=-1)
            heads.append(jnp.einsum("bts,bse->bte", p, vh))
        attn = jnp.concatenate(heads, axis=-1)
        attn = jnp.einsum("btd,de->bte", attn, params["wo"][l]) + params["bo"][l]
        h = ln(h + attn, params["g1"][l], params["be1"][l])
        f = jnp.maximum(jnp.einsum("btd,df->btf", h, params["w1"][l])
                        + params["b1"][l], 0.0)
        f = jnp.einsum("btf,fd->btd", f, params["w2"][l]) + params["b2"][l]
        h = ln(h + f, params["g2"][l], params["be2"][l])
    feats = jnp.mean(h, axis=1)
    return jnp.einsum("bd,dc->bc", feats, params["wfc"]) + params["bfc"]


# ---------------------------------- main --------------------------------------
if __name__ == "__main__":
    key = jax.random.PRNGKey(0)
    pkey, xkey = jax.random.split(key)
    params = init_params(pkey)
    # Input matches the PyTorch module's forward: (batch, num_features, seq_len)
    x = jax.random.normal(xkey, (BATCH, NUM_FEATURES, SEQ_LEN), jnp.float32)

    logits = jax.block_until_ready(cnn_transformer_forward(x, params))
    ref = jax.block_until_ready(reference_forward(x, params))

    assert logits.shape == (BATCH, NUM_CLASSES)
    assert bool(jnp.all(jnp.isfinite(logits)))
    np.testing.assert_allclose(np.asarray(logits), np.asarray(ref),
                               rtol=5e-2, atol=5e-2)
    print("KERNEL_OK")
</pallas_src>

<mosaic_0001>
module attributes {stable_mosaic.version = 11 : i64} {
  func.func @_fused_kernel(%arg0: memref<64x330xf32, #tpu.memory_space<vmem>>, %arg1: memref<330x40xf32, #tpu.memory_space<vmem>>, %arg2: memref<1x40xf32, #tpu.memory_space<vmem>>, %arg3: memref<1x40xf32, #tpu.memory_space<vmem>>, %arg4: memref<1x40xf32, #tpu.memory_space<vmem>>, %arg5: memref<32x40xf32, #tpu.memory_space<vmem>>, %arg6: memref<2x40x40xf32, #tpu.memory_space<vmem>>, %arg7: memref<2x1x40xf32, #tpu.memory_space<vmem>>, %arg8: memref<2x40x40xf32, #tpu.memory_space<vmem>>, %arg9: memref<2x1x40xf32, #tpu.memory_space<vmem>>, %arg10: memref<2x40x40xf32, #tpu.memory_space<vmem>>, %arg11: memref<2x1x40xf32, #tpu.memory_space<vmem>>, %arg12: memref<2x40x40xf32, #tpu.memory_space<vmem>>, %arg13: memref<2x1x40xf32, #tpu.memory_space<vmem>>, %arg14: memref<2x1x40xf32, #tpu.memory_space<vmem>>, %arg15: memref<2x1x40xf32, #tpu.memory_space<vmem>>, %arg16: memref<2x40x32xf32, #tpu.memory_space<vmem>>, %arg17: memref<2x1x32xf32, #tpu.memory_space<vmem>>, %arg18: memref<2x32x40xf32, #tpu.memory_space<vmem>>, %arg19: memref<2x1x40xf32, #tpu.memory_space<vmem>>, %arg20: memref<2x1x40xf32, #tpu.memory_space<vmem>>, %arg21: memref<2x1x40xf32, #tpu.memory_space<vmem>>, %arg22: memref<256x40xf32, #tpu.memory_space<vmem>>, %arg23: memref<32x256xf32, #tpu.memory_space<vmem>>, %arg24: memref<2x32xf32, #tpu.memory_space<vmem>>, %arg25: memref<40x3xf32, #tpu.memory_space<vmem>>, %arg26: memref<1x3xf32, #tpu.memory_space<vmem>>, %arg27: memref<2x3xf32, #tpu.memory_space<vmem>>) attributes {dimension_semantics = [], scalar_prefetch = 0 : i64, scratch_operands = 0 : i64, tpu.core_type = #tpu.core_type<tc>} {
    %c0 = arith.constant 0 : index
    %c0_0 = arith.constant 0 : index
    %0 = vector.load %arg0[%c0, %c0_0] : memref<64x330xf32, #tpu.memory_space<vmem>>, vector<64x330xf32>
    %c0_1 = arith.constant 0 : index
    %c0_2 = arith.constant 0 : index
    %1 = vector.load %arg1[%c0_1, %c0_2] : memref<330x40xf32, #tpu.memory_space<vmem>>, vector<330x40xf32>
    %cst = arith.constant dense<0.000000e+00> : vector<64x40xf32>
    %2 = tpu.matmul %0, %1, %cst {dimension_numbers = #tpu.dot_dimension_numbers<[1], [0], [0], [1], [0, 0, 1, 1], [], []>} : vector<64x330xf32>, vector<330x40xf32>, vector<64x40xf32> -> vector<64x40xf32>
    %c0_3 = arith.constant 0 : index
    %c0_4 = arith.constant 0 : index
    %3 = vector.load %arg2[%c0_3, %c0_4] : memref<1x40xf32, #tpu.memory_space<vmem>>, vector<1x40xf32>
    %4 = vector.broadcast %3 : vector<1x40xf32> to vector<64x40xf32>
    %5 = arith.addf %2, %4 : vector<64x40xf32>
    %cst_5 = arith.constant 0.000000e+00 : f32
    %6 = vector.broadcast %cst_5 : f32 to vector<64x40xf32>
    %7 = arith.maximumf %5, %6 : vector<64x40xf32>
    %c0_6 = arith.constant 0 : index
    %c0_7 = arith.constant 0 : index
    %8 = vector.load %arg3[%c0_6, %c0_7] : memref<1x40xf32, #tpu.memory_space<vmem>>, vector<1x40xf32>
    %9 = vector.broadcast %8 : vector<1x40xf32> to vector<64x40xf32>
    %10 = arith.mulf %7, %9 : vector<64x40xf32>
    %c0_8 = arith.constant 0 : index
    %c0_9 = arith.constant 0 : index
    %11 = vector.load %arg4[%c0_8, %c0_9] : memref<1x40xf32, #tpu.memory_space<vmem>>, vector<1x40xf32>
    %12 = vector.broadcast %11 : vector<1x40xf32> to vector<64x40xf32>
    %13 = arith.addf %10, %12 : vector<64x40xf32>
    %14 = vector.extract_strided_slice %13 {offsets = [0, 0], sizes = [32, 40], strides = [1, 1]} : vector<64x40xf32> to vector<32x40xf32>
    %15 = vector.extract_strided_slice %13 {offsets = [32, 0], sizes = [32, 40], strides = [1, 1]} : vector<64x40xf32> to vector<32x40xf32>
    %16 = arith.maximumf %14, %15 : vector<32x40xf32>
    %c0_10 = arith.constant 0 : index
    %c0_11 = arith.constant 0 : index
    %17 = vector.load %arg5[%c0_10, %c0_11] : memref<32x40xf32, #tpu.memory_space<vmem>>, vector<32x40xf32>
    %18 = arith.addf %16, %17 : vector<32x40xf32>
    %c0_12 = arith.constant 0 : index
    %c0_13 = arith.constant 0 : index
    %19 = vector.load %arg22[%c0_12, %c0_13] : memref<256x40xf32, #tpu.memory_space<vmem>>, vector<256x40xf32>
    %c0_14 = arith.constant 0 : index
    %c0_15 = arith.constant 0 : index
    %20 = vector.load %arg23[%c0_14, %c0_15] : memref<32x256xf32, #tpu.memory_space<vmem>>, vector<32x256xf32>
    %c0_16 = arith.constant 0 : index
    %c0_17 = arith.constant 0 : index
    %c0_18 = arith.constant 0 : index
    %21 = vector.load %arg6[%c0_16, %c0_17, %c0_18] : memref<2x40x40xf32, #tpu.memory_space<vmem>>, vector<1x40x40xf32>
    %22 = vector.shape_cast %21 : vector<1x40x40xf32> to vector<40x40xf32>
    %cst_19 = arith.constant dense<0.000000e+00> : vector<32x40xf32>
    %23 = tpu.matmul %18, %22, %cst_19 {dimension_numbers = #tpu.dot_dimension_numbers<[1], [0], [0], [1], [0, 0, 1, 1], [], []>} : vector<32x40xf32>, vector<40x40xf32>, vector<32x40xf32> -> vector<32x40xf32>
    %c0_20 = arith.constant 0 : index
    %c0_21 = arith.constant 0 : index
    %c0_22 = arith.constant 0 : index
    %24 = vector.load %arg7[%c0_20, %c0_21, %c0_22] : memref<2x1x40xf32, #tpu.memory_space<vmem>>, vector<1x1x40xf32>
    %25 = vector.shape_cast %24 : vector<1x1x40xf32> to vector<1x40xf32>
    %26 = vector.broadcast %25 : vector<1x40xf32> to vector<32x40xf32>
    %27 = arith.addf %23, %26 : vector<32x40xf32>
    %c0_23 = arith.constant 0 : index
    %c0_24 = arith.constant 0 : index
    %c0_25 = arith.constant 0 : index
    %28 = vector.load %arg8[%c0_23, %c0_24, %c0_25] : memref<2x40x40xf32, #tpu.memory_space<vmem>>, vector<1x40x40xf32>
    %29 = vector.shape_cast %28 : vector<1x40x40xf32> to vector<40x40xf32>
    %cst_26 = arith.constant dense<0.000000e+00> : vector<32x40xf32>
    %30 = tpu.matmul %18, %29, %cst_26 {dimension_numbers = #tpu.dot_dimension_numbers<[1], [0], [0], [1], [0, 0, 1, 1], [], []>} : vector<32x40xf32>, vector<40x40xf32>, vector<32x40xf32> -> vector<32x40xf32>
    %c0_27 = arith.constant 0 : index
    %c0_28 = arith.constant 0 : index
    %c0_29 = arith.constant 0 : index
    %31 = vector.load %arg9[%c0_27, %c0_28, %c0_29] : memref<2x1x40xf32, #tpu.memory_space<vmem>>, vector<1x1x40xf32>
    %32 = vector.shape_cast %31 : vector<1x1x40xf32> to vector<1x40xf32>
    %33 = vector.broadcast %32 : vector<1x40xf32> to vector<32x40xf32>
    %34 = arith.addf %30, %33 : vector<32x40xf32>
    %c0_30 = arith.constant 0 : index
    %c0_31 = arith.constant 0 : index
    %c0_32 = arith.constant 0 : index
    %35 = vector.load %arg10[%c0_30, %c0_31, %c0_32] : memref<2x40x40xf32, #tpu.memory_space<vmem>>, vector<1x40x40xf32>
    %36 = vector.shape_cast %35 : vector<1x40x40xf32> to vector<40x40xf32>
    %cst_33 = arith.constant dense<0.000000e+00> : vector<32x40xf32>
    %37 = tpu.matmul %18, %36, %cst_33 {dimension_numbers = #tpu.dot_dimension_numbers<[1], [0], [0], [1], [0, 0, 1, 1], [], []>} : vector<32x40xf32>, vector<40x40xf32>, vector<32x40xf32> -> vector<32x40xf32>
    %c0_34 = arith.constant 0 : index
    %c0_35 = arith.constant 0 : index
    %c0_36 = arith.constant 0 : index
    %38 = vector.load %arg11[%c0_34, %c0_35, %c0_36] : memref<2x1x40xf32, #tpu.memory_space<vmem>>, vector<1x1x40xf32>
    %39 = vector.shape_cast %38 : vector<1x1x40xf32> to vector<1x40xf32>
    %40 = vector.broadcast %39 : vector<1x40xf32> to vector<32x40xf32>
    %41 = arith.addf %37, %40 : vector<32x40xf32>
    %42 = tpu.concatenate %34, %34, %34, %34, %34, %34, %34, %34 in 0 : vector<32x40xf32>, vector<32x40xf32>, vector<32x40xf32>, vector<32x40xf32>, vector<32x40xf32>, vector<32x40xf32>, vector<32x40xf32>, vector<32x40xf32> -> vector<256x40xf32>
    %43 = arith.mulf %42, %19 : vector<256x40xf32>
    %44 = tpu.concatenate %41, %41, %41, %41, %41, %41, %41, %41 in 0 : vector<32x40xf32>, vector<32x40xf32>, vector<32x40xf32>, vector<32x40xf32>, vector<32x40xf32>, vector<32x40xf32>, vector<32x40xf32>, vector<32x40xf32> -> vector<256x40xf32>
    %45 = arith.mulf %44, %19 : vector<256x40xf32>
    %cst_37 = arith.constant dense<0.000000e+00> : vector<32x256xf32>
    %46 = tpu.matmul %27, %43, %cst_37 {dimension_numbers = #tpu.dot_dimension_numbers<[1], [1], [0], [0], [0, 0, 1, 0], [], []>} : vector<32x40xf32>, vector<256x40xf32>, vector<32x256xf32> -> vector<32x256xf32>
    %47 = arith.addf %46, %20 : vector<32x256xf32>
    %cst_38 = arith.constant dense<0xFF800000> : vector<32xf32>
    %48 = vector.multi_reduction <maximumf>, %47, %cst_38 [1] : vector<32x256xf32> to vector<32xf32>
    %49 = vector.shape_cast %48 : vector<32xf32> to vector<32x1xf32>
    %50 = vector.broadcast %49 : vector<32x1xf32> to vector<32x256xf32>
    %51 = arith.subf %47, %50 : vector<32x256xf32>
    %52 = math.exp %51 : vector<32x256xf32>
    %cst_39 = arith.constant dense<0.000000e+00> : vector<32x40xf32>
    %53 = tpu.matmul %52, %45, %cst_39 {dimension_numbers = #tpu.dot_dimension_numbers<[1], [0], [0], [1], [0, 0, 1, 1], [], []>} : vector<32x256xf32>, vector<256x40xf32>, vector<32x40xf32> -> vector<32x40xf32>
    %cst_40 = arith.constant dense<0.000000e+00> : vector<32x40xf32>
    %54 = tpu.matmul %52, %19, %cst_40 {dimension_numbers = #tpu.dot_dimension_numbers<[1], [0], [0], [1], [0, 0, 1, 1], [], []>} : vector<32x256xf32>, vector<256x40xf32>, vector<32x40xf32> -> vector<32x40xf32>
    %55 = tpu.reciprocal %54 {approx = true} : vector<32x40xf32> -> vector<32x40xf32>
    %56 = arith.mulf %53, %55 : vector<32x40xf32>
    %c0_41 = arith.constant 0 : index
    %c0_42 = arith.constant 0 : index
    %c0_43 = arith.constant 0 : index
    %57 = vector.load %arg12[%c0_41, %c0_42, %c0_43] : memref<2x40x40xf32, #tpu.memory_space<vmem>>, vector<1x40x40xf32>
    %58 = vector.shape_cast %57 : vector<1x40x40xf32> to vector<40x40xf32>
    %cst_44 = arith.constant dense<0.000000e+00> : vector<32x40xf32>
    %59 = tpu.matmul %56, %58, %cst_44 {dimension_numbers = #tpu.dot_dimension_numbers<[1], [0], [0], [1], [0, 0, 1, 1], [], []>} : vector<32x40xf32>, vector<40x40xf32>, vector<32x40xf32> -> vector<32x40xf32>
    %c0_45 = arith.constant 0 : index
    %c0_46 = arith.constant 0 : index
    %c0_47 = arith.constant 0 : index
    %60 = vector.load %arg13[%c0_45, %c0_46, %c0_47] : memref<2x1x40xf32, #tpu.memory_space<vmem>>, vector<1x1x40xf32>
    %61 = vector.shape_cast %60 : vector<1x1x40xf32> to vector<1x40xf32>
    %62 = vector.broadcast %61 : vector<1x40xf32> to vector<32x40xf32>
    %63 = arith.addf %59, %62 : vector<32x40xf32>
    %64 = arith.addf %18, %63 : vector<32x40xf32>
    %c0_48 = arith.constant 0 : index
    %c0_49 = arith.constant 0 : index
    %c0_50 = arith.constant 0 : index
    %65 = vector.load %arg14[%c0_48, %c0_49, %c0_50] : memref<2x1x40xf32, #tpu.memory_space<vmem>>, vector<1x1x40xf32>
    %66 = vector.shape_cast %65 : vector<1x1x40xf32> to vector<1x40xf32>
    %c0_51 = arith.constant 0 : index
    %c0_52 = arith.constant 0 : index
    %c0_53 = arith.constant 0 : index
    %67 = vector.load %arg15[%c0_51, %c0_52, %c0_53] : memref<2x1x40xf32, #tpu.memory_space<vmem>>, vector<1x1x40xf32>
    %68 = vector.shape_cast %67 : vector<1x1x40xf32> to vector<1x40xf32>
    %cst_54 = arith.constant dense<0.000000e+00> : vector<32xf32>
    %69 = vector.multi_reduction <add>, %64, %cst_54 [1] : vector<32x40xf32> to vector<32xf32>
    %70 = vector.shape_cast %69 : vector<32xf32> to vector<32x1xf32>
    %cst_55 = arith.constant 4.000000e+01 : f32
    %71 = vector.broadcast %cst_55 : f32 to vector<32x1xf32>
    %72 = arith.divf %70, %71 : vector<32x1xf32>
    %73 = vector.broadcast %72 : vector<32x1xf32> to vector<32x40xf32>
    %74 = arith.subf %64, %73 : vector<32x40xf32>
    %75 = arith.mulf %74, %74 : vector<32x40xf32>
    %cst_56 = arith.constant dense<0.000000e+00> : vector<32xf32>
    %76 = vector.multi_reduction <add>, %75, %cst_56 [1] : vector<32x40xf32> to vector<32xf32>
    %77 = vector.shape_cast %76 : vector<32xf32> to vector<32x1xf32>
    %cst_57 = arith.constant 4.000000e+01 : f32
    %78 = vector.broadcast %cst_57 : f32 to vector<32x1xf32>
    %79 = arith.divf %77, %78 : vector<32x1xf32>
    %cst_58 = arith.constant 9.99999974E-6 : f32
    %80 = vector.broadcast %cst_58 : f32 to vector<32x1xf32>
    %81 = arith.addf %79, %80 : vector<32x1xf32>
    %82 = math.rsqrt %81 : vector<32x1xf32>
    %83 = vector.broadcast %82 : vector<32x1xf32> to vector<32x40xf32>
    %84 = arith.mulf %74, %83 : vector<32x40xf32>
    %85 = vector.broadcast %66 : vector<1x40xf32> to vector<32x40xf32>
    %86 = arith.mulf %84, %85 : vector<32x40xf32>
    %87 = vector.broadcast %68 : vector<1x40xf32> to vector<32x40xf32>
    %88 = arith.addf %86, %87 : vector<32x40xf32>
    %c0_59 = arith.constant 0 : index
    %c0_60 = arith.constant 0 : index
    %c0_61 = arith.constant 0 : index
    %89 = vector.load %arg16[%c0_59, %c0_60, %c0_61] : memref<2x40x32xf32, #tpu.memory_space<vmem>>, vector<1x40x32xf32>
    %90 = vector.shape_cast %89 : vector<1x40x32xf32> to vector<40x32xf32>
    %cst_62 = arith.constant dense<0.000000e+00> : vector<32x32xf32>
    %91 = tpu.matmul %88, %90, %cst_62 {dimension_numbers = #tpu.dot_dimension_numbers<[1], [0], [0], [1], [0, 0, 1, 1], [], []>} : vector<32x40xf32>, vector<40x32xf32>, vector<32x32xf32> -> vector<32x32xf32>
    %c0_63 = arith.constant 0 : index
    %c0_64 = arith.constant 0 : index
    %c0_65 = arith.constant 0 : index
    %92 = vector.load %arg17[%c0_63, %c0_64, %c0_65] : memref<2x1x32xf32, #tpu.memory_space<vmem>>, vector<1x1x32xf32>
    %93 = vector.shape_cast %92 : vector<1x1x32xf32> to vector<1x32xf32>
    %94 = vector.broadcast %93 : vector<1x32xf32> to vector<32x32xf32>
    %95 = arith.addf %91, %94 : vector<32x32xf32>
    %cst_66 = arith.constant 0.000000e+00 : f32
    %96 = vector.broadcast %cst_66 : f32 to vector<32x32xf32>
    %97 = arith.maximumf %95, %96 : vector<32x32xf32>
    %c0_67 = arith.constant 0 : index
    %c0_68 = arith.constant 0 : index
    %c0_69 = arith.constant 0 : index
    %98 = vector.load %arg18[%c0_67, %c0_68, %c0_69] : memref<2x32x40xf32, #tpu.memory_space<vmem>>, vector<1x32x40xf32>
    %99 = vector.shape_cast %98 : vector<1x32x40xf32> to vector<32x40xf32>
    %cst_70 = arith.constant dense<0.000000e+00> : vector<32x40xf32>
    %100 = tpu.matmul %97, %99, %cst_70 {dimension_numbers = #tpu.dot_dimension_numbers<[1], [0], [0], [1], [0, 0, 1, 1], [], []>} : vector<32x32xf32>, vector<32x40xf32>, vector<32x40xf32> -> vector<32x40xf32>
    %c0_71 = arith.constant 0 : index
    %c0_72 = arith.constant 0 : index
    %c0_73 = arith.constant 0 : index
    %101 = vector.load %arg19[%c0_71, %c0_72, %c0_73] : memref<2x1x40xf32, #tpu.memory_space<vmem>>, vector<1x1x40xf32>
    %102 = vector.shape_cast %101 : vector<1x1x40xf32> to vector<1x40xf32>
    %103 = vector.broadcast %102 : vector<1x40xf32> to vector<32x40xf32>
    %104 = arith.addf %100, %103 : vector<32x40xf32>
    %105 = arith.addf %88, %104 : vector<32x40xf32>
    %c0_74 = arith.constant 0 : index
    %c0_75 = arith.constant 0 : index
    %c0_76 = arith.constant 0 : index
    %106 = vector.load %arg20[%c0_74, %c0_75, %c0_76] : memref<2x1x40xf32, #tpu.memory_space<vmem>>, vector<1x1x40xf32>
    %107 = vector.shape_cast %106 : vector<1x1x40xf32> to vector<1x40xf32>
    %c0_77 = arith.constant 0 : index
    %c0_78 = arith.constant 0 : index
    %c0_79 = arith.constant 0 : index
    %108 = vector.load %arg21[%c0_77, %c0_78, %c0_79] : memref<2x1x40xf32, #tpu.memory_space<vmem>>, vector<1x1x40xf32>
    %109 = vector.shape_cast %108 : vector<1x1x40xf32> to vector<1x40xf32>
    %cst_80 = arith.constant dense<0.000000e+00> : vector<32xf32>
    %110 = vector.multi_reduction <add>, %105, %cst_80 [1] : vector<32x40xf32> to vector<32xf32>
    %111 = vector.shape_cast %110 : vector<32xf32> to vector<32x1xf32>
    %cst_81 = arith.constant 4.000000e+01 : f32
    %112 = vector.broadcast %cst_81 : f32 to vector<32x1xf32>
    %113 = arith.divf %111, %112 : vector<32x1xf32>
    %114 = vector.broadcast %113 : vector<32x1xf32> to vector<32x40xf32>
    %115 = arith.subf %105, %114 : vector<32x40xf32>
    %116 = arith.mulf %115, %115 : vector<32x40xf32>
    %cst_82 = arith.constant dense<0.000000e+00> : vector<32xf32>
    %117 = vector.multi_reduction <add>, %116, %cst_82 [1] : vector<32x40xf32> to vector<32xf32>
    %118 = vector.shape_cast %117 : vector<32xf32> to vector<32x1xf32>
    %cst_83 = arith.constant 4.000000e+01 : f32
    %119 = vector.broadcast %cst_83 : f32 to vector<32x1xf32>
    %120 = arith.divf %118, %119 : vector<32x1xf32>
    %cst_84 = arith.constant 9.99999974E-6 : f32
    %121 = vector.broadcast %cst_84 : f32 to vector<32x1xf32>
    %122 = arith.addf %120, %121 : vector<32x1xf32>
    %123 = math.rsqrt %122 : vector<32x1xf32>
    %124 = vector.broadcast %123 : vector<32x1xf32> to vector<32x40xf32>
    %125 = arith.mulf %115, %124 : vector<32x40xf32>
    %126 = vector.broadcast %107 : vector<1x40xf32> to vector<32x40xf32>
    %127 = arith.mulf %125, %126 : vector<32x40xf32>
    %128 = vector.broadcast %109 : vector<1x40xf32> to vector<32x40xf32>
    %129 = arith.addf %127, %128 : vector<32x40xf32>
    %c1 = arith.constant 1 : index
    %c0_85 = arith.constant 0 : index
    %c0_86 = arith.constant 0 : index
    %130 = vector.load %arg6[%c1, %c0_85, %c0_86] : memref<2x40x40xf32, #tpu.memory_space<vmem>>, vector<1x40x40xf32>
    %131 = vector.shape_cast %130 : vector<1x40x40xf32> to vector<40x40xf32>
    %cst_87 = arith.constant dense<0.000000e+00> : vector<32x40xf32>
    %132 = tpu.matmul %129, %131, %cst_87 {dimension_numbers = #tpu.dot_dimension_numbers<[1], [0], [0], [1], [0, 0, 1, 1], [], []>} : vector<32x40xf32>, vector<40x40xf32>, vector<32x40xf32> -> vector<32x40xf32>
    %c1_88 = arith.constant 1 : index
    %c0_89 = arith.constant 0 : index
    %c0_90 = arith.constant 0 : index
    %133 = vector.load %arg7[%c1_88, %c0_89, %c0_90] : memref<2x1x40xf32, #tpu.memory_space<vmem>>, vector<1x1x40xf32>
    %134 = vector.shape_cast %133 : vector<1x1x40xf32> to vector<1x40xf32>
    %135 = vector.broadcast %134 : vector<1x40xf32> to vector<32x40xf32>
    %136 = arith.addf %132, %135 : vector<32x40xf32>
    %c1_91 = arith.constant 1 : index
    %c0_92 = arith.constant 0 : index
    %c0_93 = arith.constant 0 : index
    %137 = vector.load %arg8[%c1_91, %c0_92, %c0_93] : memref<2x40x40xf32, #tpu.memory_space<vmem>>, vector<1x40x40xf32>
    %138 = vector.shape_cast %137 : vector<1x40x40xf32> to vector<40x40xf32>
    %cst_94 = arith.constant dense<0.000000e+00> : vector<32x40xf32>
    %139 = tpu.matmul %129, %138, %cst_94 {dimension_numbers = #tpu.dot_dimension_numbers<[1], [0], [0], [1], [0, 0, 1, 1], [], []>} : vector<32x40xf32>, vector<40x40xf32>, vector<32x40xf32> -> vector<32x40xf32>
    %c1_95 = arith.constant 1 : index
    %c0_96 = arith.constant 0 : index
    %c0_97 = arith.constant 0 : index
    %140 = vector.load %arg9[%c1_95, %c0_96, %c0_97] : memref<2x1x40xf32, #tpu.memory_space<vmem>>, vector<1x1x40xf32>
    %141 = vector.shape_cast %140 : vector<1x1x40xf32> to vector<1x40xf32>
    %142 = vector.broadcast %141 : vector<1x40xf32> to vector<32x40xf32>
    %143 = arith.addf %139, %142 : vector<32x40xf32>
    %c1_98 = arith.constant 1 : index
    %c0_99 = arith.constant 0 : index
    %c0_100 = arith.constant 0 : index
    %144 = vector.load %arg10[%c1_98, %c0_99, %c0_100] : memref<2x40x40xf32, #tpu.memory_space<vmem>>, vector<1x40x40xf32>
    %145 = vector.shape_cast %144 : vector<1x40x40xf32> to vector<40x40xf32>
    %cst_101 = arith.constant dense<0.000000e+00> : vector<32x40xf32>
    %146 = tpu.matmul %129, %145, %cst_101 {dimension_numbers = #tpu.dot_dimension_numbers<[1], [0], [0], [1], [0, 0, 1, 1], [], []>} : vector<32x40xf32>, vector<40x40xf32>, vector<32x40xf32> -> vector<32x40xf32>
    %c1_102 = arith.constant 1 : index
    %c0_103 = arith.constant 0 : index
    %c0_104 = arith.constant 0 : index
    %147 = vector.load %arg11[%c1_102, %c0_103, %c0_104] : memref<2x1x40xf32, #tpu.memory_space<vmem>>, vector<1x1x40xf32>
    %148 = vector.shape_cast %147 : vector<1x1x40xf32> to vector<1x40xf32>
    %149 = vector.broadcast %148 : vector<1x40xf32> to vector<32x40xf32>
    %150 = arith.addf %146, %149 : vector<32x40xf32>
    %151 = tpu.concatenate %143, %143, %143, %143, %143, %143, %143, %143 in 0 : vector<32x40xf32>, vector<32x40xf32>, vector<32x40xf32>, vector<32x40xf32>, vector<32x40xf32>, vector<32x40xf32>, vector<32x40xf32>, vector<32x40xf32> -> vector<256x40xf32>
    %152 = arith.mulf %151, %19 : vector<256x40xf32>
    %153 = tpu.concatenate %150, %150, %150, %150, %150, %150, %150, %150 in 0 : vector<32x40xf32>, vector<32x40xf32>, vector<32x40xf32>, vector<32x40xf32>, vector<32x40xf32>, vector<32x40xf32>, vector<32x40xf32>, vector<32x40xf32> -> vector<256x40xf32>
    %154 = arith.mulf %153, %19 : vector<256x40xf32>
    %cst_105 = arith.constant dense<0.000000e+00> : vector<32x256xf32>
    %155 = tpu.matmul %136, %152, %cst_105 {dimension_numbers = #tpu.dot_dimension_numbers<[1], [1], [0], [0], [0, 0, 1, 0], [], []>} : vector<32x40xf32>, vector<256x40xf32>, vector<32x256xf32> -> vector<32x256xf32>
    %156 = arith.addf %155, %20 : vector<32x256xf32>
    %cst_106 = arith.constant dense<0xFF800000> : vector<32xf32>
    %157 = vector.multi_reduction <maximumf>, %156, %cst_106 [1] : vector<32x256xf32> to vector<32xf32>
    %158 = vector.shape_cast %157 : vector<32xf32> to vector<32x1xf32>
    %159 = vector.broadcast %158 : vector<32x1xf32> to vector<32x256xf32>
    %160 = arith.subf %156, %159 : vector<32x256xf32>
    %161 = math.exp %160 : vector<32x256xf32>
    %cst_107 = arith.constant dense<0.000000e+00> : vector<32x40xf32>
    %162 = tpu.matmul %161, %154, %cst_107 {dimension_numbers = #tpu.dot_dimension_numbers<[1], [0], [0], [1], [0, 0, 1, 1], [], []>} : vector<32x256xf32>, vector<256x40xf32>, vector<32x40xf32> -> vector<32x40xf32>
    %cst_108 = arith.constant dense<0.000000e+00> : vector<32x40xf32>
    %163 = tpu.matmul %161, %19, %cst_108 {dimension_numbers = #tpu.dot_dimension_numbers<[1], [0], [0], [1], [0, 0, 1, 1], [], []>} : vector<32x256xf32>, vector<256x40xf32>, vector<32x40xf32> -> vector<32x40xf32>
    %164 = tpu.reciprocal %163 {approx = true} : vector<32x40xf32> -> vector<32x40xf32>
    %165 = arith.mulf %162, %164 : vector<32x40xf32>
    %c1_109 = arith.constant 1 : index
    %c0_110 = arith.constant 0 : index
    %c0_111 = arith.constant 0 : index
    %166 = vector.load %arg12[%c1_109, %c0_110, %c0_111] : memref<2x40x40xf32, #tpu.memory_space<vmem>>, vector<1x40x40xf32>
    %167 = vector.shape_cast %166 : vector<1x40x40xf32> to vector<40x40xf32>
    %cst_112 = arith.constant dense<0.000000e+00> : vector<32x40xf32>
    %168 = tpu.matmul %165, %167, %cst_112 {dimension_numbers = #tpu.dot_dimension_numbers<[1], [0], [0], [1], [0, 0, 1, 1], [], []>} : vector<32x40xf32>, vector<40x40xf32>, vector<32x40xf32> -> vector<32x40xf32>
    %c1_113 = arith.constant 1 : index
    %c0_114 = arith.constant 0 : index
    %c0_115 = arith.constant 0 : index
    %169 = vector.load %arg13[%c1_113, %c0_114, %c0_115] : memref<2x1x40xf32, #tpu.memory_space<vmem>>, vector<1x1x40xf32>
    %170 = vector.shape_cast %169 : vector<1x1x40xf32> to vector<1x40xf32>
    %171 = vector.broadcast %170 : vector<1x40xf32> to vector<32x40xf32>
    %172 = arith.addf %168, %171 : vector<32x40xf32>
    %173 = arith.addf %129, %172 : vector<32x40xf32>
    %c1_116 = arith.constant 1 : index
    %c0_117 = arith.constant 0 : index
    %c0_118 = arith.constant 0 : index
    %174 = vector.load %arg14[%c1_116, %c0_117, %c0_118] : memref<2x1x40xf32, #tpu.memory_space<vmem>>, vector<1x1x40xf32>
    %175 = vector.shape_cast %174 : vector<1x1x40xf32> to vector<1x40xf32>
    %c1_119 = arith.constant 1 : index
    %c0_120 = arith.constant 0 : index
    %c0_121 = arith.constant 0 : index
    %176 = vector.load %arg15[%c1_119, %c0_120, %c0_121] : memref<2x1x40xf32, #tpu.memory_space<vmem>>, vector<1x1x40xf32>
    %177 = vector.shape_cast %176 : vector<1x1x40xf32> to vector<1x40xf32>
    %cst_122 = arith.constant dense<0.000000e+00> : vector<32xf32>
    %178 = vector.multi_reduction <add>, %173, %cst_122 [1] : vector<32x40xf32> to vector<32xf32>
    %179 = vector.shape_cast %178 : vector<32xf32> to vector<32x1xf32>
    %cst_123 = arith.constant 4.000000e+01 : f32
    %180 = vector.broadcast %cst_123 : f32 to vector<32x1xf32>
    %181 = arith.divf %179, %180 : vector<32x1xf32>
    %182 = vector.broadcast %181 : vector<32x1xf32> to vector<32x40xf32>
    %183 = arith.subf %173, %182 : vector<32x40xf32>
    %184 = arith.mulf %183, %183 : vector<32x40xf32>
    %cst_124 = arith.constant dense<0.000000e+00> : vector<32xf32>
    %185 = vector.multi_reduction <add>, %184, %cst_124 [1] : vector<32x40xf32> to vector<32xf32>
    %186 = vector.shape_cast %185 : vector<32xf32> to vector<32x1xf32>
    %cst_125 = arith.constant 4.000000e+01 : f32
    %187 = vector.broadcast %cst_125 : f32 to vector<32x1xf32>
    %188 = arith.divf %186, %187 : vector<32x1xf32>
    %cst_126 = arith.constant 9.99999974E-6 : f32
    %189 = vector.broadcast %cst_126 : f32 to vector<32x1xf32>
    %190 = arith.addf %188, %189 : vector<32x1xf32>
    %191 = math.rsqrt %190 : vector<32x1xf32>
    %192 = vector.broadcast %191 : vector<32x1xf32> to vector<32x40xf32>
    %193 = arith.mulf %183, %192 : vector<32x40xf32>
    %194 = vector.broadcast %175 : vector<1x40xf32> to vector<32x40xf32>
    %195 = arith.mulf %193, %194 : vector<32x40xf32>
    %196 = vector.broadcast %177 : vector<1x40xf32> to vector<32x40xf32>
    %197 = arith.addf %195, %196 : vector<32x40xf32>
    %c1_127 = arith.constant 1 : index
    %c0_128 = arith.constant 0 : index
    %c0_129 = arith.constant 0 : index
    %198 = vector.load %arg16[%c1_127, %c0_128, %c0_129] : memref<2x40x32xf32, #tpu.memory_space<vmem>>, vector<1x40x32xf32>
    %199 = vector.shape_cast %198 : vector<1x40x32xf32> to vector<40x32xf32>
    %cst_130 = arith.constant dense<0.000000e+00> : vector<32x32xf32>
    %200 = tpu.matmul %197, %199, %cst_130 {dimension_numbers = #tpu.dot_dimension_numbers<[1], [0], [0], [1], [0, 0, 1, 1], [], []>} : vector<32x40xf32>, vector<40x32xf32>, vector<32x32xf32> -> vector<32x32xf32>
    %c1_131 = arith.constant 1 : index
    %c0_132 = arith.constant 0 : index
    %c0_133 = arith.constant 0 : index
    %201 = vector.load %arg17[%c1_131, %c0_132, %c0_133] : memref<2x1x32xf32, #tpu.memory_space<vmem>>, vector<1x1x32xf32>
    %202 = vector.shape_cast %201 : vector<1x1x32xf32> to vector<1x32xf32>
    %203 = vector.broadcast %202 : vector<1x32xf32> to vector<32x32xf32>
    %204 = arith.addf %200, %203 : vector<32x32xf32>
    %cst_134 = arith.constant 0.000000e+00 : f32
    %205 = vector.broadcast %cst_134 : f32 to vector<32x32xf32>
    %206 = arith.maximumf %204, %205 : vector<32x32xf32>
    %c1_135 = arith.constant 1 : index
    %c0_136 = arith.constant 0 : index
    %c0_137 = arith.constant 0 : index
    %207 = vector.load %arg18[%c1_135, %c0_136, %c0_137] : memref<2x32x40xf32, #tpu.memory_space<vmem>>, vector<1x32x40xf32>
    %208 = vector.shape_cast %207 : vector<1x32x40xf32> to vector<32x40xf32>
    %cst_138 = arith.constant dense<0.000000e+00> : vector<32x40xf32>
    %209 = tpu.matmul %206, %208, %cst_138 {dimension_numbers = #tpu.dot_dimension_numbers<[1], [0], [0], [1], [0, 0, 1, 1], [], []>} : vector<32x32xf32>, vector<32x40xf32>, vector<32x40xf32> -> vector<32x40xf32>
    %c1_139 = arith.constant 1 : index
    %c0_140 = arith.constant 0 : index
    %c0_141 = arith.constant 0 : index
    %210 = vector.load %arg19[%c1_139, %c0_140, %c0_141] : memref<2x1x40xf32, #tpu.memory_space<vmem>>, vector<1x1x40xf32>
    %211 = vector.shape_cast %210 : vector<1x1x40xf32> to vector<1x40xf32>
    %212 = vector.broadcast %211 : vector<1x40xf32> to vector<32x40xf32>
    %213 = arith.addf %209, %212 : vector<32x40xf32>
    %214 = arith.addf %197, %213 : vector<32x40xf32>
    %c1_142 = arith.constant 1 : index
    %c0_143 = arith.constant 0 : index
    %c0_144 = arith.constant 0 : index
    %215 = vector.load %arg20[%c1_142, %c0_143, %c0_144] : memref<2x1x40xf32, #tpu.memory_space<vmem>>, vector<1x1x40xf32>
    %216 = vector.shape_cast %215 : vector<1x1x40xf32> to vector<1x40xf32>
    %c1_145 = arith.constant 1 : index
    %c0_146 = arith.constant 0 : index
    %c0_147 = arith.constant 0 : index
    %217 = vector.load %arg21[%c1_145, %c0_146, %c0_147] : memref<2x1x40xf32, #tpu.memory_space<vmem>>, vector<1x1x40xf32>
    %218 = vector.shape_cast %217 : vector<1x1x40xf32> to vector<1x40xf32>
    %cst_148 = arith.constant dense<0.000000e+00> : vector<32xf32>
    %219 = vector.multi_reduction <add>, %214, %cst_148 [1] : vector<32x40xf32> to vector<32xf32>
    %220 = vector.shape_cast %219 : vector<32xf32> to vector<32x1xf32>
    %cst_149 = arith.constant 4.000000e+01 : f32
    %221 = vector.broadcast %cst_149 : f32 to vector<32x1xf32>
    %222 = arith.divf %220, %221 : vector<32x1xf32>
    %223 = vector.broadcast %222 : vector<32x1xf32> to vector<32x40xf32>
    %224 = arith.subf %214, %223 : vector<32x40xf32>
    %225 = arith.mulf %224, %224 : vector<32x40xf32>
    %cst_150 = arith.constant dense<0.000000e+00> : vector<32xf32>
    %226 = vector.multi_reduction <add>, %225, %cst_150 [1] : vector<32x40xf32> to vector<32xf32>
    %227 = vector.shape_cast %226 : vector<32xf32> to vector<32x1xf32>
    %cst_151 = arith.constant 4.000000e+01 : f32
    %228 = vector.broadcast %cst_151 : f32 to vector<32x1xf32>
    %229 = arith.divf %227, %228 : vector<32x1xf32>
    %cst_152 = arith.constant 9.99999974E-6 : f32
    %230 = vector.broadcast %cst_152 : f32 to vector<32x1xf32>
    %231 = arith.addf %229, %230 : vector<32x1xf32>
    %232 = math.rsqrt %231 : vector<32x1xf32>
    %233 = vector.broadcast %232 : vector<32x1xf32> to vector<32x40xf32>
    %234 = arith.mulf %224, %233 : vector<32x40xf32>
    %235 = vector.broadcast %216 : vector<1x40xf32> to vector<32x40xf32>
    %236 = arith.mulf %234, %235 : vector<32x40xf32>
    %237 = vector.broadcast %218 : vector<1x40xf32> to vector<32x40xf32>
    %238 = arith.addf %236, %237 : vector<32x40xf32>
    %c0_153 = arith.constant 0 : index
    %c0_154 = arith.constant 0 : index
    %239 = vector.load %arg24[%c0_153, %c0_154] : memref<2x32xf32, #tpu.memory_space<vmem>>, vector<2x32xf32>
    %cst_155 = arith.constant dense<0.000000e+00> : vector<2x40xf32>
    %240 = tpu.matmul %239, %238, %cst_155 {dimension_numbers = #tpu.dot_dimension_numbers<[1], [0], [0], [1], [0, 0, 1, 1], [], []>} : vector<2x32xf32>, vector<32x40xf32>, vector<2x40xf32> -> vector<2x40xf32>
    %c0_156 = arith.constant 0 : index
    %c0_157 = arith.constant 0 : index
    %241 = vector.load %arg25[%c0_156, %c0_157] : memref<40x3xf32, #tpu.memory_space<vmem>>, vector<40x3xf32>
    %cst_158 = arith.constant dense<0.000000e+00> : vector<2x3xf32>
    %242 = tpu.matmul %240, %241, %cst_158 {dimension_numbers = #tpu.dot_dimension_numbers<[1], [0], [0], [1], [0, 0, 1, 1], [], []>} : vector<2x40xf32>, vector<40x3xf32>, vector<2x3xf32> -> vector<2x3xf32>
    %c0_159 = arith.constant 0 : index
    %c0_160 = arith.constant 0 : index
    %243 = vector.load %arg26[%c0_159, %c0_160] : memref<1x3xf32, #tpu.memory_space<vmem>>, vector<1x3xf32>
    %244 = vector.broadcast %243 : vector<1x3xf32> to vector<2x3xf32>
    %245 = arith.addf %242, %244 : vector<2x3xf32>
    %c0_161 = arith.constant 0 : index
    %c0_162 = arith.constant 0 : index
    %246 = vector.load %arg27[%c0_161, %c0_162] : memref<2x3xf32, #tpu.memory_space<vmem>>, vector<2x3xf32>
    tpu.vector_store %arg27[%c0_161, %c0_162], %245 {strides = array<i32>} : memref<2x3xf32, #tpu.memory_space<vmem>>, vector<2x3xf32>,
    return
  }
}

</mosaic_0001>

<llo_original>
// kernel: cnn_transformer_forward.1
$region0: #{cnn_transformer_forward.1}
  #allocation0 [shape = 'u32[]', space=smem, size = 0x4, offset = 0x4, fixed_abs, tag = 'smem constant byte address 0x4 - core index']
  #allocation1 [shape = 'u32[144,128]{1,0:T(1,128)}', space=vmem, size = 0x12000, scoped, tag = 'internal scratch']
  %s0 = inlined_call_operand.vmem [shape: f32[64,330], index: 0, kind: input, shape index: {}]
  %s1 = inlined_call_operand.vmem [shape: f32[330,40], index: 1, kind: input, shape index: {}]
  %s2 = inlined_call_operand.vmem [shape: f32[1,40], index: 2, kind: input, shape index: {}]
  %s3 = inlined_call_operand.vmem [shape: f32[1,40], index: 3, kind: input, shape index: {}]
  %s4 = inlined_call_operand.vmem [shape: f32[1,40], index: 4, kind: input, shape index: {}]
  %s5 = inlined_call_operand.vmem [shape: f32[32,40], index: 5, kind: input, shape index: {}]
  %s6 = inlined_call_operand.vmem [shape: f32[2,40,40], index: 6, kind: input, shape index: {}]
  %s7 = inlined_call_operand.vmem [shape: f32[2,1,40], index: 7, kind: input, shape index: {}]
  %s8 = inlined_call_operand.vmem [shape: f32[2,40,40], index: 8, kind: input, shape index: {}]
  %s9 = inlined_call_operand.vmem [shape: f32[2,1,40], index: 9, kind: input, shape index: {}]
  %s10 = inlined_call_operand.vmem [shape: f32[2,40,40], index: 10, kind: input, shape index: {}]
  %s11 = inlined_call_operand.vmem [shape: f32[2,1,40], index: 11, kind: input, shape index: {}]
  %s12 = inlined_call_operand.vmem [shape: f32[2,40,40], index: 12, kind: input, shape index: {}]
  %s13 = inlined_call_operand.vmem [shape: f32[2,1,40], index: 13, kind: input, shape index: {}]
  %s14 = inlined_call_operand.vmem [shape: f32[2,1,40], index: 14, kind: input, shape index: {}]
  %s15 = inlined_call_operand.vmem [shape: f32[2,1,40], index: 15, kind: input, shape index: {}]
  %s16 = inlined_call_operand.vmem [shape: f32[2,40,32], index: 16, kind: input, shape index: {}]
  %s17 = inlined_call_operand.vmem [shape: f32[2,1,32], index: 17, kind: input, shape index: {}]
  %s18 = inlined_call_operand.vmem [shape: f32[2,32,40], index: 18, kind: input, shape index: {}]
  %s19 = inlined_call_operand.vmem [shape: f32[2,1,40], index: 19, kind: input, shape index: {}]
  %s20 = inlined_call_operand.vmem [shape: f32[2,1,40], index: 20, kind: input, shape index: {}]
  %s21 = inlined_call_operand.vmem [shape: f32[2,1,40], index: 21, kind: input, shape index: {}]
  %s22 = inlined_call_operand.vmem [shape: f32[256,40], index: 22, kind: input, shape index: {}]
  %s23 = inlined_call_operand.vmem [shape: f32[32,256], index: 23, kind: input, shape index: {}]
  %s24 = inlined_call_operand.vmem [shape: f32[2,32], index: 24, kind: input, shape index: {}]
  %s25 = inlined_call_operand.vmem [shape: f32[40,3], index: 25, kind: input, shape index: {}]
  %s26 = inlined_call_operand.vmem [shape: f32[1,3], index: 26, kind: input, shape index: {}]
  %s27 = inlined_call_operand.hbm [shape: f32[2,3], index: 27, kind: output, shape index: {}]
  %s28 = sld [smem:[#allocation0]]
  $region118: #{cnn_transformer_forward.1} parent=0
    _
  %s30 = ssub.s32 1, %s28
  %s31 = scalar_select 0, %s30, %s28
  $region1: #{cnn_transformer_forward.1} parent=0
    #allocation2 [shape = 'u8[1024]{0}', space=vmem, size = 0x400, scoped, tag = 'output window, operand 0, single buffered']
    #allocation3 [shape = 's32[1]{0}', space=sflag, size = 0x4, scoped, tag = 'scoped memory for cnn_transformer_forward.1']
    %32 = vsyncpa [#allocation3], 0
    // Predicated region
    $region2: #{cnn_transformer_forward.1} parent=1 // pred_check
      _
    $region3: #{cnn_transformer_forward.1} parent=1 // pred_check_branch
      %34 = sbr.rel (0) target = $region5
    $region4: #{cnn_transformer_forward.1} parent=1 // pred_region
      _
    $region5: #{cnn_transformer_forward.1} parent=1 // pred_fallthru
      _
    // Predicated region
    $region6: #{cnn_transformer_forward.1} parent=1 // pred_check
      _
    $region7: #{cnn_transformer_forward.1} parent=1 // pred_check_branch
      %36 = sbr.rel (0) target = $region9
    $region8: #{cnn_transformer_forward.1} parent=1 // pred_region
      _
    $region9: #{cnn_transformer_forward.1} parent=1 // pred_fallthru
      _
    // Predicated region
    $region10: #{cnn_transformer_forward.1} parent=1 // pred_check
      _
    $region11: #{cnn_transformer_forward.1} parent=1 // pred_check_branch
      %38 = sbr.rel (0) target = $region13
    $region12: #{cnn_transformer_forward.1} parent=1 // pred_region
      _
    $region13: #{cnn_transformer_forward.1} parent=1 // pred_fallthru
      _
    // Predicated region
    $region14: #{cnn_transformer_forward.1} parent=1 // pred_check
      _
    $region15: #{cnn_transformer_forward.1} parent=1 // pred_check_branch
      %40 = sbr.rel (0) target = $region17
    $region16: #{cnn_transformer_forward.1} parent=1 // pred_region
      _
    $region17: #{cnn_transformer_forward.1} parent=1 // pred_fallthru
      _
    // Predicated region
    $region18: #{cnn_transformer_forward.1} parent=1 // pred_check
      _
    $region19: #{cnn_transformer_forward.1} parent=1 // pred_check_branch
      %42 = sbr.rel (0) target = $region21
    $region20: #{cnn_transformer_forward.1} parent=1 // pred_region
      _
    $region21: #{cnn_transformer_forward.1} parent=1 // pred_fallthru
      _
    // Predicated region
    $region22: #{cnn_transformer_forward.1} parent=1 // pred_check
      _
    $region23: #{cnn_transformer_forward.1} parent=1 // pred_check_branch
      %44 = sbr.rel (0) target = $region25
    $region24: #{cnn_transformer_forward.1} parent=1 // pred_region
      _
    $region25: #{cnn_transformer_forward.1} parent=1 // pred_fallthru
      _
    // Predicated region
    $region26: #{cnn_transformer_forward.1} parent=1 // pred_check
      _
    $region27: #{cnn_transformer_forward.1} parent=1 // pred_check_branch
      %46 = sbr.rel (0) target = $region29
    $region28: #{cnn_transformer_forward.1} parent=1 // pred_region
      _
    $region29: #{cnn_transformer_forward.1} parent=1 // pred_fallthru
      _
    // Predicated region
    $region30: #{cnn_transformer_forward.1} parent=1 // pred_check
      _
    $region31: #{cnn_transformer_forward.1} parent=1 // pred_check_branch
      %48 = sbr.rel (0) target = $region33
    $region32: #{cnn_transformer_forward.1} parent=1 // pred_region
      _
    $region33: #{cnn_transformer_forward.1} parent=1 // pred_fallthru
      _
    // Predicated region
    $region34: #{cnn_transformer_forward.1} parent=1 // pred_check
      _
    $region35: #{cnn_transformer_forward.1} parent=1 // pred_check_branch
      %50 = sbr.rel (0) target = $region37
    $region36: #{cnn_transformer_forward.1} parent=1 // pred_region
      _
    $region37: #{cnn_transformer_forward.1} parent=1 // pred_fallthru
      _
    // Predicated region
    $region38: #{cnn_transformer_forward.1} parent=1 // pred_check
      _
    $region39: #{cnn_transformer_forward.1} parent=1 // pred_check_branch
      %52 = sbr.rel (0) target = $region41
    $region40: #{cnn_transformer_forward.1} parent=1 // pred_region
      _
    $region41: #{cnn_transformer_forward.1} parent=1 // pred_fallthru
      _
    // Predicated region
    $region42: #{cnn_transformer_forward.1} parent=1 // pred_check
      _
    $region43: #{cnn_transformer_forward.1} parent=1 // pred_check_branch
      %54 = sbr.rel (0) target = $region45
    $region44: #{cnn_transformer_forward.1} parent=1 // pred_region
      _
    $region45: #{cnn_transformer_forward.1} parent=1 // pred_fallthru
      _
    // Predicated region
    $region46: #{cnn_transformer_forward.1} parent=1 // pred_check
      _
    $region47: #{cnn_transformer_forward.1} parent=1 // pred_check_branch
      %56 = sbr.rel (0) target = $region49
    $region48: #{cnn_transformer_forward.1} parent=1 // pred_region
      _
    $region49: #{cnn_transformer_forward.1} parent=1 // pred_fallthru
      _
    // Predicated region
    $region50: #{cnn_transformer_forward.1} parent=1 // pred_check
      _
    $region51: #{cnn_transformer_forward.1} parent=1 // pred_check_branch
      %58 = sbr.rel (0) target = $region53
    $region52: #{cnn_transformer_forward.1} parent=1 // pred_region
      _
    $region53: #{cnn_transformer_forward.1} parent=1 // pred_fallthru
      _
    // Predicated region
    $region54: #{cnn_transformer_forward.1} parent=1 // pred_check
      _
    $region55: #{cnn_transformer_forward.1} parent=1 // pred_check_branch
      %60 = sbr.rel (0) target = $region57
    $region56: #{cnn_transformer_forward.1} parent=1 // pred_region
      _
    $region57: #{cnn_transformer_forward.1} parent=1 // pred_fallthru
      _
    // Predicated region
    $region58: #{cnn_transformer_forward.1} parent=1 // pred_check
      _
    $region59: #{cnn_transformer_forward.1} parent=1 // pred_check_branch
      %62 = sbr.rel (0) target = $region61
    $region60: #{cnn_transformer_forward.1} parent=1 // pred_region
      _
    $region61: #{cnn_transformer_forward.1} parent=1 // pred_fallthru
      _
    // Predicated region
    $region62: #{cnn_transformer_forward.1} parent=1 // pred_check
      _
    $region63: #{cnn_transformer_forward.1} parent=1 // pred_check_branch
      %64 = sbr.rel (0) target = $region65
    $region64: #{cnn_transformer_forward.1} parent=1 // pred_region
      _
    $region65: #{cnn_transformer_forward.1} parent=1 // pred_fallthru
      _
    // Predicated region
    $region66: #{cnn_transformer_forward.1} parent=1 // pred_check
      _
    $region67: #{cnn_transformer_forward.1} parent=1 // pred_check_branch
      %66 = sbr.rel (0) target = $region69
    $region68: #{cnn_transformer_forward.1} parent=1 // pred_region
      _
    $region69: #{cnn_transformer_forward.1} parent=1 // pred_fallthru
      _
    // Predicated region
    $region70: #{cnn_transformer_forward.1} parent=1 // pred_check
      _
    $region71: #{cnn_transformer_forward.1} parent=1 // pred_check_branch
      %68 = sbr.rel (0) target = $region73
    $region72: #{cnn_transformer_forward.1} parent=1 // pred_region
      _
    $region73: #{cnn_transformer_forward.1} parent=1 // pred_fallthru
      _
    // Predicated region
    $region74: #{cnn_transformer_forward.1} parent=1 // pred_check
      _
    $region75: #{cnn_transformer_forward.1} parent=1 // pred_check_branch
      %70 = sbr.rel (0) target = $region77
    $region76: #{cnn_transformer_forward.1} parent=1 // pred_region
      _
    $region77: #{cnn_transformer_forward.1} parent=1 // pred_fallthru
      _
    // Predicated region
    $region78: #{cnn_transformer_forward.1} parent=1 // pred_check
      _
    $region79: #{cnn_transformer_forward.1} parent=1 // pred_check_branch
      %72 = sbr.rel (0) target = $region81
    $region80: #{cnn_transformer_forward.1} parent=1 // pred_region
      _
    $region81: #{cnn_transformer_forward.1} parent=1 // pred_fallthru
      _
    // Predicated region
    $region82: #{cnn_transformer_forward.1} parent=1 // pred_check
      _
    $region83: #{cnn_transformer_forward.1} parent=1 // pred_check_branch
      %74 = sbr.rel (0) target = $region85
    $region84: #{cnn_transformer_forward.1} parent=1 // pred_region
      _
    $region85: #{cnn_transformer_forward.1} parent=1 // pred_fallthru
      _
    // Predicated region
    $region86: #{cnn_transformer_forward.1} parent=1 // pred_check
      _
    $region87: #{cnn_transformer_forward.1} parent=1 // pred_check_branch
      %76 = sbr.rel (0) target = $region89
    $region88: #{cnn_transformer_forward.1} parent=1 // pred_region
      _
    $region89: #{cnn_transformer_forward.1} parent=1 // pred_fallthru
      _
    // Predicated region
    $region90: #{cnn_transformer_forward.1} parent=1 // pred_check
      _
    $region91: #{cnn_transformer_forward.1} parent=1 // pred_check_branch
      %78 = sbr.rel (0) target = $region93
    $region92: #{cnn_transformer_forward.1} parent=1 // pred_region
      _
    $region93: #{cnn_transformer_forward.1} parent=1 // pred_fallthru
      _
    // Predicated region
    $region94: #{cnn_transformer_forward.1} parent=1 // pred_check
      _
    $region95: #{cnn_transformer_forward.1} parent=1 // pred_check_branch
      %80 = sbr.rel (0) target = $region97
    $region96: #{cnn_transformer_forward.1} parent=1 // pred_region
      _
    $region97: #{cnn_transformer_forward.1} parent=1 // pred_fallthru
      _
    // Predicated region
    $region98: #{cnn_transformer_forward.1} parent=1 // pred_check
      _
    $region99: #{cnn_transformer_forward.1} parent=1 // pred_check_branch
      %82 = sbr.rel (0) target = $region101
    $region100: #{cnn_transformer_forward.1} parent=1 // pred_region
      _
    $region101: #{cnn_transformer_forward.1} parent=1 // pred_fallthru
      _
    // Predicated region
    $region102: #{cnn_transformer_forward.1} parent=1 // pred_check
      _
    $region103: #{cnn_transformer_forward.1} parent=1 // pred_check_branch
      %84 = sbr.rel (0) target = $region105
    $region104: #{cnn_transformer_forward.1} parent=1 // pred_region
      _
    $region105: #{cnn_transformer_forward.1} parent=1 // pred_fallthru
      _
    // Predicated region
    $region106: #{cnn_transformer_forward.1} parent=1 // pred_check
      _
    $region107: #{cnn_transformer_forward.1} parent=1 // pred_check_branch
      %86 = sbr.rel (0) target = $region109
    $region108: #{cnn_transformer_forward.1} parent=1 // pred_region
      _
    $region109: #{cnn_transformer_forward.1} parent=1 // pred_fallthru
      _
    %v87 = vld [vmem:[%s0] sm:$0xff]
    %v88 = vld [vmem:[%s0 + $0x8] sm:$0xff]
    %v89 = vld [vmem:[%s0 + $0x10] sm:$0xff]
    %v90 = vld [vmem:[%s0 + $0x18] sm:$0xff]
    %v91 = vld [vmem:[%s0 + $0x20] sm:$0xff]
    %v92 = vld [vmem:[%s0 + $0x28] sm:$0xff]
    %v93 = vld [vmem:[%s0 + $0x30] sm:$0xff]
    %v94 = vld [vmem:[%s0 + $0x38] sm:$0xff]
    %v95 = vld [vmem:[%s0 + $0x40] sm:$0xff]
    %v96 = vld [vmem:[%s0 + $0x48] sm:$0xff]
    %v97 = vld [vmem:[%s0 + $0x50] sm:$0xff]
    %v98 = vld [vmem:[%s0 + $0x58] sm:$0xff]
    %v99 = vld [vmem:[%s0 + $0x60] sm:$0xff]
    %v100 = vld [vmem:[%s0 + $0x68] sm:$0xff]
    %v101 = vld [vmem:[%s0 + $0x70] sm:$0xff]
    %v102 = vld [vmem:[%s0 + $0x78] sm:$0xff]
    %v103 = vld [vmem:[%s0 + $0x80] sm:$0xff]
    %v104 = vld [vmem:[%s0 + $0x88] sm:$0xff]
    %v105 = vld [vmem:[%s0 + $0x90] sm:$0xff]
    %v106 = vld [vmem:[%s0 + $0x98] sm:$0xff]
    %v107 = vld [vmem:[%s0 + $0xa0] sm:$0xff]
    %v108 = vld [vmem:[%s0 + $0xa8] sm:$0xff]
    %v109 = vld [vmem:[%s0 + $0xb0] sm:$0xff]
    %v110 = vld [vmem:[%s0 + $0xb8] sm:$0xff]
    %v111 = vld [vmem:[%s1] sm:$0xff]
    %v112 = vld [vmem:[%s1 + $0x8] sm:$0xff]
    %v113 = vld [vmem:[%s1 + $0x10] sm:$0xff]
    %v114 = vld [vmem:[%s1 + $0x18] sm:$0xff]
    %v115 = vld [vmem:[%s1 + $0x20] sm:$0xff]
    %v116 = vld [vmem:[%s1 + $0x28] sm:$0xff]
    %v117 = vld [vmem:[%s1 + $0x30] sm:$0xff]
    %v118 = vld [vmem:[%s1 + $0x38] sm:$0xff]
    %v119 = vld [vmem:[%s1 + $0x40] sm:$0xff]
    %v120 = vld [vmem:[%s1 + $0x48] sm:$0xff]
    %v121 = vld [vmem:[%s1 + $0x50] sm:$0xff]
    %v122 = vld [vmem:[%s1 + $0x58] sm:$0xff]
    %v123 = vld [vmem:[%s1 + $0x60] sm:$0xff]
    %v124 = vld [vmem:[%s1 + $0x68] sm:$0xff]
    %v125 = vld [vmem:[%s1 + $0x70] sm:$0xff]
    %v126 = vld [vmem:[%s1 + $0x78] sm:$0xff]
    %v127 = vld [vmem:[%s1 + $0x80] sm:$0xff]
    %v128 = vld [vmem:[%s1 + $0x88] sm:$0xff]
    %v129 = vld [vmem:[%s1 + $0x90] sm:$0xff]
    %v130 = vld [vmem:[%s1 + $0x98] sm:$0xff]
    %v131 = vld [vmem:[%s1 + $0xa0] sm:$0xff]
    %v132 = vld [vmem:[%s1 + $0xa8] sm:$0xff]
    %v133 = vld [vmem:[%s1 + $0xb0] sm:$0xff]
    %v134 = vld [vmem:[%s1 + $0xb8] sm:$0xff]
    %v135 = vld [vmem:[%s1 + $0xc0] sm:$0xff]
    %v136 = vld [vmem:[%s1 + $0xc8] sm:$0xff]
    %v137 = vld [vmem:[%s1 + $0xd0] sm:$0xff]
    %v138 = vld [vmem:[%s1 + $0xd8] sm:$0xff]
    %v139 = vld [vmem:[%s1 + $0xe0] sm:$0xff]
    %v140 = vld [vmem:[%s1 + $0xe8] sm:$0xff]
    %v141 = vld [vmem:[%s1 + $0xf0] sm:$0xff]
    %v142 = vld [vmem:[%s1 + $0xf8] sm:$0xff]
    %v143 = vld [vmem:[%s1 + $0x100] sm:$0xff]
    %v144 = vld [vmem:[%s1 + $0x108] sm:$0xff]
    %v145 = vld [vmem:[%s1 + $0x110] sm:$0xff]
    %v146 = vld [vmem:[%s1 + $0x118] sm:$0xff]
    %v147 = vld [vmem:[%s1 + $0x120] sm:$0xff]
    %v148 = vld [vmem:[%s1 + $0x128] sm:$0xff]
    %v149 = vld [vmem:[%s1 + $0x130] sm:$0xff]
    %v150 = vld [vmem:[%s1 + $0x138] sm:$0xff]
    %v151 = vld [vmem:[%s1 + $0x140] sm:$0xff]
    %v152 = vld [vmem:[%s1 + $0x148] sm:$0x3]
    %v153 = vld [vmem:[%s2] sm:$0x1]
    %v155 = vlaneseq
    %v156 = vshrl.u32 %v155, 7
    %v157 = vsub.s32 0, %v156
    %v158 = vrot.slane %v153, %v157
    %vm160 = vcmask 605184
    %v162 = vsel %vm160, %v89, 0
    %v165 = vsel %vm160, %v92, 0
    %v168 = vsel %vm160, %v95, 0
    %v171 = vsel %vm160, %v98, 0
    %v174 = vsel %vm160, %v101, 0
    %v177 = vsel %vm160, %v104, 0
    %v180 = vsel %vm160, %v107, 0
    %v183 = vsel %vm160, %v110, 0
    %vm185 = vcmask 1041408
    %v187 = vsel %vm185, %v152, 0
    %189 = vmatprep.subr.mxu0 0.0
    %190 = vmatpush1.msra.mxu0 %v111
    %191 = vmatprep.subr.mxu0 0.0
    %192 = vmatpush1.msra.mxu0 %v112
    %193 = vmatprep.subr.mxu0 0.0
    %194 = vmatpush1.msra.mxu0 %v113
    %195 = vmatprep.subr.mxu0 0.0
    %196 = vmatpush1.msra.mxu0 %v114
    %197 = vmatprep.subr.mxu0 0.0
    %198 = vmatpush1.msra.mxu0 %v115
    %199 = vmatprep.subr.mxu0 0.0
    %200 = vmatpush1.msra.mxu0 %v116
    %201 = vmatprep.subr.mxu0 0.0
    %202 = vmatpush1.msra.mxu0 %v117
    %203 = vmatprep.subr.mxu0 0.0
    %204 = vmatpush1.msra.mxu0 %v118
    %205 = vmatprep.subr.mxu0 0.0
    %206 = vmatpush1.msra.mxu0 %v119
    %207 = vmatprep.subr.mxu0 0.0
    %208 = vmatpush1.msra.mxu0 %v120
    %209 = vmatprep.subr.mxu0 0.0
    %210 = vmatpush1.msra.mxu0 %v121
    %211 = vmatprep.subr.mxu0 0.0
    %212 = vmatpush1.msra.mxu0 %v122
    %213 = vmatprep.subr.mxu0 0.0
    %214 = vmatpush1.msra.mxu0 %v123
    %215 = vmatprep.subr.mxu0 0.0
    %216 = vmatpush1.msra.mxu0 %v124
    %217 = vmatprep.subr.mxu0 0.0
    %218 = vmatpush1.msra.mxu0 %v125
    %219 = vmatprep.subr.mxu0 0.0
    %220 = vmatpush1.msra.mxu0 %v126
    %221 = vmatprep.subr.mxu0 0.0
    %222 = vmatpush1.msra.mxu0 %v127
    %223 = vmatprep.subr.mxu0 0.0
    %224 = vmatpush1.msra.mxu0 %v128
    %225 = vmatprep.subr.mxu0 0.0
    %226 = vmatpush1.msra.mxu0 %v129
    %227 = vmatprep.subr.mxu0 0.0
    %228 = vmatpush1.msra.mxu0 %v130
    %229 = vmatprep.subr.mxu0 0.0
    %230 = vmatpush1.msra.mxu0 %v131
    %231 = vmatprep.subr.mxu0 0.0
    %232 = vmatpush1.msra.mxu0 %v132
    %233 = vmatprep.subr.mxu0 0.0
    %234 = vmatpush1.msra.mxu0 %v133
    %235 = vmatprep.subr.mxu0 0.0
    %236 = vmatpush1.msra.mxu0 %v134
    %237 = vmatprep.subr.mxu0 0.0
    %238 = vmatpush1.msra.mxu0 %v135
    %239 = vmatprep.subr.mxu0 0.0
    %240 = vmatpush1.msra.mxu0 %v136
    %241 = vmatprep.subr.mxu0 0.0
    %242 = vmatpush1.msra.mxu0 %v137
    %243 = vmatprep.subr.mxu0 0.0
    %244 = vmatpush1.msra.mxu0 %v138
    %245 = vmatprep.subr.mxu0 0.0
    %246 = vmatpush1.msra.mxu0 %v139
    %247 = vmatprep.subr.mxu0 0.0
    %248 = vmatpush1.msra.mxu0 %v140
    %249 = vmatprep.subr.mxu0 0.0
    %250 = vmatpush1.msra.mxu0 %v141
    %251 = vmatprep.subr.mxu0 0.0
    %252 = vmatpush1.msra.mxu0 %v142
    %253 = vmatprep.mubr.f32.mxu0 %v88
    %254 = vmatmul.mubr.f32.gmra.mrb[0].mxu0 %v87
    %v255 = vpop.f32.mrb[0].mxu0
    %v256 = vadd.f32 %v158, %v255
    %v257 = vpop.f32.mrb[0].mxu0
    %258 = vmatprep.mubr.f32.mxu0 %v91
    %259 = vmatmul.mubr.f32.gmra.mrb[0].mxu0 %v90
    %v260 = vpop.f32.mrb[0].mxu0
    %v261 = vadd.f32 %v158, %v260
    %v262 = vpop.f32.mrb[0].mxu0
    %263 = vmatprep.mubr.f32.mxu0 %v94
    %264 = vmatmul.mubr.f32.gmra.mrb[0].mxu0 %v93
    %v265 = vpop.f32.mrb[0].mxu0
    %v266 = vadd.f32 %v158, %v265
    %v267 = vpop.f32.mrb[0].mxu0
    %268 = vmatprep.mubr.f32.mxu0 %v97
    %269 = vmatmul.mubr.f32.gmra.mrb[0].mxu0 %v96
    %v270 = vpop.f32.mrb[0].mxu0
    %v271 = vadd.f32 %v158, %v270
    %v272 = vpop.f32.mrb[0].mxu0
    %273 = vmatprep.mubr.f32.mxu0 %v100
    %274 = vmatmul.mubr.f32.gmra.mrb[0].mxu0 %v99
    %v275 = vpop.f32.mrb[0].mxu0
    %v276 = vadd.f32 %v158, %v275
    %v277 = vpop.f32.mrb[0].mxu0
    %278 = vmatprep.mubr.f32.mxu0 %v103
    %279 = vmatmul.mubr.f32.gmra.mrb[0].mxu0 %v102
    %v280 = vpop.f32.mrb[0].mxu0
    %v281 = vadd.f32 %v158, %v280
    %v282 = vpop.f32.mrb[0].mxu0
    %283 = vmatprep.mubr.f32.mxu0 %v106
    %284 = vmatmul.mubr.f32.gmra.mrb[0].mxu0 %v105
    %v285 = vpop.f32.mrb[0].mxu0
    %v286 = vadd.f32 %v158, %v285
    %v287 = vpop.f32.mrb[0].mxu0
    %288 = vmatprep.mubr.f32.mxu0 %v109
    %289 = vmatmul.mubr.f32.gmra.mrb[0].mxu0 %v108
    %v290 = vpop.f32.mrb[0].mxu0
    %v291 = vadd.f32 %v158, %v290
    %v292 = vpop.f32.mrb[0].mxu0
    %293 = vdwg.mxu0
    %294 = vmatprep.subr.mxu0 0.0
    %295 = vmatpush1.msra.mxu0 %v143
    %296 = vmatprep.subr.mxu0 0.0
    %297 = vmatpush1.msra.mxu0 %v144
    %298 = vmatprep.subr.mxu0 0.0
    %299 = vmatpush1.msra.mxu0 %v145
    %300 = vmatprep.subr.mxu0 0.0
    %301 = vmatpush1.msra.mxu0 %v146
    %302 = vmatprep.subr.mxu0 0.0
    %303 = vmatpush1.msra.mxu0 %v147
    %304 = vmatprep.subr.mxu0 0.0
    %305 = vmatpush1.msra.mxu0 %v148
    %306 = vmatprep.subr.mxu0 0.0
    %307 = vmatpush1.msra.mxu0 %v149
    %308 = vmatprep.subr.mxu0 0.0
    %309 = vmatpush1.msra.mxu0 %v150
    %310 = vmatprep.subr.mxu0 0.0
    %311 = vmatpush1.msra.mxu0 %v151
    %312 = vmatprep.subr.mxu0 0.0
    %313 = vmatpush1.msra.mxu0 %v187
    %314 = vmatprep.subr.mxu0 0.0
    %315 = vmatpush1.msra.mxu0 0.0
    %316 = vmatprep.subr.mxu0 0.0
    %317 = vmatpush1.msra.mxu0 0.0
    %318 = vmatprep.subr.mxu0 0.0
    %319 = vmatpush1.msra.mxu0 0.0
    %320 = vmatprep.subr.mxu0 0.0
    %321 = vmatpush1.msra.mxu0 0.0
    %322 = vmatprep.subr.mxu0 0.0
    %323 = vmatpush1.msra.mxu0 0.0
    %324 = vmatprep.subr.mxu0 0.0
    %325 = vmatpush1.msra.mxu0 0.0
    %326 = vmatprep.subr.mxu0 0.0
    %327 = vmatpush1.msra.mxu0 0.0
    %328 = vmatprep.subr.mxu0 0.0
    %329 = vmatpush1.msra.mxu0 0.0
    %330 = vmatprep.subr.mxu0 0.0
    %331 = vmatpush1.msra.mxu0 0.0
    %332 = vmatprep.subr.mxu0 0.0
    %333 = vmatpush1.msra.mxu0 0.0
    %334 = vmatprep.subr.mxu0 0.0
    %335 = vmatpush1.msra.mxu0 0.0
    %336 = vmatprep.subr.mxu0 0.0
    %337 = vmatpush1.msra.mxu0 0.0
    %338 = vmatprep.subr.mxu0 0.0
    %339 = vmatpush1.msra.mxu0 0.0
    %340 = vmatprep.subr.mxu0 0.0
    %341 = vmatpush1.msra.mxu0 0.0
    %342 = vmatprep.subr.mxu0 0.0
    %343 = vmatpush1.msra.mxu0 0.0
    %344 = vmatprep.subr.mxu0 0.0
    %345 = vmatpush1.msra.mxu0 0.0
    %346 = vmatprep.subr.mxu0 0.0
    %347 = vmatpush1.msra.mxu0 0.0
    %348 = vmatprep.subr.mxu0 0.0
    %349 = vmatpush1.msra.mxu0 0.0
    %350 = vmatprep.subr.mxu0 0.0
    %351 = vmatpush1.msra.mxu0 0.0
    %352 = vmatprep.subr.mxu0 0.0
    %353 = vmatpush1.msra.mxu0 0.0
    %354 = vmatprep.subr.mxu0 0.0
    %355 = vmatpush1.msra.mxu0 0.0
    %356 = vmatprep.subr.mxu0 0.0
    %357 = vmatpush1.msra.mxu0 0.0
    %358 = vmatprep.mubr.f32.mxu0 0.0
    %359 = vmatmul.mubr.f32.gmra.mrb[0].mxu0 %v162
    %v360 = vpop.f32.mrb[0].mxu0
    %v361 = vadd.f32 %v256, %v360
    %v362 = vpop.f32.mrb[0].mxu0
    %363 = vmatprep.mubr.f32.mxu0 0.0
    %364 = vmatmul.mubr.f32.gmra.mrb[0].mxu0 %v165
    %v365 = vpop.f32.mrb[0].mxu0
    %v366 = vadd.f32 %v261, %v365
    %v367 = vpop.f32.mrb[0].mxu0
    %368 = vmatprep.mubr.f32.mxu0 0.0
    %369 = vmatmul.mubr.f32.gmra.mrb[0].mxu0 %v168
    %v370 = vpop.f32.mrb[0].mxu0
    %v371 = vadd.f32 %v266, %v370
    %v372 = vpop.f32.mrb[0].mxu0
    %373 = vmatprep.mubr.f32.mxu0 0.0
    %374 = vmatmul.mubr.f32.gmra.mrb[0].mxu0 %v171
    %v375 = vpop.f32.mrb[0].mxu0
    %v376 = vadd.f32 %v271, %v375
    %v377 = vpop.f32.mrb[0].mxu0
    %378 = vmatprep.mubr.f32.mxu0 0.0
    %379 = vmatmul.mubr.f32.gmra.mrb[0].mxu0 %v174
    %v380 = vpop.f32.mrb[0].mxu0
    %v381 = vadd.f32 %v276, %v380
    %v382 = vpop.f32.mrb[0].mxu0
    %383 = vmatprep.mubr.f32.mxu0 0.0
    %384 = vmatmul.mubr.f32.gmra.mrb[0].mxu0 %v177
    %v385 = vpop.f32.mrb[0].mxu0
    %v386 = vadd.f32 %v281, %v385
    %v387 = vpop.f32.mrb[0].mxu0
    %388 = vmatprep.mubr.f32.mxu0 0.0
    %389 = vmatmul.mubr.f32.gmra.mrb[0].mxu0 %v180
    %v390 = vpop.f32.mrb[0].mxu0
    %v391 = vadd.f32 %v286, %v390
    %v392 = vpop.f32.mrb[0].mxu0
    %393 = vmatprep.mubr.f32.mxu0 0.0
    %394 = vmatmul.mubr.f32.gmra.mrb[0].mxu0 %v183
    %v395 = vpop.f32.mrb[0].mxu0
    %v396 = vadd.f32 %v291, %v395
    %v397 = vpop.f32.mrb[0].mxu0
    %398 = vdwg.mxu0
    %v399 = vmax.f32 %v361, 0.0
    %v400 = vmax.f32 %v366, 0.0
    %v401 = vmax.f32 %v371, 0.0
    %v402 = vmax.f32 %v376, 0.0
    %v403 = vmax.f32 %v381, 0.0
    %v404 = vmax.f32 %v386, 0.0
    %v405 = vmax.f32 %v391, 0.0
    %v406 = vmax.f32 %v396, 0.0
    %v407 = vld [vmem:[%s3] sm:$0x1]
    %v409 = vlaneseq
    %v410 = vshrl.u32 %v409, 7
    %v411 = vsub.s32 0, %v410
    %v412 = vrot.slane %v407, %v411
    %v414 = vmul.f32 %v399, %v412
    %v415 = vmul.f32 %v400, %v412
    %v416 = vmul.f32 %v401, %v412
    %v417 = vmul.f32 %v402, %v412
    %v418 = vmul.f32 %v403, %v412
    %v419 = vmul.f32 %v404, %v412
    %v420 = vmul.f32 %v405, %v412
    %v421 = vmul.f32 %v406, %v412
    %v422 = vld [vmem:[%s4] sm:$0x1]
    %v424 = vlaneseq
    %v425 = vshrl.u32 %v424, 7
    %v426 = vsub.s32 0, %v425
    %v427 = vrot.slane %v422, %v426
    %v429 = vadd.f32 %v414, %v427
    %v430 = vadd.f32 %v415, %v427
    %v431 = vadd.f32 %v416, %v427
    %v432 = vadd.f32 %v417, %v427
    %v433 = vadd.f32 %v418, %v427
    %v434 = vadd.f32 %v419, %v427
    %v435 = vadd.f32 %v420, %v427
    %v436 = vadd.f32 %v421, %v427
    %v437 = vmax.f32 %v429, %v433
    %v438 = vmax.f32 %v430, %v434
    %v439 = vmax.f32 %v431, %v435
    %v440 = vmax.f32 %v432, %v436
    %v441 = vld [vmem:[%s5] sm:$0xff]
    %v442 = vld [vmem:[%s5 + $0x8] sm:$0xff]
    %v443 = vld [vmem:[%s5 + $0x10] sm:$0xff]
    %v444 = vld [vmem:[%s5 + $0x18] sm:$0xff]
    %v445 = vadd.f32 %v437, %v441
    %v446 = vadd.f32 %v438, %v442
    %v447 = vadd.f32 %v439, %v443
    %v448 = vadd.f32 %v440, %v444
    %v449 = vld [vmem:[%s22] sm:$0xff]
    %v450 = vld [vmem:[%s22 + $0x8] sm:$0xff]
    %v451 = vld [vmem:[%s22 + $0x10] sm:$0xff]
    %v452 = vld [vmem:[%s22 + $0x18] sm:$0xff]
    %v453 = vld [vmem:[%s22 + $0x20] sm:$0xff]
    %v454 = vld [vmem:[%s22 + $0x28] sm:$0xff]
    %v455 = vld [vmem:[%s22 + $0x30] sm:$0xff]
    %v456 = vld [vmem:[%s22 + $0x38] sm:$0xff]
    %v457 = vld [vmem:[%s22 + $0x40] sm:$0xff]
    %v458 = vld [vmem:[%s22 + $0x48] sm:$0xff]
    %v459 = vld [vmem:[%s22 + $0x50] sm:$0xff]
    %v460 = vld [vmem:[%s22 + $0x58] sm:$0xff]
    %v461 = vld [vmem:[%s22 + $0x60] sm:$0xff]
    %v462 = vld [vmem:[%s22 + $0x68] sm:$0xff]
    %v463 = vld [vmem:[%s22 + $0x70] sm:$0xff]
    %v464 = vld [vmem:[%s22 + $0x78] sm:$0xff]
    %v465 = vld [vmem:[%s22 + $0x80] sm:$0xff]
    %v466 = vld [vmem:[%s22 + $0x88] sm:$0xff]
    %v467 = vld [vmem:[%s22 + $0x90] sm:$0xff]
    %v468 = vld [vmem:[%s22 + $0x98] sm:$0xff]
    %v469 = vld [vmem:[%s22 + $0xa0] sm:$0xff]
    %v470 = vld [vmem:[%s22 + $0xa8] sm:$0xff]
    %v471 = vld [vmem:[%s22 + $0xb0] sm:$0xff]
    %v472 = vld [vmem:[%s22 + $0xb8] sm:$0xff]
    %v473 = vld [vmem:[%s22 + $0xc0] sm:$0xff]
    %v474 = vld [vmem:[%s22 + $0xc8] sm:$0xff]
    %v475 = vld [vmem:[%s22 + $0xd0] sm:$0xff]
    %v476 = vld [vmem:[%s22 + $0xd8] sm:$0xff]
    %v477 = vld [vmem:[%s22 + $0xe0] sm:$0xff]
    %v478 = vld [vmem:[%s22 + $0xe8] sm:$0xff]
    %v479 = vld [vmem:[%s22 + $0xf0] sm:$0xff]
    %v480 = vld [vmem:[%s22 + $0xf8] sm:$0xff]
    %v481 = vld [vmem:[%s23] sm:$0xff]
    %v482 = vld [vmem:[%s23 + $0x8] sm:$0xff]
    %v483 = vld [vmem:[%s23 + $0x10] sm:$0xff]
    %v484 = vld [vmem:[%s23 + $0x18] sm:$0xff]
    %v485 = vld [vmem:[%s23 + $0x20] sm:$0xff]
    %v486 = vld [vmem:[%s23 + $0x28] sm:$0xff]
    %v487 = vld [vmem:[%s23 + $0x30] sm:$0xff]
    %v488 = vld [vmem:[%s23 + $0x38] sm:$0xff]
    %v489 = vld [vmem:[%s6] sm:$0xff]
    %v490 = vld [vmem:[%s6 + $0x8] sm:$0xff]
    %v491 = vld [vmem:[%s6 + $0x10] sm:$0xff]
    %v492 = vld [vmem:[%s6 + $0x18] sm:$0xff]
    %v493 = vld [vmem:[%s6 + $0x20] sm:$0xff]
    %v494 = vld [vmem:[%s7] sm:$0x1]
    %v496 = vlaneseq
    %v497 = vshrl.u32 %v496, 7
    %v498 = vsub.s32 0, %v497
    %v499 = vrot.slane %v494, %v498
    %vm501 = vcmask 326656
    %v503 = vsel %vm501, %v445, 0
    %v506 = vsel %vm501, %v446, 0
    %v509 = vsel %vm501, %v447, 0
    %v512 = vsel %vm501, %v448, 0
    %514 = vmatprep.subr.mxu0 0.0
    %515 = vmatpush1.msra.mxu0 %v489
    %516 = vmatprep.subr.mxu0 0.0
    %517 = vmatpush1.msra.mxu0 %v490
    %518 = vmatprep.subr.mxu0 0.0
    %519 = vmatpush1.msra.mxu0 %v491
    %520 = vmatprep.subr.mxu0 0.0
    %521 = vmatpush1.msra.mxu0 %v492
    %522 = vmatprep.subr.mxu0 0.0
    %523 = vmatpush1.msra.mxu0 %v493
    %524 = vmatprep.subr.mxu0 0.0
    %525 = vmatpush1.msra.mxu0 0.0
    %526 = vmatprep.subr.mxu0 0.0
    %527 = vmatpush1.msra.mxu0 0.0
    %528 = vmatprep.subr.mxu0 0.0
    %529 = vmatpush1.msra.mxu0 0.0
    %530 = vmatprep.subr.mxu0 0.0
    %531 = vmatpush1.msra.mxu0 0.0
    %532 = vmatprep.subr.mxu0 0.0
    %533 = vmatpush1.msra.mxu0 0.0
    %534 = vmatprep.subr.mxu0 0.0
    %535 = vmatpush1.msra.mxu0 0.0
    %536 = vmatprep.subr.mxu0 0.0
    %537 = vmatpush1.msra.mxu0 0.0
    %538 = vmatprep.subr.mxu0 0.0
    %539 = vmatpush1.msra.mxu0 0.0
    %540 = vmatprep.subr.mxu0 0.0
    %541 = vmatpush1.msra.mxu0 0.0
    %542 = vmatprep.subr.mxu0 0.0
    %543 = vmatpush1.msra.mxu0 0.0
    %544 = vmatprep.subr.mxu0 0.0
    %545 = vmatpush1.msra.mxu0 0.0
    %546 = vmatprep.subr.mxu0 0.0
    %547 = vmatpush1.msra.mxu0 0.0
    %548 = vmatprep.subr.mxu0 0.0
    %549 = vmatpush1.msra.mxu0 0.0
    %550 = vmatprep.subr.mxu0 0.0
    %551 = vmatpush1.msra.mxu0 0.0
    %552 = vmatprep.subr.mxu0 0.0
    %553 = vmatpush1.msra.mxu0 0.0
    %554 = vmatprep.subr.mxu0 0.0
    %555 = vmatpush1.msra.mxu0 0.0
    %556 = vmatprep.subr.mxu0 0.0
    %557 = vmatpush1.msra.mxu0 0.0
    %558 = vmatprep.subr.mxu0 0.0
    %559 = vmatpush1.msra.mxu0 0.0
    %560 = vmatprep.subr.mxu0 0.0
    %561 = vmatpush1.msra.mxu0 0.0
    %562 = vmatprep.subr.mxu0 0.0
    %563 = vmatpush1.msra.mxu0 0.0
    %564 = vmatprep.subr.mxu0 0.0
    %565 = vmatpush1.msra.mxu0 0.0
    %566 = vmatprep.subr.mxu0 0.0
    %567 = vmatpush1.msra.mxu0 0.0
    %568 = vmatprep.subr.mxu0 0.0
    %569 = vmatpush1.msra.mxu0 0.0
    %570 = vmatprep.subr.mxu0 0.0
    %571 = vmatpush1.msra.mxu0 0.0
    %572 = vmatprep.subr.mxu0 0.0
    %573 = vmatpush1.msra.mxu0 0.0
    %574 = vmatprep.subr.mxu0 0.0
    %575 = vmatpush1.msra.mxu0 0.0
    %576 = vmatprep.subr.mxu0 0.0
    %577 = vmatpush1.msra.mxu0 0.0
    %578 = vmatprep.mubr.f32.mxu0 0.0
    %579 = vmatmul.mubr.f32.gmra.mrb[0].mxu0 %v503
    %v580 = vpop.f32.mrb[0].mxu0
    %v581 = vadd.f32 %v499, %v580
    %v582 = vpop.f32.mrb[0].mxu0
    %583 = vmatprep.mubr.f32.mxu0 0.0
    %584 = vmatmul.mubr.f32.gmra.mrb[0].mxu0 %v506
    %v585 = vpop.f32.mrb[0].mxu0
    %v586 = vadd.f32 %v499, %v585
    %v587 = vpop.f32.mrb[0].mxu0
    %588 = vmatprep.mubr.f32.mxu0 0.0
    %589 = vmatmul.mubr.f32.gmra.mrb[0].mxu0 %v509
    %v590 = vpop.f32.mrb[0].mxu0
    %v591 = vadd.f32 %v499, %v590
    %v592 = vpop.f32.mrb[0].mxu0
    %593 = vmatprep.mubr.f32.mxu0 0.0
    %594 = vmatmul.mubr.f32.gmra.mrb[0].mxu0 %v512
    %v595 = vpop.f32.mrb[0].mxu0
    %v596 = vadd.f32 %v499, %v595
    %v597 = vpop.f32.mrb[0].mxu0
    %598 = vdwg.mxu0
    %v599 = vld [vmem:[%s8] sm:$0xff]
    %v600 = vld [vmem:[%s8 + $0x8] sm:$0xff]
    %v601 = vld [vmem:[%s8 + $0x10] sm:$0xff]
    %v602 = vld [vmem:[%s8 + $0x18] sm:$0xff]
    %v603 = vld [vmem:[%s8 + $0x20] sm:$0xff]
    %v604 = vld [vmem:[%s9] sm:$0x1]
    %v606 = vlaneseq
    %v607 = vshrl.u32 %v606, 7
    %v608 = vsub.s32 0, %v607
    %v609 = vrot.slane %v604, %v608
    %611 = vmatprep.subr.mxu0 0.0
    %612 = vmatpush1.msra.mxu0 %v599
    %613 = vmatprep.subr.mxu0 0.0
    %614 = vmatpush1.msra.mxu0 %v600
    %615 = vmatprep.subr.mxu0 0.0
    %616 = vmatpush1.msra.mxu0 %v601
    %617 = vmatprep.subr.mxu0 0.0
    %618 = vmatpush1.msra.mxu0 %v602
    %619 = vmatprep.subr.mxu0 0.0
    %620 = vmatpush1.msra.mxu0 %v603
    %621 = vmatprep.subr.mxu0 0.0
    %622 = vmatpush1.msra.mxu0 0.0
    %623 = vmatprep.subr.mxu0 0.0
    %624 = vmatpush1.msra.mxu0 0.0
    %625 = vmatprep.subr.mxu0 0.0
    %626 = vmatpush1.msra.mxu0 0.0
    %627 = vmatprep.subr.mxu0 0.0
    %628 = vmatpush1.msra.mxu0 0.0
    %629 = vmatprep.subr.mxu0 0.0
    %630 = vmatpush1.msra.mxu0 0.0
    %631 = vmatprep.subr.mxu0 0.0
    %632 = vmatpush1.msra.mxu0 0.0
    %633 = vmatprep.subr.mxu0 0.0
    %634 = vmatpush1.msra.mxu0 0.0
    %635 = vmatprep.subr.mxu0 0.0
    %636 = vmatpush1.msra.mxu0 0.0
    %637 = vmatprep.subr.mxu0 0.0
    %638 = vmatpush1.msra.mxu0 0.0
    %639 = vmatprep.subr.mxu0 0.0
    %640 = vmatpush1.msra.mxu0 0.0
    %641 = vmatprep.subr.mxu0 0.0
    %642 = vmatpush1.msra.mxu0 0.0
    %643 = vmatprep.subr.mxu0 0.0
    %644 = vmatpush1.msra.mxu0 0.0
    %645 = vmatprep.subr.mxu0 0.0
    %646 = vmatpush1.msra.mxu0 0.0
    %647 = vmatprep.subr.mxu0 0.0
    %648 = vmatpush1.msra.mxu0 0.0
    %649 = vmatprep.subr.mxu0 0.0
    %650 = vmatpush1.msra.mxu0 0.0
    %651 = vmatprep.subr.mxu0 0.0
    %652 = vmatpush1.msra.mxu0 0.0
    %653 = vmatprep.subr.mxu0 0.0
    %654 = vmatpush1.msra.mxu0 0.0
    %655 = vmatprep.subr.mxu0 0.0
    %656 = vmatpush1.msra.mxu0 0.0
    %657 = vmatprep.subr.mxu0 0.0
    %658 = vmatpush1.msra.mxu0 0.0
    %659 = vmatprep.subr.mxu0 0.0
    %660 = vmatpush1.msra.mxu0 0.0
    %661 = vmatprep.subr.mxu0 0.0
    %662 = vmatpush1.msra.mxu0 0.0
    %663 = vmatprep.subr.mxu0 0.0
    %664 = vmatpush1.msra.mxu0 0.0
    %665 = vmatprep.subr.mxu0 0.0
    %666 = vmatpush1.msra.mxu0 0.0
    %667 = vmatprep.subr.mxu0 0.0
    %668 = vmatpush1.msra.mxu0 0.0
    %669 = vmatprep.subr.mxu0 0.0
    %670 = vmatpush1.msra.mxu0 0.0
    %671 = vmatprep.subr.mxu0 0.0
    %672 = vmatpush1.msra.mxu0 0.0
    %673 = vmatprep.subr.mxu0 0.0
    %674 = vmatpush1.msra.mxu0 0.0
    %675 = vmatprep.mubr.f32.mxu0 0.0
    %676 = vmatmul.mubr.f32.gmra.mrb[0].mxu0 %v503
    %v677 = vpop.f32.mrb[0].mxu0
    %v678 = vadd.f32 %v609, %v677
    %v679 = vpop.f32.mrb[0].mxu0
    %680 = vmatprep.mubr.f32.mxu0 0.0
    %681 = vmatmul.mubr.f32.gmra.mrb[0].mxu0 %v506
    %v682 = vpop.f32.mrb[0].mxu0
    %v683 = vadd.f32 %v609, %v682
    %v684 = vpop.f32.mrb[0].mxu0
    %685 = vmatprep.mubr.f32.mxu0 0.0
    %686 = vmatmul.mubr.f32.gmra.mrb[0].mxu0 %v509
    %v687 = vpop.f32.mrb[0].mxu0
    %v688 = vadd.f32 %v609, %v687
    %v689 = vpop.f32.mrb[0].mxu0
    %690 = vmatprep.mubr.f32.mxu0 0.0
    %691 = vmatmul.mubr.f32.gmra.mrb[0].mxu0 %v512
    %v692 = vpop.f32.mrb[0].mxu0
    %v693 = vadd.f32 %v609, %v692
    %v694 = vpop.f32.mrb[0].mxu0
    %695 = vdwg.mxu0
    %v696 = vld [vmem:[%s10] sm:$0xff]
    %v697 = vld [vmem:[%s10 + $0x8] sm:$0xff]
    %v698 = vld [vmem:[%s10 + $0x10] sm:$0xff]
    %v699 = vld [vmem:[%s10 + $0x18] sm:$0xff]
    %v700 = vld [vmem:[%s10 + $0x20] sm:$0xff]
    %v701 = vld [vmem:[%s11] sm:$0x1]
    %v703 = vlaneseq
    %v704 = vshrl.u32 %v703, 7
    %v705 = vsub.s32 0, %v704
    %v706 = vrot.slane %v701, %v705
    %708 = vmatprep.subr.mxu0 0.0
    %709 = vmatpush1.msra.mxu0 %v696
    %710 = vmatprep.subr.mxu0 0.0
    %711 = vmatpush1.msra.mxu0 %v697
    %712 = vmatprep.subr.mxu0 0.0
    %713 = vmatpush1.msra.mxu0 %v698
    %714 = vmatprep.subr.mxu0 0.0
    %715 = vmatpush1.msra.mxu0 %v699
    %716 = vmatprep.subr.mxu0 0.0
    %717 = vmatpush1.msra.mxu0 %v700
    %718 = vmatprep.subr.mxu0 0.0
    %719 = vmatpush1.msra.mxu0 0.0
    %720 = vmatprep.subr.mxu0 0.0
    %721 = vmatpush1.msra.mxu0 0.0
    %722 = vmatprep.subr.mxu0 0.0
    %723 = vmatpush1.msra.mxu0 0.0
    %724 = vmatprep.subr.mxu0 0.0
    %725 = vmatpush1.msra.mxu0 0.0
    %726 = vmatprep.subr.mxu0 0.0
    %727 = vmatpush1.msra.mxu0 0.0
    %728 = vmatprep.subr.mxu0 0.0
    %729 = vmatpush1.msra.mxu0 0.0
    %730 = vmatprep.subr.mxu0 0.0
    %731 = vmatpush1.msra.mxu0 0.0
    %732 = vmatprep.subr.mxu0 0.0
    %733 = vmatpush1.msra.mxu0 0.0
    %734 = vmatprep.subr.mxu0 0.0
    %735 = vmatpush1.msra.mxu0 0.0
    %736 = vmatprep.subr.mxu0 0.0
    %737 = vmatpush1.msra.mxu0 0.0
    %738 = vmatprep.subr.mxu0 0.0
    %739 = vmatpush1.msra.mxu0 0.0
    %740 = vmatprep.subr.mxu0 0.0
    %741 = vmatpush1.msra.mxu0 0.0
    %742 = vmatprep.subr.mxu0 0.0
    %743 = vmatpush1.msra.mxu0 0.0
    %744 = vmatprep.subr.mxu0 0.0
    %745 = vmatpush1.msra.mxu0 0.0
    %746 = vmatprep.subr.mxu0 0.0
    %747 = vmatpush1.msra.mxu0 0.0
    %748 = vmatprep.subr.mxu0 0.0
    %749 = vmatpush1.msra.mxu0 0.0
    %750 = vmatprep.subr.mxu0 0.0
    %751 = vmatpush1.msra.mxu0 0.0
    %752 = vmatprep.subr.mxu0 0.0
    %753 = vmatpush1.msra.mxu0 0.0
    %754 = vmatprep.subr.mxu0 0.0
    %755 = vmatpush1.msra.mxu0 0.0
    %756 = vmatprep.subr.mxu0 0.0
    %757 = vmatpush1.msra.mxu0 0.0
    %758 = vmatprep.subr.mxu0 0.0
    %759 = vmatpush1.msra.mxu0 0.0
    %760 = vmatprep.subr.mxu0 0.0
    %761 = vmatpush1.msra.mxu0 0.0
    %762 = vmatprep.subr.mxu0 0.0
    %763 = vmatpush1.msra.mxu0 0.0
    %764 = vmatprep.subr.mxu0 0.0
    %765 = vmatpush1.msra.mxu0 0.0
    %766 = vmatprep.subr.mxu0 0.0
    %767 = vmatpush1.msra.mxu0 0.0
    %768 = vmatprep.subr.mxu0 0.0
    %769 = vmatpush1.msra.mxu0 0.0
    %770 = vmatprep.subr.mxu0 0.0
    %771 = vmatpush1.msra.mxu0 0.0
    %772 = vmatprep.mubr.f32.mxu0 0.0
    %773 = vmatmul.mubr.f32.gmra.mrb[0].mxu0 %v503
    %v774 = vpop.f32.mrb[0].mxu0
    %v775 = vadd.f32 %v706, %v774
    %v776 = vpop.f32.mrb[0].mxu0
    %777 = vmatprep.mubr.f32.mxu0 0.0
    %778 = vmatmul.mubr.f32.gmra.mrb[0].mxu0 %v506
    %v779 = vpop.f32.mrb[0].mxu0
    %v780 = vadd.f32 %v706, %v779
    %v781 = vpop.f32.mrb[0].mxu0
    %782 = vmatprep.mubr.f32.mxu0 0.0
    %783 = vmatmul.mubr.f32.gmra.mrb[0].mxu0 %v509
    %v784 = vpop.f32.mrb[0].mxu0
    %v785 = vadd.f32 %v706, %v784
    %v786 = vpop.f32.mrb[0].mxu0
    %787 = vmatprep.mubr.f32.mxu0 0.0
    %788 = vmatmul.mubr.f32.gmra.mrb[0].mxu0 %v512
    %v789 = vpop.f32.mrb[0].mxu0
    %v790 = vadd.f32 %v706, %v789
    %v791 = vpop.f32.mrb[0].mxu0
    %792 = vdwg.mxu0
    %v793 = vmul.f32 %v678, %v449
    %v794 = vmul.f32 %v683, %v450
    %v795 = vmul.f32 %v688, %v451
    %v796 = vmul.f32 %v693, %v452
    %v797 = vmul.f32 %v678, %v453
    %v798 = vmul.f32 %v683, %v454
    %v799 = vmul.f32 %v688, %v455
    %v800 = vmul.f32 %v693, %v456
    %v801 = vmul.f32 %v678, %v457
    %v802 = vmul.f32 %v683, %v458
    %v803 = vmul.f32 %v688, %v459
    %v804 = vmul.f32 %v693, %v460
    %v805 = vmul.f32 %v678, %v461
    %v806 = vmul.f32 %v683, %v462
    %v807 = vmul.f32 %v688, %v463
    %v808 = vmul.f32 %v693, %v464
    %v809 = vmul.f32 %v678, %v465
    %v810 = vmul.f32 %v683, %v466
    %v811 = vmul.f32 %v688, %v467
    %v812 = vmul.f32 %v693, %v468
    %v813 = vmul.f32 %v678, %v469
    %v814 = vmul.f32 %v683, %v470
    %v815 = vmul.f32 %v688, %v471
    %v816 = vmul.f32 %v693, %v472
    %v817 = vmul.f32 %v678, %v473
    %v818 = vmul.f32 %v683, %v474
    %v819 = vmul.f32 %v688, %v475
    %v820 = vmul.f32 %v693, %v476
    %v821 = vmul.f32 %v678, %v477
    %v822 = vmul.f32 %v683, %v478
    %v823 = vmul.f32 %v688, %v479
    %v824 = vmul.f32 %v693, %v480
    %v825 = vmul.f32 %v775, %v449
    %v826 = vmul.f32 %v780, %v450
    %v827 = vmul.f32 %v785, %v451
    %v828 = vmul.f32 %v790, %v452
    %v829 = vmul.f32 %v775, %v453
    %v830 = vmul.f32 %v780, %v454
    %v831 = vmul.f32 %v785, %v455
    %v832 = vmul.f32 %v790, %v456
    %v833 = vmul.f32 %v775, %v457
    %v834 = vmul.f32 %v780, %v458
    %v835 = vmul.f32 %v785, %v459
    %v836 = vmul.f32 %v790, %v460
    %v837 = vmul.f32 %v775, %v461
    %v838 = vmul.f32 %v780, %v462
    %v839 = vmul.f32 %v785, %v463
    %v840 = vmul.f32 %v790, %v464
    %v841 = vmul.f32 %v775, %v465
    %v842 = vmul.f32 %v780, %v466
    %v843 = vmul.f32 %v785, %v467
    %v844 = vmul.f32 %v790, %v468
    %v845 = vmul.f32 %v775, %v469
    %v846 = vmul.f32 %v780, %v470
    %v847 = vmul.f32 %v785, %v471
    %v848 = vmul.f32 %v790, %v472
    %v849 = vmul.f32 %v775, %v473
    %v850 = vmul.f32 %v780, %v474
    %v851 = vmul.f32 %v785, %v475
    %v852 = vmul.f32 %v790, %v476
    %v853 = vmul.f32 %v775, %v477
    %v854 = vmul.f32 %v780, %v478
    %v855 = vmul.f32 %v785, %v479
    %v856 = vmul.f32 %v790, %v480
    %v858 = vsel %vm501, %v581, 0
    %v861 = vsel %vm501, %v586, 0
    %v864 = vsel %vm501, %v591, 0
    %v867 = vsel %vm501, %v596, 0
    %v870 = vsel %vm501, %v793, 0
    %v873 = vsel %vm501, %v794, 0
    %v876 = vsel %vm501, %v795, 0
    %v879 = vsel %vm501, %v796, 0
    %v882 = vsel %vm501, %v797, 0
    %v885 = vsel %vm501, %v798, 0
    %v888 = vsel %vm501, %v799, 0
    %v891 = vsel %vm501, %v800, 0
    %v894 = vsel %vm501, %v801, 0
    %v897 = vsel %vm501, %v802, 0
    %v900 = vsel %vm501, %v803, 0
    %v903 = vsel %vm501, %v804, 0
    %v906 = vsel %vm501, %v805, 0
    %v909 = vsel %vm501, %v806, 0
    %v912 = vsel %vm501, %v807, 0
    %v915 = vsel %vm501, %v808, 0
    %v918 = vsel %vm501, %v809, 0
    %v921 = vsel %vm501, %v810, 0
    %v924 = vsel %vm501, %v811, 0
    %v927 = vsel %vm501, %v812, 0
    %v930 = vsel %vm501, %v813, 0
    %v933 = vsel %vm501, %v814, 0
    %v936 = vsel %vm501, %v815, 0
    %v939 = vsel %vm501, %v816, 0
    %v942 = vsel %vm501, %v817, 0
    %v945 = vsel %vm501, %v818, 0
    %v948 = vsel %vm501, %v819, 0
    %v951 = vsel %vm501, %v820, 0
    %v954 = vsel %vm501, %v821, 0
    %v957 = vsel %vm501, %v822, 0
    %v960 = vsel %vm501, %v823, 0
    %v963 = vsel %vm501, %v824, 0
    %965 = vmatprep.subr.mxu0 0.0
    %966 = vmatpush1.xpose.msra.mxu0 %v870
    %967 = vmatprep.subr.mxu0 0.0
    %968 = vmatpush1.xpose.msra.mxu0 %v873
    %969 = vmatprep.subr.mxu0 0.0
    %970 = vmatpush1.xpose.msra.mxu0 %v876
    %971 = vmatprep.subr.mxu0 0.0
    %972 = vmatpush1.xpose.msra.mxu0 %v879
    %973 = vmatprep.subr.mxu0 0.0
    %974 = vmatpush1.xpose.msra.mxu0 %v882
    %975 = vmatprep.subr.mxu0 0.0
    %976 = vmatpush1.xpose.msra.mxu0 %v885
    %977 = vmatprep.subr.mxu0 0.0
    %978 = vmatpush1.xpose.msra.mxu0 %v888
    %979 = vmatprep.subr.mxu0 0.0
    %980 = vmatpush1.xpose.msra.mxu0 %v891
    %981 = vmatprep.subr.mxu0 0.0
    %982 = vmatpush1.xpose.msra.mxu0 %v894
    %983 = vmatprep.subr.mxu0 0.0
    %984 = vmatpush1.xpose.msra.mxu0 %v897
    %985 = vmatprep.subr.mxu0 0.0
    %986 = vmatpush1.xpose.msra.mxu0 %v900
    %987 = vmatprep.subr.mxu0 0.0
    %988 = vmatpush1.xpose.msra.mxu0 %v903
    %989 = vmatprep.subr.mxu0 0.0
    %990 = vmatpush1.xpose.msra.mxu0 %v906
    %991 = vmatprep.subr.mxu0 0.0
    %992 = vmatpush1.xpose.msra.mxu0 %v909
    %993 = vmatprep.subr.mxu0 0.0
    %994 = vmatpush1.xpose.msra.mxu0 %v912
    %995 = vmatprep.subr.mxu0 0.0
    %996 = vmatpush1.xpose.msra.mxu0 %v915
    %997 = vmatprep.subr.mxu0 0.0
    %998 = vmatpush1.xpose.msra.mxu0 %v918
    %999 = vmatprep.subr.mxu0 0.0
    %1000 = vmatpush1.xpose.msra.mxu0 %v921
    %1001 = vmatprep.subr.mxu0 0.0
    %1002 = vmatpush1.xpose.msra.mxu0 %v924
    %1003 = vmatprep.subr.mxu0 0.0
    %1004 = vmatpush1.xpose.msra.mxu0 %v927
    %1005 = vmatprep.subr.mxu0 0.0
    %1006 = vmatpush1.xpose.msra.mxu0 %v930
    %1007 = vmatprep.subr.mxu0 0.0
    %1008 = vmatpush1.xpose.msra.mxu0 %v933
    %1009 = vmatprep.subr.mxu0 0.0
    %1010 = vmatpush1.xpose.msra.mxu0 %v936
    %1011 = vmatprep.subr.mxu0 0.0
    %1012 = vmatpush1.xpose.msra.mxu0 %v939
    %1013 = vmatprep.subr.mxu0 0.0
    %1014 = vmatpush1.xpose.msra.mxu0 %v942
    %1015 = vmatprep.subr.mxu0 0.0
    %1016 = vmatpush1.xpose.msra.mxu0 %v945
    %1017 = vmatprep.subr.mxu0 0.0
    %1018 = vmatpush1.xpose.msra.mxu0 %v948
    %1019 = vmatprep.subr.mxu0 0.0
    %1020 = vmatpush1.xpose.msra.mxu0 %v951
    %1021 = vmatprep.subr.mxu0 0.0
    %1022 = vmatpush1.xpose.msra.mxu0 %v954
    %1023 = vmatprep.subr.mxu0 0.0
    %1024 = vmatpush1.xpose.msra.mxu0 %v957
    %1025 = vmatprep.subr.mxu0 0.0
    %1026 = vmatpush1.xpose.msra.mxu0 %v960
    %1027 = vmatprep.subr.mxu0 0.0
    %1028 = vmatpush1.xpose.msra.mxu0 %v963
    %1029 = vmatprep.mubr.f32.mxu0 0.0
    %1030 = vmatmul.mubr.f32.gmra.mrb[0].mxu0 %v858
    %v1031 = vpop.f32.mrb[0].mxu0
    %v1032 = vadd.f32 %v481, %v1031
    %v1033 = vpop.f32.mrb[0].mxu0
    %v1034 = vadd.f32 %v482, %v1033
    %1035 = vmatprep.mubr.f32.mxu0 0.0
    %1036 = vmatmul.mubr.f32.gmra.mrb[0].mxu0 %v861
    %v1037 = vpop.f32.mrb[0].mxu0
    %v1038 = vadd.f32 %v483, %v1037
    %v1039 = vpop.f32.mrb[0].mxu0
    %v1040 = vadd.f32 %v484, %v1039
    %1041 = vmatprep.mubr.f32.mxu0 0.0
    %1042 = vmatmul.mubr.f32.gmra.mrb[0].mxu0 %v864
    %v1043 = vpop.f32.mrb[0].mxu0
    %v1044 = vadd.f32 %v485, %v1043
    %v1045 = vpop.f32.mrb[0].mxu0
    %v1046 = vadd.f32 %v486, %v1045
    %1047 = vmatprep.mubr.f32.mxu0 0.0
    %1048 = vmatmul.mubr.f32.gmra.mrb[0].mxu0 %v867
    %v1049 = vpop.f32.mrb[0].mxu0
    %v1050 = vadd.f32 %v487, %v1049
    %v1051 = vpop.f32.mrb[0].mxu0
    %v1052 = vadd.f32 %v488, %v1051
    %1053 = vdwg.mxu0
    %v1054 = vmax.f32 %v1032, %v1034
    %1055 = vmax.xlane.f32.xlu0 %v1054
    %v1056 = vpop.xlane.xlu0 %1055
    %v1057 = vmax.f32 %v1038, %v1040
    %1058 = vmax.xlane.f32.xlu0 %v1057
    %v1059 = vpop.xlane.xlu0 %1058
    %v1060 = vmax.f32 %v1044, %v1046
    %1061 = vmax.xlane.f32.xlu0 %v1060
    %v1062 = vpop.xlane.xlu0 %1061
    %v1063 = vmax.f32 %v1050, %v1052
    %1064 = vmax.xlane.f32.xlu0 %v1063
    %v1065 = vpop.xlane.xlu0 %1064
    %v1066 = vsub.f32 %v1032, %v1056
    %v1067 = vsub.f32 %v1034, %v1056
    %v1068 = vsub.f32 %v1038, %v1059
    %v1069 = vsub.f32 %v1040, %v1059
    %v1070 = vsub.f32 %v1044, %v1062
    %v1071 = vsub.f32 %v1046, %v1062
    %v1072 = vsub.f32 %v1050, %v1065
    %v1073 = vsub.f32 %v1052, %v1065
    %v1074 = vmul.f32 %v1066, 1.442695
    %v1075 = vpow.pop %v1074
    %v1076 = vmul.f32 %v1067, 1.442695
    %v1077 = vpow.pop %v1076
    %v1078 = vmul.f32 %v1068, 1.442695
    %v1079 = vpow.pop %v1078
    %v1080 = vmul.f32 %v1069, 1.442695
    %v1081 = vpow.pop %v1080
    %v1082 = vmul.f32 %v1070, 1.442695
    %v1083 = vpow.pop %v1082
    %v1084 = vmul.f32 %v1071, 1.442695
    %v1085 = vpow.pop %v1084
    %v1086 = vmul.f32 %v1072, 1.442695
    %v1087 = vpow.pop %v1086
    %v1088 = vmul.f32 %v1073, 1.442695
    %v1089 = vpow.pop %v1088
    %1090 = vmatprep.subr.mxu0 0.0
    %1091 = vmatpush1.msra.mxu0 %v825
    %1092 = vmatprep.subr.mxu0 0.0
    %1093 = vmatpush1.msra.mxu0 %v826
    %1094 = vmatprep.subr.mxu0 0.0
    %1095 = vmatpush1.msra.mxu0 %v827
    %1096 = vmatprep.subr.mxu0 0.0
    %1097 = vmatpush1.msra.mxu0 %v828
    %1098 = vmatprep.subr.mxu0 0.0
    %1099 = vmatpush1.msra.mxu0 %v829
    %1100 = vmatprep.subr.mxu0 0.0
    %1101 = vmatpush1.msra.mxu0 %v830
    %1102 = vmatprep.subr.mxu0 0.0
    %1103 = vmatpush1.msra.mxu0 %v831
    %1104 = vmatprep.subr.mxu0 0.0
    %1105 = vmatpush1.msra.mxu0 %v832
    %1106 = vmatprep.subr.mxu0 0.0
    %1107 = vmatpush1.msra.mxu0 %v833
    %1108 = vmatprep.subr.mxu0 0.0
    %1109 = vmatpush1.msra.mxu0 %v834
    %1110 = vmatprep.subr.mxu0 0.0
    %1111 = vmatpush1.msra.mxu0 %v835
    %1112 = vmatprep.subr.mxu0 0.0
    %1113 = vmatpush1.msra.mxu0 %v836
    %1114 = vmatprep.subr.mxu0 0.0
    %1115 = vmatpush1.msra.mxu0 %v837
    %1116 = vmatprep.subr.mxu0 0.0
    %1117 = vmatpush1.msra.mxu0 %v838
    %1118 = vmatprep.subr.mxu0 0.0
    %1119 = vmatpush1.msra.mxu0 %v839
    %1120 = vmatprep.subr.mxu0 0.0
    %1121 = vmatpush1.msra.mxu0 %v840
    %1122 = vmatprep.subr.mxu0 0.0
    %1123 = vmatpush1.msra.mxu0 %v841
    %1124 = vmatprep.subr.mxu0 0.0
    %1125 = vmatpush1.msra.mxu0 %v842
    %1126 = vmatprep.subr.mxu0 0.0
    %1127 = vmatpush1.msra.mxu0 %v843
    %1128 = vmatprep.subr.mxu0 0.0
    %1129 = vmatpush1.msra.mxu0 %v844
    %1130 = vmatprep.subr.mxu0 0.0
    %1131 = vmatpush1.msra.mxu0 %v845
    %1132 = vmatprep.subr.mxu0 0.0
    %1133 = vmatpush1.msra.mxu0 %v846
    %1134 = vmatprep.subr.mxu0 0.0
    %1135 = vmatpush1.msra.mxu0 %v847
    %1136 = vmatprep.subr.mxu0 0.0
    %1137 = vmatpush1.msra.mxu0 %v848
    %1138 = vmatprep.subr.mxu0 0.0
    %1139 = vmatpush1.msra.mxu0 %v849
    %1140 = vmatprep.subr.mxu0 0.0
    %1141 = vmatpush1.msra.mxu0 %v850
    %1142 = vmatprep.subr.mxu0 0.0
    %1143 = vmatpush1.msra.mxu0 %v851
    %1144 = vmatprep.subr.mxu0 0.0
    %1145 = vmatpush1.msra.mxu0 %v852
    %1146 = vmatprep.subr.mxu0 0.0
    %1147 = vmatpush1.msra.mxu0 %v853
    %1148 = vmatprep.subr.mxu0 0.0
    %1149 = vmatpush1.msra.mxu0 %v854
    %1150 = vmatprep.subr.mxu0 0.0
    %1151 = vmatpush1.msra.mxu0 %v855
    %1152 = vmatprep.subr.mxu0 0.0
    %1153 = vmatpush1.msra.mxu0 %v856
    %1154 = vmatprep.mubr.f32.mxu0 %v1077
    %1155 = vmatmul.mubr.f32.gmra.mrb[0].mxu0 %v1075
    %v1156 = vpop.f32.mrb[0].mxu0
    %v1157 = vadd.f32 0.0, %v1156
    %v1158 = vpop.f32.mrb[0].mxu0
    %1159 = vmatprep.mubr.f32.mxu0 %v1081
    %1160 = vmatmul.mubr.f32.gmra.mrb[0].mxu0 %v1079
    %v1161 = vpop.f32.mrb[0].mxu0
    %v1162 = vadd.f32 0.0, %v1161
    %v1163 = vpop.f32.mrb[0].mxu0
    %1164 = vmatprep.mubr.f32.mxu0 %v1085
    %1165 = vmatmul.mubr.f32.gmra.mrb[0].mxu0 %v1083
    %v1166 = vpop.f32.mrb[0].mxu0
    %v1167 = vadd.f32 0.0, %v1166
    %v1168 = vpop.f32.mrb[0].mxu0
    %1169 = vmatprep.mubr.f32.mxu0 %v1089
    %1170 = vmatmul.mubr.f32.gmra.mrb[0].mxu0 %v1087
    %v1171 = vpop.f32.mrb[0].mxu0
    %v1172 = vadd.f32 0.0, %v1171
    %v1173 = vpop.f32.mrb[0].mxu0
    %1174 = vdwg.mxu0
    %1175 = vmatprep.subr.mxu0 0.0
    %1176 = vmatpush1.msra.mxu0 %v449
    %1177 = vmatprep.subr.mxu0 0.0
    %1178 = vmatpush1.msra.mxu0 %v450
    %1179 = vmatprep.subr.mxu0 0.0
    %1180 = vmatpush1.msra.mxu0 %v451
    %1181 = vmatprep.subr.mxu0 0.0
    %1182 = vmatpush1.msra.mxu0 %v452
    %1183 = vmatprep.subr.mxu0 0.0
    %1184 = vmatpush1.msra.mxu0 %v453
    %1185 = vmatprep.subr.mxu0 0.0
    %1186 = vmatpush1.msra.mxu0 %v454
    %1187 = vmatprep.subr.mxu0 0.0
    %1188 = vmatpush1.msra.mxu0 %v455
    %1189 = vmatprep.subr.mxu0 0.0
    %1190 = vmatpush1.msra.mxu0 %v456
    %1191 = vmatprep.subr.mxu0 0.0
    %1192 = vmatpush1.msra.mxu0 %v457
    %1193 = vmatprep.subr.mxu0 0.0
    %1194 = vmatpush1.msra.mxu0 %v458
    %1195 = vmatprep.subr.mxu0 0.0
    %1196 = vmatpush1.msra.mxu0 %v459
    %1197 = vmatprep.subr.mxu0 0.0
    %1198 = vmatpush1.msra.mxu0 %v460
    %1199 = vmatprep.subr.mxu0 0.0
    %1200 = vmatpush1.msra.mxu0 %v461
    %1201 = vmatprep.subr.mxu0 0.0
    %1202 = vmatpush1.msra.mxu0 %v462
    %1203 = vmatprep.subr.mxu0 0.0
    %1204 = vmatpush1.msra.mxu0 %v463
    %1205 = vmatprep.subr.mxu0 0.0
    %1206 = vmatpush1.msra.mxu0 %v464
    %1207 = vmatprep.subr.mxu0 0.0
    %1208 = vmatpush1.msra.mxu0 %v465
    %1209 = vmatprep.subr.mxu0 0.0
    %1210 = vmatpush1.msra.mxu0 %v466
    %1211 = vmatprep.subr.mxu0 0.0
    %1212 = vmatpush1.msra.mxu0 %v467
    %1213 = vmatprep.subr.mxu0 0.0
    %1214 = vmatpush1.msra.mxu0 %v468
    %1215 = vmatprep.subr.mxu0 0.0
    %1216 = vmatpush1.msra.mxu0 %v469
    %1217 = vmatprep.subr.mxu0 0.0
    %1218 = vmatpush1.msra.mxu0 %v470
    %1219 = vmatprep.subr.mxu0 0.0
    %1220 = vmatpush1.msra.mxu0 %v471
    %1221 = vmatprep.subr.mxu0 0.0
    %1222 = vmatpush1.msra.mxu0 %v472
    %1223 = vmatprep.subr.mxu0 0.0
    %1224 = vmatpush1.msra.mxu0 %v473
    %1225 = vmatprep.subr.mxu0 0.0
    %1226 = vmatpush1.msra.mxu0 %v474
    %1227 = vmatprep.subr.mxu0 0.0
    %1228 = vmatpush1.msra.mxu0 %v475
    %1229 = vmatprep.subr.mxu0 0.0
    %1230 = vmatpush1.msra.mxu0 %v476
    %1231 = vmatprep.subr.mxu0 0.0
    %1232 = vmatpush1.msra.mxu0 %v477
    %1233 = vmatprep.subr.mxu0 0.0
    %1234 = vmatpush1.msra.mxu0 %v478
    %1235 = vmatprep.subr.mxu0 0.0
    %1236 = vmatpush1.msra.mxu0 %v479
    %1237 = vmatprep.subr.mxu0 0.0
    %1238 = vmatpush1.msra.mxu0 %v480
    %1239 = vmatprep.mubr.f32.mxu0 %v1077
    %1240 = vmatmul.mubr.f32.gmra.mrb[0].mxu0 %v1075
    %v1241 = vpop.f32.mrb[0].mxu0
    %v1242 = vadd.f32 0.0, %v1241
    %v1243 = vpop.f32.mrb[0].mxu0
    %1244 = vmatprep.mubr.f32.mxu0 %v1081
    %1245 = vmatmul.mubr.f32.gmra.mrb[0].mxu0 %v1079
    %v1246 = vpop.f32.mrb[0].mxu0
    %v1247 = vadd.f32 0.0, %v1246
    %v1248 = vpop.f32.mrb[0].mxu0
    %1249 = vmatprep.mubr.f32.mxu0 %v1085
    %1250 = vmatmul.mubr.f32.gmra.mrb[0].mxu0 %v1083
    %v1251 = vpop.f32.mrb[0].mxu0
    %v1252 = vadd.f32 0.0, %v1251
    %v1253 = vpop.f32.mrb[0].mxu0
    %1254 = vmatprep.mubr.f32.mxu0 %v1089
    %1255 = vmatmul.mubr.f32.gmra.mrb[0].mxu0 %v1087
    %v1256 = vpop.f32.mrb[0].mxu0
    %v1257 = vadd.f32 0.0, %v1256
    %v1258 = vpop.f32.mrb[0].mxu0
    %1259 = vdwg.mxu0
    %v1260 = vrcp.pop %v1242
    %v1261 = vrcp.pop %v1247
    %v1262 = vrcp.pop %v1252
    %v1263 = vrcp.pop %v1257
    %v1264 = vmul.f32 %v1157, %v1260
    %v1265 = vmul.f32 %v1162, %v1261
    %v1266 = vmul.f32 %v1167, %v1262
    %v1267 = vmul.f32 %v1172, %v1263
    %v1268 = vld [vmem:[%s12] sm:$0xff]
    %v1269 = vld [vmem:[%s12 + $0x8] sm:$0xff]
    %v1270 = vld [vmem:[%s12 + $0x10] sm:$0xff]
    %v1271 = vld [vmem:[%s12 + $0x18] sm:$0xff]
    %v1272 = vld [vmem:[%s12 + $0x20] sm:$0xff]
    %v1273 = vld [vmem:[%s13] sm:$0x1]
    %v1275 = vlaneseq
    %v1276 = vshrl.u32 %v1275, 7
    %v1277 = vsub.s32 0, %v1276
    %v1278 = vrot.slane %v1273, %v1277
    %v1281 = vsel %vm501, %v1264, 0
    %v1284 = vsel %vm501, %v1265, 0
    %v1287 = vsel %vm501, %v1266, 0
    %v1290 = vsel %vm501, %v1267, 0
    %1292 = vmatprep.subr.mxu0 0.0
    %1293 = vmatpush1.msra.mxu0 %v1268
    %1294 = vmatprep.subr.mxu0 0.0
    %1295 = vmatpush1.msra.mxu0 %v1269
    %1296 = vmatprep.subr.mxu0 0.0
    %1297 = vmatpush1.msra.mxu0 %v1270
    %1298 = vmatprep.subr.mxu0 0.0
    %1299 = vmatpush1.msra.mxu0 %v1271
    %1300 = vmatprep.subr.mxu0 0.0
    %1301 = vmatpush1.msra.mxu0 %v1272
    %1302 = vmatprep.subr.mxu0 0.0
    %1303 = vmatpush1.msra.mxu0 0.0
    %1304 = vmatprep.subr.mxu0 0.0
    %1305 = vmatpush1.msra.mxu0 0.0
    %1306 = vmatprep.subr.mxu0 0.0
    %1307 = vmatpush1.msra.mxu0 0.0
    %1308 = vmatprep.subr.mxu0 0.0
    %1309 = vmatpush1.msra.mxu0 0.0
    %1310 = vmatprep.subr.mxu0 0.0
    %1311 = vmatpush1.msra.mxu0 0.0
    %1312 = vmatprep.subr.mxu0 0.0
    %1313 = vmatpush1.msra.mxu0 0.0
    %1314 = vmatprep.subr.mxu0 0.0
    %1315 = vmatpush1.msra.mxu0 0.0
    %1316 = vmatprep.subr.mxu0 0.0
    %1317 = vmatpush1.msra.mxu0 0.0
    %1318 = vmatprep.subr.mxu0 0.0
    %1319 = vmatpush1.msra.mxu0 0.0
    %1320 = vmatprep.subr.mxu0 0.0
    %1321 = vmatpush1.msra.mxu0 0.0
    %1322 = vmatprep.subr.mxu0 0.0
    %1323 = vmatpush1.msra.mxu0 0.0
    %1324 = vmatprep.subr.mxu0 0.0
    %1325 = vmatpush1.msra.mxu0 0.0
    %1326 = vmatprep.subr.mxu0 0.0
    %1327 = vmatpush1.msra.mxu0 0.0
    %1328 = vmatprep.subr.mxu0 0.0
    %1329 = vmatpush1.msra.mxu0 0.0
    %1330 = vmatprep.subr.mxu0 0.0
    %1331 = vmatpush1.msra.mxu0 0.0
    %1332 = vmatprep.subr.mxu0 0.0
    %1333 = vmatpush1.msra.mxu0 0.0
    %1334 = vmatprep.subr.mxu0 0.0
    %1335 = vmatpush1.msra.mxu0 0.0
    %1336 = vmatprep.subr.mxu0 0.0
    %1337 = vmatpush1.msra.mxu0 0.0
    %1338 = vmatprep.subr.mxu0 0.0
    %1339 = vmatpush1.msra.mxu0 0.0
    %1340 = vmatprep.subr.mxu0 0.0
    %1341 = vmatpush1.msra.mxu0 0.0
    %1342 = vmatprep.subr.mxu0 0.0
    %1343 = vmatpush1.msra.mxu0 0.0
    %1344 = vmatprep.subr.mxu0 0.0
    %1345 = vmatpush1.msra.mxu0 0.0
    %1346 = vmatprep.subr.mxu0 0.0
    %1347 = vmatpush1.msra.mxu0 0.0
    %1348 = vmatprep.subr.mxu0 0.0
    %1349 = vmatpush1.msra.mxu0 0.0
    %1350 = vmatprep.subr.mxu0 0.0
    %1351 = vmatpush1.msra.mxu0 0.0
    %1352 = vmatprep.subr.mxu0 0.0
    %1353 = vmatpush1.msra.mxu0 0.0
    %1354 = vmatprep.subr.mxu0 0.0
    %1355 = vmatpush1.msra.mxu0 0.0
    %1356 = vmatprep.mubr.f32.mxu0 0.0
    %1357 = vmatmul.mubr.f32.gmra.mrb[0].mxu0 %v1281
    %v1358 = vpop.f32.mrb[0].mxu0
    %v1359 = vadd.f32 %v1278, %v1358
    %v1360 = vpop.f32.mrb[0].mxu0
    %1361 = vmatprep.mubr.f32.mxu0 0.0
    %1362 = vmatmul.mubr.f32.gmra.mrb[0].mxu0 %v1284
    %v1363 = vpop.f32.mrb[0].mxu0
    %v1364 = vadd.f32 %v1278, %v1363
    %v1365 = vpop.f32.mrb[0].mxu0
    %1366 = vmatprep.mubr.f32.mxu0 0.0
    %1367 = vmatmul.mubr.f32.gmra.mrb[0].mxu0 %v1287
    %v1368 = vpop.f32.mrb[0].mxu0
    %v1369 = vadd.f32 %v1278, %v1368
    %v1370 = vpop.f32.mrb[0].mxu0
    %1371 = vmatprep.mubr.f32.mxu0 0.0
    %1372 = vmatmul.mubr.f32.gmra.mrb[0].mxu0 %v1290
    %v1373 = vpop.f32.mrb[0].mxu0
    %v1374 = vadd.f32 %v1278, %v1373
    %v1375 = vpop.f32.mrb[0].mxu0
    %1376 = vdwg.mxu0
    %v1377 = vadd.f32 %v445, %v1359
    %v1378 = vadd.f32 %v446, %v1364
    %v1379 = vadd.f32 %v447, %v1369
    %v1380 = vadd.f32 %v448, %v1374
    %v1381 = vld [vmem:[%s14] sm:$0x1]
    %v1382 = vld [vmem:[%s15] sm:$0x1]
    %v1383 = vsel %vm501, %v1377, 0.0
    %1384 = vadd.xlane.f32.xlu0 %v1383
    %v1385 = vpop.xlane.xlu0 %1384
    %v1386 = vsel %vm501, %v1378, 0.0
    %1387 = vadd.xlane.f32.xlu0 %v1386
    %v1388 = vpop.xlane.xlu0 %1387
    %v1389 = vsel %vm501, %v1379, 0.0
    %1390 = vadd.xlane.f32.xlu0 %v1389
    %v1391 = vpop.xlane.xlu0 %1390
    %v1392 = vsel %vm501, %v1380, 0.0
    %1393 = vadd.xlane.f32.xlu0 %v1392
    %v1394 = vpop.xlane.xlu0 %1393
    %v1395 = vrcp.pop 40.0
    %v1396 = vmul.f32 %v1385, %v1395
    %v1397 = vmul.f32 %v1388, %v1395
    %v1398 = vmul.f32 %v1391, %v1395
    %v1399 = vmul.f32 %v1394, %v1395
    %v1400 = vsub.f32 %v1377, %v1396
    %v1401 = vsub.f32 %v1378, %v1397
    %v1402 = vsub.f32 %v1379, %v1398
    %v1403 = vsub.f32 %v1380, %v1399
    %v1404 = vmul.f32 %v1400, %v1400
    %v1405 = vmul.f32 %v1401, %v1401
    %v1406 = vmul.f32 %v1402, %v1402
    %v1407 = vmul.f32 %v1403, %v1403
    %v1408 = vsel %vm501, %v1404, 0.0
    %1409 = vadd.xlane.f32.xlu0 %v1408
    %v1410 = vpop.xlane.xlu0 %1409
    %v1411 = vsel %vm501, %v1405, 0.0
    %1412 = vadd.xlane.f32.xlu0 %v1411
    %v1413 = vpop.xlane.xlu0 %1412
    %v1414 = vsel %vm501, %v1406, 0.0
    %1415 = vadd.xlane.f32.xlu0 %v1414
    %v1416 = vpop.xlane.xlu0 %1415
    %v1417 = vsel %vm501, %v1407, 0.0
    %1418 = vadd.xlane.f32.xlu0 %v1417
    %v1419 = vpop.xlane.xlu0 %1418
    %v1420 = vmul.f32 %v1410, %v1395
    %v1421 = vmul.f32 %v1413, %v1395
    %v1422 = vmul.f32 %v1416, %v1395
    %v1423 = vmul.f32 %v1419, %v1395
    %v1424 = vadd.f32 %v1420, 1e-05
    %v1425 = vadd.f32 %v1421, 1e-05
    %v1426 = vadd.f32 %v1422, 1e-05
    %v1427 = vadd.f32 %v1423, 1e-05
    %v1428 = vrsqrt.pop %v1424
    %v1429 = vrsqrt.pop %v1425
    %v1430 = vrsqrt.pop %v1426
    %v1431 = vrsqrt.pop %v1427
    %v1432 = vmul.f32 %v1400, %v1428
    %v1433 = vmul.f32 %v1401, %v1429
    %v1434 = vmul.f32 %v1402, %v1430
    %v1435 = vmul.f32 %v1403, %v1431
    %v1437 = vlaneseq
    %v1438 = vshrl.u32 %v1437, 7
    %v1439 = vsub.s32 0, %v1438
    %v1440 = vrot.slane %v1381, %v1439
    %v1442 = vmul.f32 %v1432, %v1440
    %v1443 = vmul.f32 %v1433, %v1440
    %v1444 = vmul.f32 %v1434, %v1440
    %v1445 = vmul.f32 %v1435, %v1440
    %v1447 = vlaneseq
    %v1448 = vshrl.u32 %v1447, 7
    %v1449 = vsub.s32 0, %v1448
    %v1450 = vrot.slane %v1382, %v1449
    %v1452 = vadd.f32 %v1442, %v1450
    %v1453 = vadd.f32 %v1443, %v1450
    %v1454 = vadd.f32 %v1444, %v1450
    %v1455 = vadd.f32 %v1445, %v1450
    %v1456 = vld [vmem:[%s16] sm:$0xff]
    %v1457 = vld [vmem:[%s16 + $0x8] sm:$0xff]
    %v1458 = vld [vmem:[%s16 + $0x10] sm:$0xff]
    %v1459 = vld [vmem:[%s16 + $0x18] sm:$0xff]
    %v1460 = vld [vmem:[%s16 + $0x20] sm:$0xff]
    %v1461 = vld [vmem:[%s17] sm:$0x1]
    %v1463 = vlaneseq
    %v1464 = vshrl.u32 %v1463, 7
    %v1465 = vsub.s32 0, %v1464
    %v1466 = vrot.slane %v1461, %v1465
    %v1469 = vsel %vm501, %v1452, 0
    %v1472 = vsel %vm501, %v1453, 0
    %v1475 = vsel %vm501, %v1454, 0
    %v1478 = vsel %vm501, %v1455, 0
    %1480 = vmatprep.subr.mxu0 0.0
    %1481 = vmatpush1.msra.mxu0 %v1456
    %1482 = vmatprep.subr.mxu0 0.0
    %1483 = vmatpush1.msra.mxu0 %v1457
    %1484 = vmatprep.subr.mxu0 0.0
    %1485 = vmatpush1.msra.mxu0 %v1458
    %1486 = vmatprep.subr.mxu0 0.0
    %1487 = vmatpush1.msra.mxu0 %v1459
    %1488 = vmatprep.subr.mxu0 0.0
    %1489 = vmatpush1.msra.mxu0 %v1460
    %1490 = vmatprep.subr.mxu0 0.0
    %1491 = vmatpush1.msra.mxu0 0.0
    %1492 = vmatprep.subr.mxu0 0.0
    %1493 = vmatpush1.msra.mxu0 0.0
    %1494 = vmatprep.subr.mxu0 0.0
    %1495 = vmatpush1.msra.mxu0 0.0
    %1496 = vmatprep.subr.mxu0 0.0
    %1497 = vmatpush1.msra.mxu0 0.0
    %1498 = vmatprep.subr.mxu0 0.0
    %1499 = vmatpush1.msra.mxu0 0.0
    %1500 = vmatprep.subr.mxu0 0.0
    %1501 = vmatpush1.msra.mxu0 0.0
    %1502 = vmatprep.subr.mxu0 0.0
    %1503 = vmatpush1.msra.mxu0 0.0
    %1504 = vmatprep.subr.mxu0 0.0
    %1505 = vmatpush1.msra.mxu0 0.0
    %1506 = vmatprep.subr.mxu0 0.0
    %1507 = vmatpush1.msra.mxu0 0.0
    %1508 = vmatprep.subr.mxu0 0.0
    %1509 = vmatpush1.msra.mxu0 0.0
    %1510 = vmatprep.subr.mxu0 0.0
    %1511 = vmatpush1.msra.mxu0 0.0
    %1512 = vmatprep.subr.mxu0 0.0
    %1513 = vmatpush1.msra.mxu0 0.0
    %1514 = vmatprep.subr.mxu0 0.0
    %1515 = vmatpush1.msra.mxu0 0.0
    %1516 = vmatprep.subr.mxu0 0.0
    %1517 = vmatpush1.msra.mxu0 0.0
    %1518 = vmatprep.subr.mxu0 0.0
    %1519 = vmatpush1.msra.mxu0 0.0
    %1520 = vmatprep.subr.mxu0 0.0
    %1521 = vmatpush1.msra.mxu0 0.0
    %1522 = vmatprep.subr.mxu0 0.0
    %1523 = vmatpush1.msra.mxu0 0.0
    %1524 = vmatprep.subr.mxu0 0.0
    %1525 = vmatpush1.msra.mxu0 0.0
    %1526 = vmatprep.subr.mxu0 0.0
    %1527 = vmatpush1.msra.mxu0 0.0
    %1528 = vmatprep.subr.mxu0 0.0
    %1529 = vmatpush1.msra.mxu0 0.0
    %1530 = vmatprep.subr.mxu0 0.0
    %1531 = vmatpush1.msra.mxu0 0.0
    %1532 = vmatprep.subr.mxu0 0.0
    %1533 = vmatpush1.msra.mxu0 0.0
    %1534 = vmatprep.subr.mxu0 0.0
    %1535 = vmatpush1.msra.mxu0 0.0
    %1536 = vmatprep.subr.mxu0 0.0
    %1537 = vmatpush1.msra.mxu0 0.0
    %1538 = vmatprep.subr.mxu0 0.0
    %1539 = vmatpush1.msra.mxu0 0.0
    %1540 = vmatprep.subr.mxu0 0.0
    %1541 = vmatpush1.msra.mxu0 0.0
    %1542 = vmatprep.subr.mxu0 0.0
    %1543 = vmatpush1.msra.mxu0 0.0
    %1544 = vmatprep.mubr.f32.mxu0 0.0
    %1545 = vmatmul.mubr.f32.gmra.mrb[0].mxu0 %v1469
    %v1546 = vpop.f32.mrb[0].mxu0
    %v1547 = vadd.f32 %v1466, %v1546
    %v1548 = vpop.f32.mrb[0].mxu0
    %1549 = vmatprep.mubr.f32.mxu0 0.0
    %1550 = vmatmul.mubr.f32.gmra.mrb[0].mxu0 %v1472
    %v1551 = vpop.f32.mrb[0].mxu0
    %v1552 = vadd.f32 %v1466, %v1551
    %v1553 = vpop.f32.mrb[0].mxu0
    %1554 = vmatprep.mubr.f32.mxu0 0.0
    %1555 = vmatmul.mubr.f32.gmra.mrb[0].mxu0 %v1475
    %v1556 = vpop.f32.mrb[0].mxu0
    %v1557 = vadd.f32 %v1466, %v1556
    %v1558 = vpop.f32.mrb[0].mxu0
    %1559 = vmatprep.mubr.f32.mxu0 0.0
    %1560 = vmatmul.mubr.f32.gmra.mrb[0].mxu0 %v1478
    %v1561 = vpop.f32.mrb[0].mxu0
    %v1562 = vadd.f32 %v1466, %v1561
    %v1563 = vpop.f32.mrb[0].mxu0
    %1564 = vdwg.mxu0
    %v1565 = vmax.f32 %v1547, 0.0
    %v1566 = vmax.f32 %v1552, 0.0
    %v1567 = vmax.f32 %v1557, 0.0
    %v1568 = vmax.f32 %v1562, 0.0
    %v1569 = vld [vmem:[%s18] sm:$0xff]
    %v1570 = vld [vmem:[%s18 + $0x8] sm:$0xff]
    %v1571 = vld [vmem:[%s18 + $0x10] sm:$0xff]
    %v1572 = vld [vmem:[%s18 + $0x18] sm:$0xff]
    %v1573 = vld [vmem:[%s19] sm:$0x1]
    %v1575 = vlaneseq
    %v1576 = vshrl.u32 %v1575, 7
    %v1577 = vsub.s32 0, %v1576
    %v1578 = vrot.slane %v1573, %v1577
    %vm1580 = vcmask 261120
    %v1582 = vsel %vm1580, %v1565, 0
    %v1585 = vsel %vm1580, %v1566, 0
    %v1588 = vsel %vm1580, %v1567, 0
    %v1591 = vsel %vm1580, %v1568, 0
    %1593 = vmatprep.subr.mxu0 0.0
    %1594 = vmatpush1.msra.mxu0 %v1569
    %1595 = vmatprep.subr.mxu0 0.0
    %1596 = vmatpush1.msra.mxu0 %v1570
    %1597 = vmatprep.subr.mxu0 0.0
    %1598 = vmatpush1.msra.mxu0 %v1571
    %1599 = vmatprep.subr.mxu0 0.0
    %1600 = vmatpush1.msra.mxu0 %v1572
    %1601 = vmatprep.subr.mxu0 0.0
    %1602 = vmatpush1.msra.mxu0 0.0
    %1603 = vmatprep.subr.mxu0 0.0
    %1604 = vmatpush1.msra.mxu0 0.0
    %1605 = vmatprep.subr.mxu0 0.0
    %1606 = vmatpush1.msra.mxu0 0.0
    %1607 = vmatprep.subr.mxu0 0.0
    %1608 = vmatpush1.msra.mxu0 0.0
    %1609 = vmatprep.subr.mxu0 0.0
    %1610 = vmatpush1.msra.mxu0 0.0
    %1611 = vmatprep.subr.mxu0 0.0
    %1612 = vmatpush1.msra.mxu0 0.0
    %1613 = vmatprep.subr.mxu0 0.0
    %1614 = vmatpush1.msra.mxu0 0.0
    %1615 = vmatprep.subr.mxu0 0.0
    %1616 = vmatpush1.msra.mxu0 0.0
    %1617 = vmatprep.subr.mxu0 0.0
    %1618 = vmatpush1.msra.mxu0 0.0
    %1619 = vmatprep.subr.mxu0 0.0
    %1620 = vmatpush1.msra.mxu0 0.0
    %1621 = vmatprep.subr.mxu0 0.0
    %1622 = vmatpush1.msra.mxu0 0.0
    %1623 = vmatprep.subr.mxu0 0.0
    %1624 = vmatpush1.msra.mxu0 0.0
    %1625 = vmatprep.subr.mxu0 0.0
    %1626 = vmatpush1.msra.mxu0 0.0
    %1627 = vmatprep.subr.mxu0 0.0
    %1628 = vmatpush1.msra.mxu0 0.0
    %1629 = vmatprep.subr.mxu0 0.0
    %1630 = vmatpush1.msra.mxu0 0.0
    %1631 = vmatprep.subr.mxu0 0.0
    %1632 = vmatpush1.msra.mxu0 0.0
    %1633 = vmatprep.subr.mxu0 0.0
    %1634 = vmatpush1.msra.mxu0 0.0
    %1635 = vmatprep.subr.mxu0 0.0
    %1636 = vmatpush1.msra.mxu0 0.0
    %1637 = vmatprep.subr.mxu0 0.0
    %1638 = vmatpush1.msra.mxu0 0.0
    %1639 = vmatprep.subr.mxu0 0.0
    %1640 = vmatpush1.msra.mxu0 0.0
    %1641 = vmatprep.subr.mxu0 0.0
    %1642 = vmatpush1.msra.mxu0 0.0
    %1643 = vmatprep.subr.mxu0 0.0
    %1644 = vmatpush1.msra.mxu0 0.0
    %1645 = vmatprep.subr.mxu0 0.0
    %1646 = vmatpush1.msra.mxu0 0.0
    %1647 = vmatprep.subr.mxu0 0.0
    %1648 = vmatpush1.msra.mxu0 0.0
    %1649 = vmatprep.subr.mxu0 0.0
    %1650 = vmatpush1.msra.mxu0 0.0
    %1651 = vmatprep.subr.mxu0 0.0
    %1652 = vmatpush1.msra.mxu0 0.0
    %1653 = vmatprep.subr.mxu0 0.0
    %1654 = vmatpush1.msra.mxu0 0.0
    %1655 = vmatprep.subr.mxu0 0.0
    %1656 = vmatpush1.msra.mxu0 0.0
    %1657 = vmatprep.mubr.f32.mxu0 0.0
    %1658 = vmatmul.mubr.f32.gmra.mrb[0].mxu0 %v1582
    %v1659 = vpop.f32.mrb[0].mxu0
    %v1660 = vadd.f32 %v1578, %v1659
    %v1661 = vpop.f32.mrb[0].mxu0
    %1662 = vmatprep.mubr.f32.mxu0 0.0
    %1663 = vmatmul.mubr.f32.gmra.mrb[0].mxu0 %v1585
    %v1664 = vpop.f32.mrb[0].mxu0
    %v1665 = vadd.f32 %v1578, %v1664
    %v1666 = vpop.f32.mrb[0].mxu0
    %1667 = vmatprep.mubr.f32.mxu0 0.0
    %1668 = vmatmul.mubr.f32.gmra.mrb[0].mxu0 %v1588
    %v1669 = vpop.f32.mrb[0].mxu0
    %v1670 = vadd.f32 %v1578, %v1669
    %v1671 = vpop.f32.mrb[0].mxu0
    %1672 = vmatprep.mubr.f32.mxu0 0.0
    %1673 = vmatmul.mubr.f32.gmra.mrb[0].mxu0 %v1591
    %v1674 = vpop.f32.mrb[0].mxu0
    %v1675 = vadd.f32 %v1578, %v1674
    %v1676 = vpop.f32.mrb[0].mxu0
    %1677 = vdwg.mxu0
    %v1678 = vadd.f32 %v1452, %v1660
    %v1679 = vadd.f32 %v1453, %v1665
    %v1680 = vadd.f32 %v1454, %v1670
    %v1681 = vadd.f32 %v1455, %v1675
    %v1682 = vld [vmem:[%s20] sm:$0x1]
    %v1683 = vld [vmem:[%s21] sm:$0x1]
    %v1684 = vsel %vm501, %v1678, 0.0
    %1685 = vadd.xlane.f32.xlu0 %v1684
    %v1686 = vpop.xlane.xlu0 %1685
    %v1687 = vsel %vm501, %v1679, 0.0
    %1688 = vadd.xlane.f32.xlu0 %v1687
    %v1689 = vpop.xlane.xlu0 %1688
    %v1690 = vsel %vm501, %v1680, 0.0
    %1691 = vadd.xlane.f32.xlu0 %v1690
    %v1692 = vpop.xlane.xlu0 %1691
    %v1693 = vsel %vm501, %v1681, 0.0
    %1694 = vadd.xlane.f32.xlu0 %v1693
    %v1695 = vpop.xlane.xlu0 %1694
    %v1696 = vmul.f32 %v1686, %v1395
    %v1697 = vmul.f32 %v1689, %v1395
    %v1698 = vmul.f32 %v1692, %v1395
    %v1699 = vmul.f32 %v1695, %v1395
    %v1700 = vsub.f32 %v1678, %v1696
    %v1701 = vsub.f32 %v1679, %v1697
    %v1702 = vsub.f32 %v1680, %v1698
    %v1703 = vsub.f32 %v1681, %v1699
    %v1704 = vmul.f32 %v1700, %v1700
    %v1705 = vmul.f32 %v1701, %v1701
    %v1706 = vmul.f32 %v1702, %v1702
    %v1707 = vmul.f32 %v1703, %v1703
    %v1708 = vsel %vm501, %v1704, 0.0
    %1709 = vadd.xlane.f32.xlu0 %v1708
    %v1710 = vpop.xlane.xlu0 %1709
    %v1711 = vsel %vm501, %v1705, 0.0
    %1712 = vadd.xlane.f32.xlu0 %v1711
    %v1713 = vpop.xlane.xlu0 %1712
    %v1714 = vsel %vm501, %v1706, 0.0
    %1715 = vadd.xlane.f32.xlu0 %v1714
    %v1716 = vpop.xlane.xlu0 %1715
    %v1717 = vsel %vm501, %v1707, 0.0
    %1718 = vadd.xlane.f32.xlu0 %v1717
    %v1719 = vpop.xlane.xlu0 %1718
    %v1720 = vmul.f32 %v1710, %v1395
    %v1721 = vmul.f32 %v1713, %v1395
    %v1722 = vmul.f32 %v1716, %v1395
    %v1723 = vmul.f32 %v1719, %v1395
    %v1724 = vadd.f32 %v1720, 1e-05
    %v1725 = vadd.f32 %v1721, 1e-05
    %v1726 = vadd.f32 %v1722, 1e-05
    %v1727 = vadd.f32 %v1723, 1e-05
    %v1728 = vrsqrt.pop %v1724
    %v1729 = vrsqrt.pop %v1725
    %v1730 = vrsqrt.pop %v1726
    %v1731 = vrsqrt.pop %v1727
    %v1732 = vmul.f32 %v1700, %v1728
    %v1733 = vmul.f32 %v1701, %v1729
    %v1734 = vmul.f32 %v1702, %v1730
    %v1735 = vmul.f32 %v1703, %v1731
    %v1737 = vlaneseq
    %v1738 = vshrl.u32 %v1737, 7
    %v1739 = vsub.s32 0, %v1738
    %v1740 = vrot.slane %v1682, %v1739
    %v1742 = vmul.f32 %v1732, %v1740
    %v1743 = vmul.f32 %v1733, %v1740
    %v1744 = vmul.f32 %v1734, %v1740
    %v1745 = vmul.f32 %v1735, %v1740
    %v1747 = vlaneseq
    %v1748 = vshrl.u32 %v1747, 7
    %v1749 = vsub.s32 0, %v1748
    %v1750 = vrot.slane %v1683, %v1749
    %v1752 = vadd.f32 %v1742, %v1750
    %v1753 = vadd.f32 %v1743, %v1750
    %v1754 = vadd.f32 %v1744, %v1750
    %v1755 = vadd.f32 %v1745, %v1750
    %s1756 = scalar_lea.vmem %s6, 40
    %v1757 = vld [vmem:[%s1756] sm:$0xff]
    %v1758 = vld [vmem:[%s1756 + $0x8] sm:$0xff]
    %v1759 = vld [vmem:[%s1756 + $0x10] sm:$0xff]
    %v1760 = vld [vmem:[%s1756 + $0x18] sm:$0xff]
    %v1761 = vld [vmem:[%s1756 + $0x20] sm:$0xff]
    %s1762 = scalar_lea.vmem %s7, 1
    %v1763 = vld [vmem:[%s1762] sm:$0x1]
    %v1765 = vlaneseq
    %v1766 = vshrl.u32 %v1765, 7
    %v1767 = vsub.s32 0, %v1766
    %v1768 = vrot.slane %v1763, %v1767
    %v1771 = vsel %vm501, %v1752, 0
    %v1774 = vsel %vm501, %v1753, 0
    %v1777 = vsel %vm501, %v1754, 0
    %v1780 = vsel %vm501, %v1755, 0
    %1782 = vmatprep.subr.mxu0 0.0
    %1783 = vmatpush1.msra.mxu0 %v1757
    %1784 = vmatprep.subr.mxu0 0.0
    %1785 = vmatpush1.msra.mxu0 %v1758
    %1786 = vmatprep.subr.mxu0 0.0
    %1787 = vmatpush1.msra.mxu0 %v1759
    %1788 = vmatprep.subr.mxu0 0.0
    %1789 = vmatpush1.msra.mxu0 %v1760
    %1790 = vmatprep.subr.mxu0 0.0
    %1791 = vmatpush1.msra.mxu0 %v1761
    %1792 = vmatprep.subr.mxu0 0.0
    %1793 = vmatpush1.msra.mxu0 0.0
    %1794 = vmatprep.subr.mxu0 0.0
    %1795 = vmatpush1.msra.mxu0 0.0
    %1796 = vmatprep.subr.mxu0 0.0
    %1797 = vmatpush1.msra.mxu0 0.0
    %1798 = vmatprep.subr.mxu0 0.0
    %1799 = vmatpush1.msra.mxu0 0.0
    %1800 = vmatprep.subr.mxu0 0.0
    %1801 = vmatpush1.msra.mxu0 0.0
    %1802 = vmatprep.subr.mxu0 0.0
    %1803 = vmatpush1.msra.mxu0 0.0
    %1804 = vmatprep.subr.mxu0 0.0
    %1805 = vmatpush1.msra.mxu0 0.0
    %1806 = vmatprep.subr.mxu0 0.0
    %1807 = vmatpush1.msra.mxu0 0.0
    %1808 = vmatprep.subr.mxu0 0.0
    %1809 = vmatpush1.msra.mxu0 0.0
    %1810 = vmatprep.subr.mxu0 0.0
    %1811 = vmatpush1.msra.mxu0 0.0
    %1812 = vmatprep.subr.mxu0 0.0
    %1813 = vmatpush1.msra.mxu0 0.0
    %1814 = vmatprep.subr.mxu0 0.0
    %1815 = vmatpush1.msra.mxu0 0.0
    %1816 = vmatprep.subr.mxu0 0.0
    %1817 = vmatpush1.msra.mxu0 0.0
    %1818 = vmatprep.subr.mxu0 0.0
    %1819 = vmatpush1.msra.mxu0 0.0
    %1820 = vmatprep.subr.mxu0 0.0
    %1821 = vmatpush1.msra.mxu0 0.0
    %1822 = vmatprep.subr.mxu0 0.0
    %1823 = vmatpush1.msra.mxu0 0.0
    %1824 = vmatprep.subr.mxu0 0.0
    %1825 = vmatpush1.msra.mxu0 0.0
    %1826 = vmatprep.subr.mxu0 0.0
    %1827 = vmatpush1.msra.mxu0 0.0
    %1828 = vmatprep.subr.mxu0 0.0
    %1829 = vmatpush1.msra.mxu0 0.0
    %1830 = vmatprep.subr.mxu0 0.0
    %1831 = vmatpush1.msra.mxu0 0.0
    %1832 = vmatprep.subr.mxu0 0.0
    %1833 = vmatpush1.msra.mxu0 0.0
    %1834 = vmatprep.subr.mxu0 0.0
    %1835 = vmatpush1.msra.mxu0 0.0
    %1836 = vmatprep.subr.mxu0 0.0
    %1837 = vmatpush1.msra.mxu0 0.0
    %1838 = vmatprep.subr.mxu0 0.0
    %1839 = vmatpush1.msra.mxu0 0.0
    %1840 = vmatprep.subr.mxu0 0.0
    %1841 = vmatpush1.msra.mxu0 0.0
    %1842 = vmatprep.subr.mxu0 0.0
    %1843 = vmatpush1.msra.mxu0 0.0
    %1844 = vmatprep.subr.mxu0 0.0
    %1845 = vmatpush1.msra.mxu0 0.0
    %1846 = vmatprep.mubr.f32.mxu0 0.0
    %1847 = vmatmul.mubr.f32.gmra.mrb[0].mxu0 %v1771
    %v1848 = vpop.f32.mrb[0].mxu0
    %v1849 = vadd.f32 %v1768, %v1848
    %v1850 = vpop.f32.mrb[0].mxu0
    %1851 = vmatprep.mubr.f32.mxu0 0.0
    %1852 = vmatmul.mubr.f32.gmra.mrb[0].mxu0 %v1774
    %v1853 = vpop.f32.mrb[0].mxu0
    %v1854 = vadd.f32 %v1768, %v1853
    %v1855 = vpop.f32.mrb[0].mxu0
    %1856 = vmatprep.mubr.f32.mxu0 0.0
    %1857 = vmatmul.mubr.f32.gmra.mrb[0].mxu0 %v1777
    %v1858 = vpop.f32.mrb[0].mxu0
    %v1859 = vadd.f32 %v1768, %v1858
    %v1860 = vpop.f32.mrb[0].mxu0
    %1861 = vmatprep.mubr.f32.mxu0 0.0
    %1862 = vmatmul.mubr.f32.gmra.mrb[0].mxu0 %v1780
    %v1863 = vpop.f32.mrb[0].mxu0
    %v1864 = vadd.f32 %v1768, %v1863
    %v1865 = vpop.f32.mrb[0].mxu0
    %1866 = vdwg.mxu0
    %s1867 = scalar_lea.vmem %s8, 40
    %v1868 = vld [vmem:[%s1867] sm:$0xff]
    %v1869 = vld [vmem:[%s1867 + $0x8] sm:$0xff]
    %v1870 = vld [vmem:[%s1867 + $0x10] sm:$0xff]
    %v1871 = vld [vmem:[%s1867 + $0x18] sm:$0xff]
    %v1872 = vld [vmem:[%s1867 + $0x20] sm:$0xff]
    %s1873 = scalar_lea.vmem %s9, 1
    %v1874 = vld [vmem:[%s1873] sm:$0x1]
    %v1876 = vlaneseq
    %v1877 = vshrl.u32 %v1876, 7
    %v1878 = vsub.s32 0, %v1877
    %v1879 = vrot.slane %v1874, %v1878
    %1881 = vmatprep.subr.mxu0 0.0
    %1882 = vmatpush1.msra.mxu0 %v1868
    %1883 = vmatprep.subr.mxu0 0.0
    %1884 = vmatpush1.msra.mxu0 %v1869
    %1885 = vmatprep.subr.mxu0 0.0
    %1886 = vmatpush1.msra.mxu0 %v1870
    %1887 = vmatprep.subr.mxu0 0.0
    %1888 = vmatpush1.msra.mxu0 %v1871
    %1889 = vmatprep.subr.mxu0 0.0
    %1890 = vmatpush1.msra.mxu0 %v1872
    %1891 = vmatprep.subr.mxu0 0.0
    %1892 = vmatpush1.msra.mxu0 0.0
    %1893 = vmatprep.subr.mxu0 0.0
    %1894 = vmatpush1.msra.mxu0 0.0
    %1895 = vmatprep.subr.mxu0 0.0
    %1896 = vmatpush1.msra.mxu0 0.0
    %1897 = vmatprep.subr.mxu0 0.0
    %1898 = vmatpush1.msra.mxu0 0.0
    %1899 = vmatprep.subr.mxu0 0.0
    %1900 = vmatpush1.msra.mxu0 0.0
    %1901 = vmatprep.subr.mxu0 0.0
    %1902 = vmatpush1.msra.mxu0 0.0
    %1903 = vmatprep.subr.mxu0 0.0
    %1904 = vmatpush1.msra.mxu0 0.0
    %1905 = vmatprep.subr.mxu0 0.0
    %1906 = vmatpush1.msra.mxu0 0.0
    %1907 = vmatprep.subr.mxu0 0.0
    %1908 = vmatpush1.msra.mxu0 0.0
    %1909 = vmatprep.subr.mxu0 0.0
    %1910 = vmatpush1.msra.mxu0 0.0
    %1911 = vmatprep.subr.mxu0 0.0
    %1912 = vmatpush1.msra.mxu0 0.0
    %1913 = vmatprep.subr.mxu0 0.0
    %1914 = vmatpush1.msra.mxu0 0.0
    %1915 = vmatprep.subr.mxu0 0.0
    %1916 = vmatpush1.msra.mxu0 0.0
    %1917 = vmatprep.subr.mxu0 0.0
    %1918 = vmatpush1.msra.mxu0 0.0
    %1919 = vmatprep.subr.mxu0 0.0
    %1920 = vmatpush1.msra.mxu0 0.0
    %1921 = vmatprep.subr.mxu0 0.0
    %1922 = vmatpush1.msra.mxu0 0.0
    %1923 = vmatprep.subr.mxu0 0.0
    %1924 = vmatpush1.msra.mxu0 0.0
    %1925 = vmatprep.subr.mxu0 0.0
    %1926 = vmatpush1.msra.mxu0 0.0
    %1927 = vmatprep.subr.mxu0 0.0
    %1928 = vmatpush1.msra.mxu0 0.0
    %1929 = vmatprep.subr.mxu0 0.0
    %1930 = vmatpush1.msra.mxu0 0.0
    %1931 = vmatprep.subr.mxu0 0.0
    %1932 = vmatpush1.msra.mxu0 0.0
    %1933 = vmatprep.subr.mxu0 0.0
    %1934 = vmatpush1.msra.mxu0 0.0
    %1935 = vmatprep.subr.mxu0 0.0
    %1936 = vmatpush1.msra.mxu0 0.0
    %1937 = vmatprep.subr.mxu0 0.0
    %1938 = vmatpush1.msra.mxu0 0.0
    %1939 = vmatprep.subr.mxu0 0.0
    %1940 = vmatpush1.msra.mxu0 0.0
    %1941 = vmatprep.subr.mxu0 0.0
    %1942 = vmatpush1.msra.mxu0 0.0
    %1943 = vmatprep.subr.mxu0 0.0
    %1944 = vmatpush1.msra.mxu0 0.0
    %1945 = vmatprep.mubr.f32.mxu0 0.0
    %1946 = vmatmul.mubr.f32.gmra.mrb[0].mxu0 %v1771
    %v1947 = vpop.f32.mrb[0].mxu0
    %v1948 = vadd.f32 %v1879, %v1947
    %v1949 = vpop.f32.mrb[0].mxu0
    %1950 = vmatprep.mubr.f32.mxu0 0.0
    %1951 = vmatmul.mubr.f32.gmra.mrb[0].mxu0 %v1774
    %v1952 = vpop.f32.mrb[0].mxu0
    %v1953 = vadd.f32 %v1879, %v1952
    %v1954 = vpop.f32.mrb[0].mxu0
    %1955 = vmatprep.mubr.f32.mxu0 0.0
    %1956 = vmatmul.mubr.f32.gmra.mrb[0].mxu0 %v1777
    %v1957 = vpop.f32.mrb[0].mxu0
    %v1958 = vadd.f32 %v1879, %v1957
    %v1959 = vpop.f32.mrb[0].mxu0
    %1960 = vmatprep.mubr.f32.mxu0 0.0
    %1961 = vmatmul.mubr.f32.gmra.mrb[0].mxu0 %v1780
    %v1962 = vpop.f32.mrb[0].mxu0
    %v1963 = vadd.f32 %v1879, %v1962
    %v1964 = vpop.f32.mrb[0].mxu0
    %1965 = vdwg.mxu0
    %s1966 = scalar_lea.vmem %s10, 40
    %v1967 = vld [vmem:[%s1966] sm:$0xff]
    %v1968 = vld [vmem:[%s1966 + $0x8] sm:$0xff]
    %v1969 = vld [vmem:[%s1966 + $0x10] sm:$0xff]
    %v1970 = vld [vmem:[%s1966 + $0x18] sm:$0xff]
    %v1971 = vld [vmem:[%s1966 + $0x20] sm:$0xff]
    %s1972 = scalar_lea.vmem %s11, 1
    %v1973 = vld [vmem:[%s1972] sm:$0x1]
    %v1975 = vlaneseq
    %v1976 = vshrl.u32 %v1975, 7
    %v1977 = vsub.s32 0, %v1976
    %v1978 = vrot.slane %v1973, %v1977
    %1980 = vmatprep.subr.mxu0 0.0
    %1981 = vmatpush1.msra.mxu0 %v1967
    %1982 = vmatprep.subr.mxu0 0.0
    %1983 = vmatpush1.msra.mxu0 %v1968
    %1984 = vmatprep.subr.mxu0 0.0
    %1985 = vmatpush1.msra.mxu0 %v1969
    %1986 = vmatprep.subr.mxu0 0.0
    %1987 = vmatpush1.msra.mxu0 %v1970
    %1988 = vmatprep.subr.mxu0 0.0
    %1989 = vmatpush1.msra.mxu0 %v1971
    %1990 = vmatprep.subr.mxu0 0.0
    %1991 = vmatpush1.msra.mxu0 0.0
    %1992 = vmatprep.subr.mxu0 0.0
    %1993 = vmatpush1.msra.mxu0 0.0
    %1994 = vmatprep.subr.mxu0 0.0
    %1995 = vmatpush1.msra.mxu0 0.0
    %1996 = vmatprep.subr.mxu0 0.0
    %1997 = vmatpush1.msra.mxu0 0.0
    %1998 = vmatprep.subr.mxu0 0.0
    %1999 = vmatpush1.msra.mxu0 0.0
    %2000 = vmatprep.subr.mxu0 0.0
    %2001 = vmatpush1.msra.mxu0 0.0
    %2002 = vmatprep.subr.mxu0 0.0
    %2003 = vmatpush1.msra.mxu0 0.0
    %2004 = vmatprep.subr.mxu0 0.0
    %2005 = vmatpush1.msra.mxu0 0.0
    %2006 = vmatprep.subr.mxu0 0.0
    %2007 = vmatpush1.msra.mxu0 0.0
    %2008 = vmatprep.subr.mxu0 0.0
    %2009 = vmatpush1.msra.mxu0 0.0
    %2010 = vmatprep.subr.mxu0 0.0
    %2011 = vmatpush1.msra.mxu0 0.0
    %2012 = vmatprep.subr.mxu0 0.0
    %2013 = vmatpush1.msra.mxu0 0.0
    %2014 = vmatprep.subr.mxu0 0.0
    %2015 = vmatpush1.msra.mxu0 0.0
    %2016 = vmatprep.subr.mxu0 0.0
    %2017 = vmatpush1.msra.mxu0 0.0
    %2018 = vmatprep.subr.mxu0 0.0
    %2019 = vmatpush1.msra.mxu0 0.0
    %2020 = vmatprep.subr.mxu0 0.0
    %2021 = vmatpush1.msra.mxu0 0.0
    %2022 = vmatprep.subr.mxu0 0.0
    %2023 = vmatpush1.msra.mxu0 0.0
    %2024 = vmatprep.subr.mxu0 0.0
    %2025 = vmatpush1.msra.mxu0 0.0
    %2026 = vmatprep.subr.mxu0 0.0
    %2027 = vmatpush1.msra.mxu0 0.0
    %2028 = vmatprep.subr.mxu0 0.0
    %2029 = vmatpush1.msra.mxu0 0.0
    %2030 = vmatprep.subr.mxu0 0.0
    %2031 = vmatpush1.msra.mxu0 0.0
    %2032 = vmatprep.subr.mxu0 0.0
    %2033 = vmatpush1.msra.mxu0 0.0
    %2034 = vmatprep.subr.mxu0 0.0
    %2035 = vmatpush1.msra.mxu0 0.0
    %2036 = vmatprep.subr.mxu0 0.0
    %2037 = vmatpush1.msra.mxu0 0.0
    %2038 = vmatprep.subr.mxu0 0.0
    %2039 = vmatpush1.msra.mxu0 0.0
    %2040 = vmatprep.subr.mxu0 0.0
    %2041 = vmatpush1.msra.mxu0 0.0
    %2042 = vmatprep.subr.mxu0 0.0
    %2043 = vmatpush1.msra.mxu0 0.0
    %2044 = vmatprep.mubr.f32.mxu0 0.0
    %2045 = vmatmul.mubr.f32.gmra.mrb[0].mxu0 %v1771
    %v2046 = vpop.f32.mrb[0].mxu0
    %v2047 = vadd.f32 %v1978, %v2046
    %v2048 = vpop.f32.mrb[0].mxu0
    %2049 = vmatprep.mubr.f32.mxu0 0.0
    %2050 = vmatmul.mubr.f32.gmra.mrb[0].mxu0 %v1774
    %v2051 = vpop.f32.mrb[0].mxu0
    %v2052 = vadd.f32 %v1978, %v2051
    %v2053 = vpop.f32.mrb[0].mxu0
    %2054 = vmatprep.mubr.f32.mxu0 0.0
    %2055 = vmatmul.mubr.f32.gmra.mrb[0].mxu0 %v1777
    %v2056 = vpop.f32.mrb[0].mxu0
    %v2057 = vadd.f32 %v1978, %v2056
    %v2058 = vpop.f32.mrb[0].mxu0
    %2059 = vmatprep.mubr.f32.mxu0 0.0
    %2060 = vmatmul.mubr.f32.gmra.mrb[0].mxu0 %v1780
    %v2061 = vpop.f32.mrb[0].mxu0
    %v2062 = vadd.f32 %v1978, %v2061
    %v2063 = vpop.f32.mrb[0].mxu0
    %2064 = vdwg.mxu0
    %v2065 = vmul.f32 %v1948, %v449
    %v2066 = vmul.f32 %v1953, %v450
    %v2067 = vmul.f32 %v1958, %v451
    %v2068 = vmul.f32 %v1963, %v452
    %v2069 = vmul.f32 %v1948, %v453
    %v2070 = vmul.f32 %v1953, %v454
    %v2071 = vmul.f32 %v1958, %v455
    %v2072 = vmul.f32 %v1963, %v456
    %v2073 = vmul.f32 %v1948, %v457
    %v2074 = vmul.f32 %v1953, %v458
    %v2075 = vmul.f32 %v1958, %v459
    %v2076 = vmul.f32 %v1963, %v460
    %v2077 = vmul.f32 %v1948, %v461
    %v2078 = vmul.f32 %v1953, %v462
    %v2079 = vmul.f32 %v1958, %v463
    %v2080 = vmul.f32 %v1963, %v464
    %v2081 = vmul.f32 %v1948, %v465
    %v2082 = vmul.f32 %v1953, %v466
    %v2083 = vmul.f32 %v1958, %v467
    %v2084 = vmul.f32 %v1963, %v468
    %v2085 = vmul.f32 %v1948, %v469
    %v2086 = vmul.f32 %v1953, %v470
    %v2087 = vmul.f32 %v1958, %v471
    %v2088 = vmul.f32 %v1963, %v472
    %v2089 = vmul.f32 %v1948, %v473
    %v2090 = vmul.f32 %v1953, %v474
    %v2091 = vmul.f32 %v1958, %v475
    %v2092 = vmul.f32 %v1963, %v476
    %v2093 = vmul.f32 %v1948, %v477
    %v2094 = vmul.f32 %v1953, %v478
    %v2095 = vmul.f32 %v1958, %v479
    %v2096 = vmul.f32 %v1963, %v480
    %v2097 = vmul.f32 %v2047, %v449
    %v2098 = vmul.f32 %v2052, %v450
    %v2099 = vmul.f32 %v2057, %v451
    %v2100 = vmul.f32 %v2062, %v452
    %v2101 = vmul.f32 %v2047, %v453
    %v2102 = vmul.f32 %v2052, %v454
    %v2103 = vmul.f32 %v2057, %v455
    %v2104 = vmul.f32 %v2062, %v456
    %v2105 = vmul.f32 %v2047, %v457
    %v2106 = vmul.f32 %v2052, %v458
    %v2107 = vmul.f32 %v2057, %v459
    %v2108 = vmul.f32 %v2062, %v460
    %v2109 = vmul.f32 %v2047, %v461
    %v2110 = vmul.f32 %v2052, %v462
    %v2111 = vmul.f32 %v2057, %v463
    %v2112 = vmul.f32 %v2062, %v464
    %v2113 = vmul.f32 %v2047, %v465
    %v2114 = vmul.f32 %v2052, %v466
    %v2115 = vmul.f32 %v2057, %v467
    %v2116 = vmul.f32 %v2062, %v468
    %v2117 = vmul.f32 %v2047, %v469
    %v2118 = vmul.f32 %v2052, %v470
    %v2119 = vmul.f32 %v2057, %v471
    %v2120 = vmul.f32 %v2062, %v472
    %v2121 = vmul.f32 %v2047, %v473
    %v2122 = vmul.f32 %v2052, %v474
    %v2123 = vmul.f32 %v2057, %v475
    %v2124 = vmul.f32 %v2062, %v476
    %v2125 = vmul.f32 %v2047, %v477
    %v2126 = vmul.f32 %v2052, %v478
    %v2127 = vmul.f32 %v2057, %v479
    %v2128 = vmul.f32 %v2062, %v480
    %v2130 = vsel %vm501, %v1849, 0
    %v2133 = vsel %vm501, %v1854, 0
    %v2136 = vsel %vm501, %v1859, 0
    %v2139 = vsel %vm501, %v1864, 0
    %v2142 = vsel %vm501, %v2065, 0
    %v2145 = vsel %vm501, %v2066, 0
    %v2148 = vsel %vm501, %v2067, 0
    %v2151 = vsel %vm501, %v2068, 0
    %v2154 = vsel %vm501, %v2069, 0
    %v2157 = vsel %vm501, %v2070, 0
    %v2160 = vsel %vm501, %v2071, 0
    %v2163 = vsel %vm501, %v2072, 0
    %v2166 = vsel %vm501, %v2073, 0
    %v2169 = vsel %vm501, %v2074, 0
    %v2172 = vsel %vm501, %v2075, 0
    %v2175 = vsel %vm501, %v2076, 0
    %v2178 = vsel %vm501, %v2077, 0
    %v2181 = vsel %vm501, %v2078, 0
    %v2184 = vsel %vm501, %v2079, 0
    %v2187 = vsel %vm501, %v2080, 0
    %v2190 = vsel %vm501, %v2081, 0
    %v2193 = vsel %vm501, %v2082, 0
    %v2196 = vsel %vm501, %v2083, 0
    %v2199 = vsel %vm501, %v2084, 0
    %v2202 = vsel %vm501, %v2085, 0
    %v2205 = vsel %vm501, %v2086, 0
    %v2208 = vsel %vm501, %v2087, 0
    %v2211 = vsel %vm501, %v2088, 0
    %v2214 = vsel %vm501, %v2089, 0
    %v2217 = vsel %vm501, %v2090, 0
    %v2220 = vsel %vm501, %v2091, 0
    %v2223 = vsel %vm501, %v2092, 0
    %v2226 = vsel %vm501, %v2093, 0
    %v2229 = vsel %vm501, %v2094, 0
    %v2232 = vsel %vm501, %v2095, 0
    %v2235 = vsel %vm501, %v2096, 0
    %2237 = vmatprep.subr.mxu0 0.0
    %2238 = vmatpush1.xpose.msra.mxu0 %v2142
    %2239 = vmatprep.subr.mxu0 0.0
    %2240 = vmatpush1.xpose.msra.mxu0 %v2145
    %2241 = vmatprep.subr.mxu0 0.0
    %2242 = vmatpush1.xpose.msra.mxu0 %v2148
    %2243 = vmatprep.subr.mxu0 0.0
    %2244 = vmatpush1.xpose.msra.mxu0 %v2151
    %2245 = vmatprep.subr.mxu0 0.0
    %2246 = vmatpush1.xpose.msra.mxu0 %v2154
    %2247 = vmatprep.subr.mxu0 0.0
    %2248 = vmatpush1.xpose.msra.mxu0 %v2157
    %2249 = vmatprep.subr.mxu0 0.0
    %2250 = vmatpush1.xpose.msra.mxu0 %v2160
    %2251 = vmatprep.subr.mxu0 0.0
    %2252 = vmatpush1.xpose.msra.mxu0 %v2163
    %2253 = vmatprep.subr.mxu0 0.0
    %2254 = vmatpush1.xpose.msra.mxu0 %v2166
    %2255 = vmatprep.subr.mxu0 0.0
    %2256 = vmatpush1.xpose.msra.mxu0 %v2169
    %2257 = vmatprep.subr.mxu0 0.0
    %2258 = vmatpush1.xpose.msra.mxu0 %v2172
    %2259 = vmatprep.subr.mxu0 0.0
    %2260 = vmatpush1.xpose.msra.mxu0 %v2175
    %2261 = vmatprep.subr.mxu0 0.0
    %2262 = vmatpush1.xpose.msra.mxu0 %v2178
    %2263 = vmatprep.subr.mxu0 0.0
    %2264 = vmatpush1.xpose.msra.mxu0 %v2181
    %2265 = vmatprep.subr.mxu0 0.0
    %2266 = vmatpush1.xpose.msra.mxu0 %v2184
    %2267 = vmatprep.subr.mxu0 0.0
    %2268 = vmatpush1.xpose.msra.mxu0 %v2187
    %2269 = vmatprep.subr.mxu0 0.0
    %2270 = vmatpush1.xpose.msra.mxu0 %v2190
    %2271 = vmatprep.subr.mxu0 0.0
    %2272 = vmatpush1.xpose.msra.mxu0 %v2193
    %2273 = vmatprep.subr.mxu0 0.0
    %2274 = vmatpush1.xpose.msra.mxu0 %v2196
    %2275 = vmatprep.subr.mxu0 0.0
    %2276 = vmatpush1.xpose.msra.mxu0 %v2199
    %2277 = vmatprep.subr.mxu0 0.0
    %2278 = vmatpush1.xpose.msra.mxu0 %v2202
    %2279 = vmatprep.subr.mxu0 0.0
    %2280 = vmatpush1.xpose.msra.mxu0 %v2205
    %2281 = vmatprep.subr.mxu0 0.0
    %2282 = vmatpush1.xpose.msra.mxu0 %v2208
    %2283 = vmatprep.subr.mxu0 0.0
    %2284 = vmatpush1.xpose.msra.mxu0 %v2211
    %2285 = vmatprep.subr.mxu0 0.0
    %2286 = vmatpush1.xpose.msra.mxu0 %v2214
    %2287 = vmatprep.subr.mxu0 0.0
    %2288 = vmatpush1.xpose.msra.mxu0 %v2217
    %2289 = vmatprep.subr.mxu0 0.0
    %2290 = vmatpush1.xpose.msra.mxu0 %v2220
    %2291 = vmatprep.subr.mxu0 0.0
    %2292 = vmatpush1.xpose.msra.mxu0 %v2223
    %2293 = vmatprep.subr.mxu0 0.0
    %2294 = vmatpush1.xpose.msra.mxu0 %v2226
    %2295 = vmatprep.subr.mxu0 0.0
    %2296 = vmatpush1.xpose.msra.mxu0 %v2229
    %2297 = vmatprep.subr.mxu0 0.0
    %2298 = vmatpush1.xpose.msra.mxu0 %v2232
    %2299 = vmatprep.subr.mxu0 0.0
    %2300 = vmatpush1.xpose.msra.mxu0 %v2235
    %2301 = vmatprep.mubr.f32.mxu0 0.0
    %2302 = vmatmul.mubr.f32.gmra.mrb[0].mxu0 %v2130
    %v2303 = vpop.f32.mrb[0].mxu0
    %v2304 = vadd.f32 %v481, %v2303
    %v2305 = vpop.f32.mrb[0].mxu0
    %v2306 = vadd.f32 %v482, %v2305
    %2307 = vmatprep.mubr.f32.mxu0 0.0
    %2308 = vmatmul.mubr.f32.gmra.mrb[0].mxu0 %v2133
    %v2309 = vpop.f32.mrb[0].mxu0
    %v2310 = vadd.f32 %v483, %v2309
    %v2311 = vpop.f32.mrb[0].mxu0
    %v2312 = vadd.f32 %v484, %v2311
    %2313 = vmatprep.mubr.f32.mxu0 0.0
    %2314 = vmatmul.mubr.f32.gmra.mrb[0].mxu0 %v2136
    %v2315 = vpop.f32.mrb[0].mxu0
    %v2316 = vadd.f32 %v485, %v2315
    %v2317 = vpop.f32.mrb[0].mxu0
    %v2318 = vadd.f32 %v486, %v2317
    %2319 = vmatprep.mubr.f32.mxu0 0.0
    %2320 = vmatmul.mubr.f32.gmra.mrb[0].mxu0 %v2139
    %v2321 = vpop.f32.mrb[0].mxu0
    %v2322 = vadd.f32 %v487, %v2321
    %v2323 = vpop.f32.mrb[0].mxu0
    %v2324 = vadd.f32 %v488, %v2323
    %2325 = vdwg.mxu0
    %v2326 = vmax.f32 %v2304, %v2306
    %2327 = vmax.xlane.f32.xlu0 %v2326
    %v2328 = vpop.xlane.xlu0 %2327
    %v2329 = vmax.f32 %v2310, %v2312
    %2330 = vmax.xlane.f32.xlu0 %v2329
    %v2331 = vpop.xlane.xlu0 %2330
    %v2332 = vmax.f32 %v2316, %v2318
    %2333 = vmax.xlane.f32.xlu0 %v2332
    %v2334 = vpop.xlane.xlu0 %2333
    %v2335 = vmax.f32 %v2322, %v2324
    %2336 = vmax.xlane.f32.xlu0 %v2335
    %v2337 = vpop.xlane.xlu0 %2336
    %v2338 = vsub.f32 %v2304, %v2328
    %v2339 = vsub.f32 %v2306, %v2328
    %v2340 = vsub.f32 %v2310, %v2331
    %v2341 = vsub.f32 %v2312, %v2331
    %v2342 = vsub.f32 %v2316, %v2334
    %v2343 = vsub.f32 %v2318, %v2334
    %v2344 = vsub.f32 %v2322, %v2337
    %v2345 = vsub.f32 %v2324, %v2337
    %v2346 = vmul.f32 %v2338, 1.442695
    %v2347 = vpow.pop %v2346
    %v2348 = vmul.f32 %v2339, 1.442695
    %v2349 = vpow.pop %v2348
    %v2350 = vmul.f32 %v2340, 1.442695
    %v2351 = vpow.pop %v2350
    %v2352 = vmul.f32 %v2341, 1.442695
    %v2353 = vpow.pop %v2352
    %v2354 = vmul.f32 %v2342, 1.442695
    %v2355 = vpow.pop %v2354
    %v2356 = vmul.f32 %v2343, 1.442695
    %v2357 = vpow.pop %v2356
    %v2358 = vmul.f32 %v2344, 1.442695
    %v2359 = vpow.pop %v2358
    %v2360 = vmul.f32 %v2345, 1.442695
    %v2361 = vpow.pop %v2360
    %2362 = vmatprep.subr.mxu0 0.0
    %2363 = vmatpush1.msra.mxu0 %v2097
    %2364 = vmatprep.subr.mxu0 0.0
    %2365 = vmatpush1.msra.mxu0 %v2098
    %2366 = vmatprep.subr.mxu0 0.0
    %2367 = vmatpush1.msra.mxu0 %v2099
    %2368 = vmatprep.subr.mxu0 0.0
    %2369 = vmatpush1.msra.mxu0 %v2100
    %2370 = vmatprep.subr.mxu0 0.0
    %2371 = vmatpush1.msra.mxu0 %v2101
    %2372 = vmatprep.subr.mxu0 0.0
    %2373 = vmatpush1.msra.mxu0 %v2102
    %2374 = vmatprep.subr.mxu0 0.0
    %2375 = vmatpush1.msra.mxu0 %v2103
    %2376 = vmatprep.subr.mxu0 0.0
    %2377 = vmatpush1.msra.mxu0 %v2104
    %2378 = vmatprep.subr.mxu0 0.0
    %2379 = vmatpush1.msra.mxu0 %v2105
    %2380 = vmatprep.subr.mxu0 0.0
    %2381 = vmatpush1.msra.mxu0 %v2106
    %2382 = vmatprep.subr.mxu0 0.0
    %2383 = vmatpush1.msra.mxu0 %v2107
    %2384 = vmatprep.subr.mxu0 0.0
    %2385 = vmatpush1.msra.mxu0 %v2108
    %2386 = vmatprep.subr.mxu0 0.0
    %2387 = vmatpush1.msra.mxu0 %v2109
    %2388 = vmatprep.subr.mxu0 0.0
    %2389 = vmatpush1.msra.mxu0 %v2110
    %2390 = vmatprep.subr.mxu0 0.0
    %2391 = vmatpush1.msra.mxu0 %v2111
    %2392 = vmatprep.subr.mxu0 0.0
    %2393 = vmatpush1.msra.mxu0 %v2112
    %2394 = vmatprep.subr.mxu0 0.0
    %2395 = vmatpush1.msra.mxu0 %v2113
    %2396 = vmatprep.subr.mxu0 0.0
    %2397 = vmatpush1.msra.mxu0 %v2114
    %2398 = vmatprep.subr.mxu0 0.0
    %2399 = vmatpush1.msra.mxu0 %v2115
    %2400 = vmatprep.subr.mxu0 0.0
    %2401 = vmatpush1.msra.mxu0 %v2116
    %2402 = vmatprep.subr.mxu0 0.0
    %2403 = vmatpush1.msra.mxu0 %v2117
    %2404 = vmatprep.subr.mxu0 0.0
    %2405 = vmatpush1.msra.mxu0 %v2118
    %2406 = vmatprep.subr.mxu0 0.0
    %2407 = vmatpush1.msra.mxu0 %v2119
    %2408 = vmatprep.subr.mxu0 0.0
    %2409 = vmatpush1.msra.mxu0 %v2120
    %2410 = vmatprep.subr.mxu0 0.0
    %2411 = vmatpush1.msra.mxu0 %v2121
    %2412 = vmatprep.subr.mxu0 0.0
    %2413 = vmatpush1.msra.mxu0 %v2122
    %2414 = vmatprep.subr.mxu0 0.0
    %2415 = vmatpush1.msra.mxu0 %v2123
    %2416 = vmatprep.subr.mxu0 0.0
    %2417 = vmatpush1.msra.mxu0 %v2124
    %2418 = vmatprep.subr.mxu0 0.0
    %2419 = vmatpush1.msra.mxu0 %v2125
    %2420 = vmatprep.subr.mxu0 0.0
    %2421 = vmatpush1.msra.mxu0 %v2126
    %2422 = vmatprep.subr.mxu0 0.0
    %2423 = vmatpush1.msra.mxu0 %v2127
    %2424 = vmatprep.subr.mxu0 0.0
    %2425 = vmatpush1.msra.mxu0 %v2128
    %2426 = vmatprep.mubr.f32.mxu0 %v2349
    %2427 = vmatmul.mubr.f32.gmra.mrb[0].mxu0 %v2347
    %v2428 = vpop.f32.mrb[0].mxu0
    %v2429 = vadd.f32 0.0, %v2428
    %v2430 = vpop.f32.mrb[0].mxu0
    %2431 = vmatprep.mubr.f32.mxu0 %v2353
    %2432 = vmatmul.mubr.f32.gmra.mrb[0].mxu0 %v2351
    %v2433 = vpop.f32.mrb[0].mxu0
    %v2434 = vadd.f32 0.0, %v2433
    %v2435 = vpop.f32.mrb[0].mxu0
    %2436 = vmatprep.mubr.f32.mxu0 %v2357
    %2437 = vmatmul.mubr.f32.gmra.mrb[0].mxu0 %v2355
    %v2438 = vpop.f32.mrb[0].mxu0
    %v2439 = vadd.f32 0.0, %v2438
    %v2440 = vpop.f32.mrb[0].mxu0
    %2441 = vmatprep.mubr.f32.mxu0 %v2361
    %2442 = vmatmul.mubr.f32.gmra.mrb[0].mxu0 %v2359
    %v2443 = vpop.f32.mrb[0].mxu0
    %v2444 = vadd.f32 0.0, %v2443
    %v2445 = vpop.f32.mrb[0].mxu0
    %2446 = vdwg.mxu0
    %2447 = vmatprep.subr.mxu0 0.0
    %2448 = vmatpush1.msra.mxu0 %v449
    %2449 = vmatprep.subr.mxu0 0.0
    %2450 = vmatpush1.msra.mxu0 %v450
    %2451 = vmatprep.subr.mxu0 0.0
    %2452 = vmatpush1.msra.mxu0 %v451
    %2453 = vmatprep.subr.mxu0 0.0
    %2454 = vmatpush1.msra.mxu0 %v452
    %2455 = vmatprep.subr.mxu0 0.0
    %2456 = vmatpush1.msra.mxu0 %v453
    %2457 = vmatprep.subr.mxu0 0.0
    %2458 = vmatpush1.msra.mxu0 %v454
    %2459 = vmatprep.subr.mxu0 0.0
    %2460 = vmatpush1.msra.mxu0 %v455
    %2461 = vmatprep.subr.mxu0 0.0
    %2462 = vmatpush1.msra.mxu0 %v456
    %2463 = vmatprep.subr.mxu0 0.0
    %2464 = vmatpush1.msra.mxu0 %v457
    %2465 = vmatprep.subr.mxu0 0.0
    %2466 = vmatpush1.msra.mxu0 %v458
    %2467 = vmatprep.subr.mxu0 0.0
    %2468 = vmatpush1.msra.mxu0 %v459
    %2469 = vmatprep.subr.mxu0 0.0
    %2470 = vmatpush1.msra.mxu0 %v460
    %2471 = vmatprep.subr.mxu0 0.0
    %2472 = vmatpush1.msra.mxu0 %v461
    %2473 = vmatprep.subr.mxu0 0.0
    %2474 = vmatpush1.msra.mxu0 %v462
    %2475 = vmatprep.subr.mxu0 0.0
    %2476 = vmatpush1.msra.mxu0 %v463
    %2477 = vmatprep.subr.mxu0 0.0
    %2478 = vmatpush1.msra.mxu0 %v464
    %2479 = vmatprep.subr.mxu0 0.0
    %2480 = vmatpush1.msra.mxu0 %v465
    %2481 = vmatprep.subr.mxu0 0.0
    %2482 = vmatpush1.msra.mxu0 %v466
    %2483 = vmatprep.subr.mxu0 0.0
    %2484 = vmatpush1.msra.mxu0 %v467
    %2485 = vmatprep.subr.mxu0 0.0
    %2486 = vmatpush1.msra.mxu0 %v468
    %2487 = vmatprep.subr.mxu0 0.0
    %2488 = vmatpush1.msra.mxu0 %v469
    %2489 = vmatprep.subr.mxu0 0.0
    %2490 = vmatpush1.msra.mxu0 %v470
    %2491 = vmatprep.subr.mxu0 0.0
    %2492 = vmatpush1.msra.mxu0 %v471
    %2493 = vmatprep.subr.mxu0 0.0
    %2494 = vmatpush1.msra.mxu0 %v472
    %2495 = vmatprep.subr.mxu0 0.0
    %2496 = vmatpush1.msra.mxu0 %v473
    %2497 = vmatprep.subr.mxu0 0.0
    %2498 = vmatpush1.msra.mxu0 %v474
    %2499 = vmatprep.subr.mxu0 0.0
    %2500 = vmatpush1.msra.mxu0 %v475
    %2501 = vmatprep.subr.mxu0 0.0
    %2502 = vmatpush1.msra.mxu0 %v476
    %2503 = vmatprep.subr.mxu0 0.0
    %2504 = vmatpush1.msra.mxu0 %v477
    %2505 = vmatprep.subr.mxu0 0.0
    %2506 = vmatpush1.msra.mxu0 %v478
    %2507 = vmatprep.subr.mxu0 0.0
    %2508 = vmatpush1.msra.mxu0 %v479
    %2509 = vmatprep.subr.mxu0 0.0
    %2510 = vmatpush1.msra.mxu0 %v480
    %2511 = vmatprep.mubr.f32.mxu0 %v2349
    %2512 = vmatmul.mubr.f32.gmra.mrb[0].mxu0 %v2347
    %v2513 = vpop.f32.mrb[0].mxu0
    %v2514 = vadd.f32 0.0, %v2513
    %v2515 = vpop.f32.mrb[0].mxu0
    %2516 = vmatprep.mubr.f32.mxu0 %v2353
    %2517 = vmatmul.mubr.f32.gmra.mrb[0].mxu0 %v2351
    %v2518 = vpop.f32.mrb[0].mxu0
    %v2519 = vadd.f32 0.0, %v2518
    %v2520 = vpop.f32.mrb[0].mxu0
    %2521 = vmatprep.mubr.f32.mxu0 %v2357
    %2522 = vmatmul.mubr.f32.gmra.mrb[0].mxu0 %v2355
    %v2523 = vpop.f32.mrb[0].mxu0
    %v2524 = vadd.f32 0.0, %v2523
    %v2525 = vpop.f32.mrb[0].mxu0
    %2526 = vmatprep.mubr.f32.mxu0 %v2361
    %2527 = vmatmul.mubr.f32.gmra.mrb[0].mxu0 %v2359
    %v2528 = vpop.f32.mrb[0].mxu0
    %v2529 = vadd.f32 0.0, %v2528
    %v2530 = vpop.f32.mrb[0].mxu0
    %2531 = vdwg.mxu0
    %v2532 = vrcp.pop %v2514
    %v2533 = vrcp.pop %v2519
    %v2534 = vrcp.pop %v2524
    %v2535 = vrcp.pop %v2529
    %v2536 = vmul.f32 %v2429, %v2532
    %v2537 = vmul.f32 %v2434, %v2533
    %v2538 = vmul.f32 %v2439, %v2534
    %v2539 = vmul.f32 %v2444, %v2535
    %s2540 = scalar_lea.vmem %s12, 40
    %v2541 = vld [vmem:[%s2540] sm:$0xff]
    %v2542 = vld [vmem:[%s2540 + $0x8] sm:$0xff]
    %v2543 = vld [vmem:[%s2540 + $0x10] sm:$0xff]
    %v2544 = vld [vmem:[%s2540 + $0x18] sm:$0xff]
    %v2545 = vld [vmem:[%s2540 + $0x20] sm:$0xff]
    %s2546 = scalar_lea.vmem %s13, 1
    %v2547 = vld [vmem:[%s2546] sm:$0x1]
    %v2549 = vlaneseq
    %v2550 = vshrl.u32 %v2549, 7
    %v2551 = vsub.s32 0, %v2550
    %v2552 = vrot.slane %v2547, %v2551
    %v2555 = vsel %vm501, %v2536, 0
    %v2558 = vsel %vm501, %v2537, 0
    %v2561 = vsel %vm501, %v2538, 0
    %v2564 = vsel %vm501, %v2539, 0
    %2566 = vmatprep.subr.mxu0 0.0
    %2567 = vmatpush1.msra.mxu0 %v2541
    %2568 = vmatprep.subr.mxu0 0.0
    %2569 = vmatpush1.msra.mxu0 %v2542
    %2570 = vmatprep.subr.mxu0 0.0
    %2571 = vmatpush1.msra.mxu0 %v2543
    %2572 = vmatprep.subr.mxu0 0.0
    %2573 = vmatpush1.msra.mxu0 %v2544
    %2574 = vmatprep.subr.mxu0 0.0
    %2575 = vmatpush1.msra.mxu0 %v2545
    %2576 = vmatprep.subr.mxu0 0.0
    %2577 = vmatpush1.msra.mxu0 0.0
    %2578 = vmatprep.subr.mxu0 0.0
    %2579 = vmatpush1.msra.mxu0 0.0
    %2580 = vmatprep.subr.mxu0 0.0
    %2581 = vmatpush1.msra.mxu0 0.0
    %2582 = vmatprep.subr.mxu0 0.0
    %2583 = vmatpush1.msra.mxu0 0.0
    %2584 = vmatprep.subr.mxu0 0.0
    %2585 = vmatpush1.msra.mxu0 0.0
    %2586 = vmatprep.subr.mxu0 0.0
    %2587 = vmatpush1.msra.mxu0 0.0
    %2588 = vmatprep.subr.mxu0 0.0
    %2589 = vmatpush1.msra.mxu0 0.0
    %2590 = vmatprep.subr.mxu0 0.0
    %2591 = vmatpush1.msra.mxu0 0.0
    %2592 = vmatprep.subr.mxu0 0.0
    %2593 = vmatpush1.msra.mxu0 0.0
    %2594 = vmatprep.subr.mxu0 0.0
    %2595 = vmatpush1.msra.mxu0 0.0
    %2596 = vmatprep.subr.mxu0 0.0
    %2597 = vmatpush1.msra.mxu0 0.0
    %2598 = vmatprep.subr.mxu0 0.0
    %2599 = vmatpush1.msra.mxu0 0.0
    %2600 = vmatprep.subr.mxu0 0.0
    %2601 = vmatpush1.msra.mxu0 0.0
    %2602 = vmatprep.subr.mxu0 0.0
    %2603 = vmatpush1.msra.mxu0 0.0
    %2604 = vmatprep.subr.mxu0 0.0
    %2605 = vmatpush1.msra.mxu0 0.0
    %2606 = vmatprep.subr.mxu0 0.0
    %2607 = vmatpush1.msra.mxu0 0.0
    %2608 = vmatprep.subr.mxu0 0.0
    %2609 = vmatpush1.msra.mxu0 0.0
    %2610 = vmatprep.subr.mxu0 0.0
    %2611 = vmatpush1.msra.mxu0 0.0
    %2612 = vmatprep.subr.mxu0 0.0
    %2613 = vmatpush1.msra.mxu0 0.0
    %2614 = vmatprep.subr.mxu0 0.0
    %2615 = vmatpush1.msra.mxu0 0.0
    %2616 = vmatprep.subr.mxu0 0.0
    %2617 = vmatpush1.msra.mxu0 0.0
    %2618 = vmatprep.subr.mxu0 0.0
    %2619 = vmatpush1.msra.mxu0 0.0
    %2620 = vmatprep.subr.mxu0 0.0
    %2621 = vmatpush1.msra.mxu0 0.0
    %2622 = vmatprep.subr.mxu0 0.0
    %2623 = vmatpush1.msra.mxu0 0.0
    %2624 = vmatprep.subr.mxu0 0.0
    %2625 = vmatpush1.msra.mxu0 0.0
    %2626 = vmatprep.subr.mxu0 0.0
    %2627 = vmatpush1.msra.mxu0 0.0
    %2628 = vmatprep.subr.mxu0 0.0
    %2629 = vmatpush1.msra.mxu0 0.0
    %2630 = vmatprep.mubr.f32.mxu0 0.0
    %2631 = vmatmul.mubr.f32.gmra.mrb[0].mxu0 %v2555
    %v2632 = vpop.f32.mrb[0].mxu0
    %v2633 = vadd.f32 %v2552, %v2632
    %v2634 = vpop.f32.mrb[0].mxu0
    %2635 = vmatprep.mubr.f32.mxu0 0.0
    %2636 = vmatmul.mubr.f32.gmra.mrb[0].mxu0 %v2558
    %v2637 = vpop.f32.mrb[0].mxu0
    %v2638 = vadd.f32 %v2552, %v2637
    %v2639 = vpop.f32.mrb[0].mxu0
    %2640 = vmatprep.mubr.f32.mxu0 0.0
    %2641 = vmatmul.mubr.f32.gmra.mrb[0].mxu0 %v2561
    %v2642 = vpop.f32.mrb[0].mxu0
    %v2643 = vadd.f32 %v2552, %v2642
    %v2644 = vpop.f32.mrb[0].mxu0
    %2645 = vmatprep.mubr.f32.mxu0 0.0
    %2646 = vmatmul.mubr.f32.gmra.mrb[0].mxu0 %v2564
    %v2647 = vpop.f32.mrb[0].mxu0
    %v2648 = vadd.f32 %v2552, %v2647
    %v2649 = vpop.f32.mrb[0].mxu0
    %2650 = vdwg.mxu0
    %v2651 = vadd.f32 %v1752, %v2633
    %v2652 = vadd.f32 %v1753, %v2638
    %v2653 = vadd.f32 %v1754, %v2643
    %v2654 = vadd.f32 %v1755, %v2648
    %s2655 = scalar_lea.vmem %s14, 1
    %v2656 = vld [vmem:[%s2655] sm:$0x1]
    %s2657 = scalar_lea.vmem %s15, 1
    %v2658 = vld [vmem:[%s2657] sm:$0x1]
    %v2659 = vsel %vm501, %v2651, 0.0
    %2660 = vadd.xlane.f32.xlu0 %v2659
    %v2661 = vpop.xlane.xlu0 %2660
    %v2662 = vsel %vm501, %v2652, 0.0
    %2663 = vadd.xlane.f32.xlu0 %v2662
    %v2664 = vpop.xlane.xlu0 %2663
    %v2665 = vsel %vm501, %v2653, 0.0
    %2666 = vadd.xlane.f32.xlu0 %v2665
    %v2667 = vpop.xlane.xlu0 %2666
    %v2668 = vsel %vm501, %v2654, 0.0
    %2669 = vadd.xlane.f32.xlu0 %v2668
    %v2670 = vpop.xlane.xlu0 %2669
    %v2671 = vmul.f32 %v2661, %v1395
    %v2672 = vmul.f32 %v2664, %v1395
    %v2673 = vmul.f32 %v2667, %v1395
    %v2674 = vmul.f32 %v2670, %v1395
    %v2675 = vsub.f32 %v2651, %v2671
    %v2676 = vsub.f32 %v2652, %v2672
    %v2677 = vsub.f32 %v2653, %v2673
    %v2678 = vsub.f32 %v2654, %v2674
    %v2679 = vmul.f32 %v2675, %v2675
    %v2680 = vmul.f32 %v2676, %v2676
    %v2681 = vmul.f32 %v2677, %v2677
    %v2682 = vmul.f32 %v2678, %v2678
    %v2683 = vsel %vm501, %v2679, 0.0
    %2684 = vadd.xlane.f32.xlu0 %v2683
    %v2685 = vpop.xlane.xlu0 %2684
    %v2686 = vsel %vm501, %v2680, 0.0
    %2687 = vadd.xlane.f32.xlu0 %v2686
    %v2688 = vpop.xlane.xlu0 %2687
    %v2689 = vsel %vm501, %v2681, 0.0
    %2690 = vadd.xlane.f32.xlu0 %v2689
    %v2691 = vpop.xlane.xlu0 %2690
    %v2692 = vsel %vm501, %v2682, 0.0
    %2693 = vadd.xlane.f32.xlu0 %v2692
    %v2694 = vpop.xlane.xlu0 %2693
    %v2695 = vmul.f32 %v2685, %v1395
    %v2696 = vmul.f32 %v2688, %v1395
    %v2697 = vmul.f32 %v2691, %v1395
    %v2698 = vmul.f32 %v2694, %v1395
    %v2699 = vadd.f32 %v2695, 1e-05
    %v2700 = vadd.f32 %v2696, 1e-05
    %v2701 = vadd.f32 %v2697, 1e-05
    %v2702 = vadd.f32 %v2698, 1e-05
    %v2703 = vrsqrt.pop %v2699
    %v2704 = vrsqrt.pop %v2700
    %v2705 = vrsqrt.pop %v2701
    %v2706 = vrsqrt.pop %v2702
    %v2707 = vmul.f32 %v2675, %v2703
    %v2708 = vmul.f32 %v2676, %v2704
    %v2709 = vmul.f32 %v2677, %v2705
    %v2710 = vmul.f32 %v2678, %v2706
    %v2712 = vlaneseq
    %v2713 = vshrl.u32 %v2712, 7
    %v2714 = vsub.s32 0, %v2713
    %v2715 = vrot.slane %v2656, %v2714
    %v2717 = vmul.f32 %v2707, %v2715
    %v2718 = vmul.f32 %v2708, %v2715
    %v2719 = vmul.f32 %v2709, %v2715
    %v2720 = vmul.f32 %v2710, %v2715
    %v2722 = vlaneseq
    %v2723 = vshrl.u32 %v2722, 7
    %v2724 = vsub.s32 0, %v2723
    %v2725 = vrot.slane %v2658, %v2724
    %v2727 = vadd.f32 %v2717, %v2725
    %v2728 = vadd.f32 %v2718, %v2725
    %v2729 = vadd.f32 %v2719, %v2725
    %v2730 = vadd.f32 %v2720, %v2725
    %s2731 = scalar_lea.vmem %s16, 40
    %v2732 = vld [vmem:[%s2731] sm:$0xff]
    %v2733 = vld [vmem:[%s2731 + $0x8] sm:$0xff]
    %v2734 = vld [vmem:[%s2731 + $0x10] sm:$0xff]
    %v2735 = vld [vmem:[%s2731 + $0x18] sm:$0xff]
    %v2736 = vld [vmem:[%s2731 + $0x20] sm:$0xff]
    %s2737 = scalar_lea.vmem %s17, 1
    %v2738 = vld [vmem:[%s2737] sm:$0x1]
    %v2740 = vlaneseq
    %v2741 = vshrl.u32 %v2740, 7
    %v2742 = vsub.s32 0, %v2741
    %v2743 = vrot.slane %v2738, %v2742
    %v2746 = vsel %vm501, %v2727, 0
    %v2749 = vsel %vm501, %v2728, 0
    %v2752 = vsel %vm501, %v2729, 0
    %v2755 = vsel %vm501, %v2730, 0
    %2757 = vmatprep.subr.mxu0 0.0
    %2758 = vmatpush1.msra.mxu0 %v2732
    %2759 = vmatprep.subr.mxu0 0.0
    %2760 = vmatpush1.msra.mxu0 %v2733
    %2761 = vmatprep.subr.mxu0 0.0
    %2762 = vmatpush1.msra.mxu0 %v2734
    %2763 = vmatprep.subr.mxu0 0.0
    %2764 = vmatpush1.msra.mxu0 %v2735
    %2765 = vmatprep.subr.mxu0 0.0
    %2766 = vmatpush1.msra.mxu0 %v2736
    %2767 = vmatprep.subr.mxu0 0.0
    %2768 = vmatpush1.msra.mxu0 0.0
    %2769 = vmatprep.subr.mxu0 0.0
    %2770 = vmatpush1.msra.mxu0 0.0
    %2771 = vmatprep.subr.mxu0 0.0
    %2772 = vmatpush1.msra.mxu0 0.0
    %2773 = vmatprep.subr.mxu0 0.0
    %2774 = vmatpush1.msra.mxu0 0.0
    %2775 = vmatprep.subr.mxu0 0.0
    %2776 = vmatpush1.msra.mxu0 0.0
    %2777 = vmatprep.subr.mxu0 0.0
    %2778 = vmatpush1.msra.mxu0 0.0
    %2779 = vmatprep.subr.mxu0 0.0
    %2780 = vmatpush1.msra.mxu0 0.0
    %2781 = vmatprep.subr.mxu0 0.0
    %2782 = vmatpush1.msra.mxu0 0.0
    %2783 = vmatprep.subr.mxu0 0.0
    %2784 = vmatpush1.msra.mxu0 0.0
    %2785 = vmatprep.subr.mxu0 0.0
    %2786 = vmatpush1.msra.mxu0 0.0
    %2787 = vmatprep.subr.mxu0 0.0
    %2788 = vmatpush1.msra.mxu0 0.0
    %2789 = vmatprep.subr.mxu0 0.0
    %2790 = vmatpush1.msra.mxu0 0.0
    %2791 = vmatprep.subr.mxu0 0.0
    %2792 = vmatpush1.msra.mxu0 0.0
    %2793 = vmatprep.subr.mxu0 0.0
    %2794 = vmatpush1.msra.mxu0 0.0
    %2795 = vmatprep.subr.mxu0 0.0
    %2796 = vmatpush1.msra.mxu0 0.0
    %2797 = vmatprep.subr.mxu0 0.0
    %2798 = vmatpush1.msra.mxu0 0.0
    %2799 = vmatprep.subr.mxu0 0.0
    %2800 = vmatpush1.msra.mxu0 0.0
    %2801 = vmatprep.subr.mxu0 0.0
    %2802 = vmatpush1.msra.mxu0 0.0
    %2803 = vmatprep.subr.mxu0 0.0
    %2804 = vmatpush1.msra.mxu0 0.0
    %2805 = vmatprep.subr.mxu0 0.0
    %2806 = vmatpush1.msra.mxu0 0.0
    %2807 = vmatprep.subr.mxu0 0.0
    %2808 = vmatpush1.msra.mxu0 0.0
    %2809 = vmatprep.subr.mxu0 0.0
    %2810 = vmatpush1.msra.mxu0 0.0
    %2811 = vmatprep.subr.mxu0 0.0
    %2812 = vmatpush1.msra.mxu0 0.0
    %2813 = vmatprep.subr.mxu0 0.0
    %2814 = vmatpush1.msra.mxu0 0.0
    %2815 = vmatprep.subr.mxu0 0.0
    %2816 = vmatpush1.msra.mxu0 0.0
    %2817 = vmatprep.subr.mxu0 0.0
    %2818 = vmatpush1.msra.mxu0 0.0
    %2819 = vmatprep.subr.mxu0 0.0
    %2820 = vmatpush1.msra.mxu0 0.0
    %2821 = vmatprep.mubr.f32.mxu0 0.0
    %2822 = vmatmul.mubr.f32.gmra.mrb[0].mxu0 %v2746
    %v2823 = vpop.f32.mrb[0].mxu0
    %v2824 = vadd.f32 %v2743, %v2823
    %v2825 = vpop.f32.mrb[0].mxu0
    %2826 = vmatprep.mubr.f32.mxu0 0.0
    %2827 = vmatmul.mubr.f32.gmra.mrb[0].mxu0 %v2749
    %v2828 = vpop.f32.mrb[0].mxu0
    %v2829 = vadd.f32 %v2743, %v2828
    %v2830 = vpop.f32.mrb[0].mxu0
    %2831 = vmatprep.mubr.f32.mxu0 0.0
    %2832 = vmatmul.mubr.f32.gmra.mrb[0].mxu0 %v2752
    %v2833 = vpop.f32.mrb[0].mxu0
    %v2834 = vadd.f32 %v2743, %v2833
    %v2835 = vpop.f32.mrb[0].mxu0
    %2836 = vmatprep.mubr.f32.mxu0 0.0
    %2837 = vmatmul.mubr.f32.gmra.mrb[0].mxu0 %v2755
    %v2838 = vpop.f32.mrb[0].mxu0
    %v2839 = vadd.f32 %v2743, %v2838
    %v2840 = vpop.f32.mrb[0].mxu0
    %2841 = vdwg.mxu0
    %v2842 = vmax.f32 %v2824, 0.0
    %v2843 = vmax.f32 %v2829, 0.0
    %v2844 = vmax.f32 %v2834, 0.0
    %v2845 = vmax.f32 %v2839, 0.0
    %s2846 = scalar_lea.vmem %s18, 32
    %v2847 = vld [vmem:[%s2846] sm:$0xff]
    %v2848 = vld [vmem:[%s2846 + $0x8] sm:$0xff]
    %v2849 = vld [vmem:[%s2846 + $0x10] sm:$0xff]
    %v2850 = vld [vmem:[%s2846 + $0x18] sm:$0xff]
    %s2851 = scalar_lea.vmem %s19, 1
    %v2852 = vld [vmem:[%s2851] sm:$0x1]
    %v2854 = vlaneseq
    %v2855 = vshrl.u32 %v2854, 7
    %v2856 = vsub.s32 0, %v2855
    %v2857 = vrot.slane %v2852, %v2856
    %v2860 = vsel %vm1580, %v2842, 0
    %v2863 = vsel %vm1580, %v2843, 0
    %v2866 = vsel %vm1580, %v2844, 0
    %v2869 = vsel %vm1580, %v2845, 0
    %2871 = vmatprep.subr.mxu0 0.0
    %2872 = vmatpush1.msra.mxu0 %v2847
    %2873 = vmatprep.subr.mxu0 0.0
    %2874 = vmatpush1.msra.mxu0 %v2848
    %2875 = vmatprep.subr.mxu0 0.0
    %2876 = vmatpush1.msra.mxu0 %v2849
    %2877 = vmatprep.subr.mxu0 0.0
    %2878 = vmatpush1.msra.mxu0 %v2850
    %2879 = vmatprep.subr.mxu0 0.0
    %2880 = vmatpush1.msra.mxu0 0.0
    %2881 = vmatprep.subr.mxu0 0.0
    %2882 = vmatpush1.msra.mxu0 0.0
    %2883 = vmatprep.subr.mxu0 0.0
    %2884 = vmatpush1.msra.mxu0 0.0
    %2885 = vmatprep.subr.mxu0 0.0
    %2886 = vmatpush1.msra.mxu0 0.0
    %2887 = vmatprep.subr.mxu0 0.0
    %2888 = vmatpush1.msra.mxu0 0.0
    %2889 = vmatprep.subr.mxu0 0.0
    %2890 = vmatpush1.msra.mxu0 0.0
    %2891 = vmatprep.subr.mxu0 0.0
    %2892 = vmatpush1.msra.mxu0 0.0
    %2893 = vmatprep.subr.mxu0 0.0
    %2894 = vmatpush1.msra.mxu0 0.0
    %2895 = vmatprep.subr.mxu0 0.0
    %2896 = vmatpush1.msra.mxu0 0.0
    %2897 = vmatprep.subr.mxu0 0.0
    %2898 = vmatpush1.msra.mxu0 0.0
    %2899 = vmatprep.subr.mxu0 0.0
    %2900 = vmatpush1.msra.mxu0 0.0
    %2901 = vmatprep.subr.mxu0 0.0
    %2902 = vmatpush1.msra.mxu0 0.0
    %2903 = vmatprep.subr.mxu0 0.0
    %2904 = vmatpush1.msra.mxu0 0.0
    %2905 = vmatprep.subr.mxu0 0.0
    %2906 = vmatpush1.msra.mxu0 0.0
    %2907 = vmatprep.subr.mxu0 0.0
    %2908 = vmatpush1.msra.mxu0 0.0
    %2909 = vmatprep.subr.mxu0 0.0
    %2910 = vmatpush1.msra.mxu0 0.0
    %2911 = vmatprep.subr.mxu0 0.0
    %2912 = vmatpush1.msra.mxu0 0.0
    %2913 = vmatprep.subr.mxu0 0.0
    %2914 = vmatpush1.msra.mxu0 0.0
    %2915 = vmatprep.subr.mxu0 0.0
    %2916 = vmatpush1.msra.mxu0 0.0
    %2917 = vmatprep.subr.mxu0 0.0
    %2918 = vmatpush1.msra.mxu0 0.0
    %2919 = vmatprep.subr.mxu0 0.0
    %2920 = vmatpush1.msra.mxu0 0.0
    %2921 = vmatprep.subr.mxu0 0.0
    %2922 = vmatpush1.msra.mxu0 0.0
    %2923 = vmatprep.subr.mxu0 0.0
    %2924 = vmatpush1.msra.mxu0 0.0
    %2925 = vmatprep.subr.mxu0 0.0
    %2926 = vmatpush1.msra.mxu0 0.0
    %2927 = vmatprep.subr.mxu0 0.0
    %2928 = vmatpush1.msra.mxu0 0.0
    %2929 = vmatprep.subr.mxu0 0.0
    %2930 = vmatpush1.msra.mxu0 0.0
    %2931 = vmatprep.subr.mxu0 0.0
    %2932 = vmatpush1.msra.mxu0 0.0
    %2933 = vmatprep.subr.mxu0 0.0
    %2934 = vmatpush1.msra.mxu0 0.0
    %2935 = vmatprep.mubr.f32.mxu0 0.0
    %2936 = vmatmul.mubr.f32.gmra.mrb[0].mxu0 %v2860
    %v2937 = vpop.f32.mrb[0].mxu0
    %v2938 = vadd.f32 %v2857, %v2937
    %v2939 = vpop.f32.mrb[0].mxu0
    %2940 = vmatprep.mubr.f32.mxu0 0.0
    %2941 = vmatmul.mubr.f32.gmra.mrb[0].mxu0 %v2863
    %v2942 = vpop.f32.mrb[0].mxu0
    %v2943 = vadd.f32 %v2857, %v2942
    %v2944 = vpop.f32.mrb[0].mxu0
    %2945 = vmatprep.mubr.f32.mxu0 0.0
    %2946 = vmatmul.mubr.f32.gmra.mrb[0].mxu0 %v2866
    %v2947 = vpop.f32.mrb[0].mxu0
    %v2948 = vadd.f32 %v2857, %v2947
    %v2949 = vpop.f32.mrb[0].mxu0
    %2950 = vmatprep.mubr.f32.mxu0 0.0
    %2951 = vmatmul.mubr.f32.gmra.mrb[0].mxu0 %v2869
    %v2952 = vpop.f32.mrb[0].mxu0
    %v2953 = vadd.f32 %v2857, %v2952
    %v2954 = vpop.f32.mrb[0].mxu0
    %2955 = vdwg.mxu0
    %v2956 = vadd.f32 %v2727, %v2938
    %v2957 = vadd.f32 %v2728, %v2943
    %v2958 = vadd.f32 %v2729, %v2948
    %v2959 = vadd.f32 %v2730, %v2953
    %s2960 = scalar_lea.vmem %s20, 1
    %v2961 = vld [vmem:[%s2960] sm:$0x1]
    %s2962 = scalar_lea.vmem %s21, 1
    %v2963 = vld [vmem:[%s2962] sm:$0x1]
    %v2964 = vsel %vm501, %v2956, 0.0
    %2965 = vadd.xlane.f32.xlu0 %v2964
    %v2966 = vpop.xlane.xlu0 %2965
    %v2967 = vsel %vm501, %v2957, 0.0
    %2968 = vadd.xlane.f32.xlu0 %v2967
    %v2969 = vpop.xlane.xlu0 %2968
    %v2970 = vsel %vm501, %v2958, 0.0
    %2971 = vadd.xlane.f32.xlu0 %v2970
    %v2972 = vpop.xlane.xlu0 %2971
    %v2973 = vsel %vm501, %v2959, 0.0
    %2974 = vadd.xlane.f32.xlu0 %v2973
    %v2975 = vpop.xlane.xlu0 %2974
    %v2976 = vmul.f32 %v2966, %v1395
    %v2977 = vmul.f32 %v2969, %v1395
    %v2978 = vmul.f32 %v2972, %v1395
    %v2979 = vmul.f32 %v2975, %v1395
    %v2980 = vsub.f32 %v2956, %v2976
    %v2981 = vsub.f32 %v2957, %v2977
    %v2982 = vsub.f32 %v2958, %v2978
    %v2983 = vsub.f32 %v2959, %v2979
    %v2984 = vmul.f32 %v2980, %v2980
    %v2985 = vmul.f32 %v2981, %v2981
    %v2986 = vmul.f32 %v2982, %v2982
    %v2987 = vmul.f32 %v2983, %v2983
    %v2988 = vsel %vm501, %v2984, 0.0
    %2989 = vadd.xlane.f32.xlu0 %v2988
    %v2990 = vpop.xlane.xlu0 %2989
    %v2991 = vsel %vm501, %v2985, 0.0
    %2992 = vadd.xlane.f32.xlu0 %v2991
    %v2993 = vpop.xlane.xlu0 %2992
    %v2994 = vsel %vm501, %v2986, 0.0
    %2995 = vadd.xlane.f32.xlu0 %v2994
    %v2996 = vpop.xlane.xlu0 %2995
    %v2997 = vsel %vm501, %v2987, 0.0
    %2998 = vadd.xlane.f32.xlu0 %v2997
    %v2999 = vpop.xlane.xlu0 %2998
    %v3000 = vmul.f32 %v2990, %v1395
    %v3001 = vmul.f32 %v2993, %v1395
    %v3002 = vmul.f32 %v2996, %v1395
    %v3003 = vmul.f32 %v2999, %v1395
    %v3004 = vadd.f32 %v3000, 1e-05
    %v3005 = vadd.f32 %v3001, 1e-05
    %v3006 = vadd.f32 %v3002, 1e-05
    %v3007 = vadd.f32 %v3003, 1e-05
    %v3008 = vrsqrt.pop %v3004
    %v3009 = vrsqrt.pop %v3005
    %v3010 = vrsqrt.pop %v3006
    %v3011 = vrsqrt.pop %v3007
    %v3012 = vmul.f32 %v2980, %v3008
    %v3013 = vmul.f32 %v2981, %v3009
    %v3014 = vmul.f32 %v2982, %v3010
    %v3015 = vmul.f32 %v2983, %v3011
    %v3017 = vlaneseq
    %v3018 = vshrl.u32 %v3017, 7
    %v3019 = vsub.s32 0, %v3018
    %v3020 = vrot.slane %v2961, %v3019
    %v3022 = vmul.f32 %v3012, %v3020
    %v3023 = vmul.f32 %v3013, %v3020
    %v3024 = vmul.f32 %v3014, %v3020
    %v3025 = vmul.f32 %v3015, %v3020
    %v3027 = vlaneseq
    %v3028 = vshrl.u32 %v3027, 7
    %v3029 = vsub.s32 0, %v3028
    %v3030 = vrot.slane %v2963, %v3029
    %v3032 = vadd.f32 %v3022, %v3030
    %v3033 = vadd.f32 %v3023, %v3030
    %v3034 = vadd.f32 %v3024, %v3030
    %v3035 = vadd.f32 %v3025, %v3030
    %v3036 = vld [vmem:[%s24] sm:$0x3]
    %v3038 = vsel %vm1580, %v3036, 0
    %3040 = vmatprep.subr.mxu0 0.0
    %3041 = vmatpush1.msra.mxu0 %v3032
    %3042 = vmatprep.subr.mxu0 0.0
    %3043 = vmatpush1.msra.mxu0 %v3033
    %3044 = vmatprep.subr.mxu0 0.0
    %3045 = vmatpush1.msra.mxu0 %v3034
    %3046 = vmatprep.subr.mxu0 0.0
    %3047 = vmatpush1.msra.mxu0 %v3035
    %3048 = vmatprep.subr.mxu0 0.0
    %3049 = vmatpush1.msra.mxu0 0.0
    %3050 = vmatprep.subr.mxu0 0.0
    %3051 = vmatpush1.msra.mxu0 0.0
    %3052 = vmatprep.subr.mxu0 0.0
    %3053 = vmatpush1.msra.mxu0 0.0
    %3054 = vmatprep.subr.mxu0 0.0
    %3055 = vmatpush1.msra.mxu0 0.0
    %3056 = vmatprep.subr.mxu0 0.0
    %3057 = vmatpush1.msra.mxu0 0.0
    %3058 = vmatprep.subr.mxu0 0.0
    %3059 = vmatpush1.msra.mxu0 0.0
    %3060 = vmatprep.subr.mxu0 0.0
    %3061 = vmatpush1.msra.mxu0 0.0
    %3062 = vmatprep.subr.mxu0 0.0
    %3063 = vmatpush1.msra.mxu0 0.0
    %3064 = vmatprep.subr.mxu0 0.0
    %3065 = vmatpush1.msra.mxu0 0.0
    %3066 = vmatprep.subr.mxu0 0.0
    %3067 = vmatpush1.msra.mxu0 0.0
    %3068 = vmatprep.subr.mxu0 0.0
    %3069 = vmatpush1.msra.mxu0 0.0
    %3070 = vmatprep.subr.mxu0 0.0
    %3071 = vmatpush1.msra.mxu0 0.0
    %3072 = vmatprep.subr.mxu0 0.0
    %3073 = vmatpush1.msra.mxu0 0.0
    %3074 = vmatprep.subr.mxu0 0.0
    %3075 = vmatpush1.msra.mxu0 0.0
    %3076 = vmatprep.subr.mxu0 0.0
    %3077 = vmatpush1.msra.mxu0 0.0
    %3078 = vmatprep.subr.mxu0 0.0
    %3079 = vmatpush1.msra.mxu0 0.0
    %3080 = vmatprep.subr.mxu0 0.0
    %3081 = vmatpush1.msra.mxu0 0.0
    %3082 = vmatprep.subr.mxu0 0.0
    %3083 = vmatpush1.msra.mxu0 0.0
    %3084 = vmatprep.subr.mxu0 0.0
    %3085 = vmatpush1.msra.mxu0 0.0
    %3086 = vmatprep.subr.mxu0 0.0
    %3087 = vmatpush1.msra.mxu0 0.0
    %3088 = vmatprep.subr.mxu0 0.0
    %3089 = vmatpush1.msra.mxu0 0.0
    %3090 = vmatprep.subr.mxu0 0.0
    %3091 = vmatpush1.msra.mxu0 0.0
    %3092 = vmatprep.subr.mxu0 0.0
    %3093 = vmatpush1.msra.mxu0 0.0
    %3094 = vmatprep.subr.mxu0 0.0
    %3095 = vmatpush1.msra.mxu0 0.0
    %3096 = vmatprep.subr.mxu0 0.0
    %3097 = vmatpush1.msra.mxu0 0.0
    %3098 = vmatprep.subr.mxu0 0.0
    %3099 = vmatpush1.msra.mxu0 0.0
    %3100 = vmatprep.subr.mxu0 0.0
    %3101 = vmatpush1.msra.mxu0 0.0
    %3102 = vmatprep.subr.mxu0 0.0
    %3103 = vmatpush1.msra.mxu0 0.0
    %3104 = vmatprep.mubr.f32.mxu0 0.0
    %3105 = vmatmul.mubr.f32.gmra.mrb[0].mxu0 %v3038
    %v3106 = vpop.f32.mrb[0].mxu0
    %v3107 = vadd.f32 0.0, %v3106
    %v3108 = vpop.f32.mrb[0].mxu0
    %3109 = vdwg.mxu0
    %v3110 = vld [vmem:[%s25] sm:$0xff]
    %v3111 = vld [vmem:[%s25 + $0x8] sm:$0xff]
    %v3112 = vld [vmem:[%s25 + $0x10] sm:$0xff]
    %v3113 = vld [vmem:[%s25 + $0x18] sm:$0xff]
    %v3114 = vld [vmem:[%s25 + $0x20] sm:$0xff]
    %v3115 = vld [vmem:[%s26] sm:$0x1]
    %v3117 = vlaneseq
    %v3118 = vshrl.u32 %v3117, 7
    %v3119 = vsub.s32 0, %v3118
    %v3120 = vrot.slane %v3115, %v3119
    %v3123 = vsel %vm501, %v3107, 0
    %3125 = vmatprep.subr.mxu0 0.0
    %3126 = vmatpush1.msra.mxu0 %v3110
    %3127 = vmatprep.subr.mxu0 0.0
    %3128 = vmatpush1.msra.mxu0 %v3111
    %3129 = vmatprep.subr.mxu0 0.0
    %3130 = vmatpush1.msra.mxu0 %v3112
    %3131 = vmatprep.subr.mxu0 0.0
    %3132 = vmatpush1.msra.mxu0 %v3113
    %3133 = vmatprep.subr.mxu0 0.0
    %3134 = vmatpush1.msra.mxu0 %v3114
    %3135 = vmatprep.subr.mxu0 0.0
    %3136 = vmatpush1.msra.mxu0 0.0
    %3137 = vmatprep.subr.mxu0 0.0
    %3138 = vmatpush1.msra.mxu0 0.0
    %3139 = vmatprep.subr.mxu0 0.0
    %3140 = vmatpush1.msra.mxu0 0.0
    %3141 = vmatprep.subr.mxu0 0.0
    %3142 = vmatpush1.msra.mxu0 0.0
    %3143 = vmatprep.subr.mxu0 0.0
    %3144 = vmatpush1.msra.mxu0 0.0
    %3145 = vmatprep.subr.mxu0 0.0
    %3146 = vmatpush1.msra.mxu0 0.0
    %3147 = vmatprep.subr.mxu0 0.0
    %3148 = vmatpush1.msra.mxu0 0.0
    %3149 = vmatprep.subr.mxu0 0.0
    %3150 = vmatpush1.msra.mxu0 0.0
    %3151 = vmatprep.subr.mxu0 0.0
    %3152 = vmatpush1.msra.mxu0 0.0
    %3153 = vmatprep.subr.mxu0 0.0
    %3154 = vmatpush1.msra.mxu0 0.0
    %3155 = vmatprep.subr.mxu0 0.0
    %3156 = vmatpush1.msra.mxu0 0.0
    %3157 = vmatprep.subr.mxu0 0.0
    %3158 = vmatpush1.msra.mxu0 0.0
    %3159 = vmatprep.subr.mxu0 0.0
    %3160 = vmatpush1.msra.mxu0 0.0
    %3161 = vmatprep.subr.mxu0 0.0
    %3162 = vmatpush1.msra.mxu0 0.0
    %3163 = vmatprep.subr.mxu0 0.0
    %3164 = vmatpush1.msra.mxu0 0.0
    %3165 = vmatprep.subr.mxu0 0.0
    %3166 = vmatpush1.msra.mxu0 0.0
    %3167 = vmatprep.subr.mxu0 0.0
    %3168 = vmatpush1.msra.mxu0 0.0
    %3169 = vmatprep.subr.mxu0 0.0
    %3170 = vmatpush1.msra.mxu0 0.0
    %3171 = vmatprep.subr.mxu0 0.0
    %3172 = vmatpush1.msra.mxu0 0.0
    %3173 = vmatprep.subr.mxu0 0.0
    %3174 = vmatpush1.msra.mxu0 0.0
    %3175 = vmatprep.subr.mxu0 0.0
    %3176 = vmatpush1.msra.mxu0 0.0
    %3177 = vmatprep.subr.mxu0 0.0
    %3178 = vmatpush1.msra.mxu0 0.0
    %3179 = vmatprep.subr.mxu0 0.0
    %3180 = vmatpush1.msra.mxu0 0.0
    %3181 = vmatprep.subr.mxu0 0.0
    %3182 = vmatpush1.msra.mxu0 0.0
    %3183 = vmatprep.subr.mxu0 0.0
    %3184 = vmatpush1.msra.mxu0 0.0
    %3185 = vmatprep.subr.mxu0 0.0
    %3186 = vmatpush1.msra.mxu0 0.0
    %3187 = vmatprep.subr.mxu0 0.0
    %3188 = vmatpush1.msra.mxu0 0.0
    %3189 = vmatprep.mubr.f32.mxu0 0.0
    %3190 = vmatmul.mubr.f32.gmra.mrb[0].mxu0 %v3123
    %v3191 = vpop.f32.mrb[0].mxu0
    %v3192 = vadd.f32 %v3120, %v3191
    %v3193 = vpop.f32.mrb[0].mxu0
    %3194 = vdwg.mxu0
    %vm3195 = vcmask 17408
    %3196 = vst.msk [vmem:[#allocation2] sm:$0x3] %vm3195, %v3192
    // Predicated region
    $region110: #{cnn_transformer_forward.1} parent=1 // pred_check
      _
    $region111: #{cnn_transformer_forward.1} parent=1 // pred_check_branch
      %3198 = sbr.rel (0) target = $region113
    $region112: #{cnn_transformer_forward.1} parent=1 // pred_region
      %s3200 = ssub.s32 32, 32
      %3201 = vsyncadd [#allocation3], %s3200
      %s3203 = sshll.u32 [#allocation2], 4
      %s3204 = int_to_ptr.vmem [resolvable:$true] %s3203
      %3206 = dma.vmem_to_hbm [thread:$0]  %s3204, 32, %s27, [#allocation3]
    $region113: #{cnn_transformer_forward.1} parent=1 // pred_fallthru
      _
    // Predicated region
    $region114: #{cnn_transformer_forward.1} parent=1 // pred_check
      _
    $region115: #{cnn_transformer_forward.1} parent=1 // pred_check_branch
      %3208 = sbr.rel (0) target = $region117
    $region116: #{cnn_transformer_forward.1} parent=1 // pred_region
      %3209 = dma.done [#allocation3], 32
    $region117: #{cnn_transformer_forward.1} parent=1 // pred_fallthru
      _
    %3210 = vsyncpa [#allocation3], 1

</llo_original>
